<compile_context>
chip_gen: v6e
topology: v6e:2x2x1
jax: 0.10.0
libtpu: 0.0.40
codegen_flags: <defaults>
</compile_context>

<pallas_src>
import math
from functools import partial

import numpy as np
import jax
import jax.numpy as jnp
from jax.experimental import pallas as pl
from jax.experimental.pallas import tpu as pltpu


# ----------------------------- in-kernel helpers -----------------------------

def _erf_approx(x):
    # Abramowitz & Stegun 7.1.26 (max abs err ~1.5e-7, i.e. f32-exact).
    # Mosaic does not expose lax.erf, so build it from exp/mul/add (VPU+EUP).
    a1, a2, a3, a4, a5 = 0.254829592, -0.284496736, 1.421413741, -1.453152027, 1.061405429
    p = 0.3275911
    z = jnp.abs(x)
    t = 1.0 / (1.0 + p * z)
    poly = ((((a5 * t + a4) * t + a3) * t + a2) * t + a1) * t
    y = 1.0 - poly * jnp.exp(-z * z)
    return jnp.where(x >= 0, y, -y)


def _gelu_exact(x):
    # matches torch.nn.GELU() (erf-based, not tanh approximation)
    return 0.5 * x * (1.0 + _erf_approx(x * (1.0 / math.sqrt(2.0))))


# ------------------------------- kernel body ----------------------------------

def _conformer_attention_kernel(x_ref, mask_ref, wht_ref, bht_ref, gavg_ref,
                                gamma_ref, beta_ref, pos_ref, wqkv_ref, wp_ref,
                                bp_ref, xout_ref, *rest,
                                bt, heads, dim_head, n_tokens, eps, return_attn):
    """grid = (B // bt,); one batch *block* per step, all heads fused.

    x_ref    : (bt, N, C)  input tokens
    mask_ref : (heads, C)  head-selection mask (row h is 1 on channel group h)
    wht_ref  : (C, C)      ht_proj.weight^T tiled `heads` times along rows
    bht_ref  : (1, C)      ht_proj.bias
    gavg_ref : (C, C)      block-diagonal group-averaging matrix (1/dim_head blocks)
    gamma_ref: (1, C)      ht_norm.weight tiled per head group
    beta_ref : (1, C)      ht_norm.bias tiled per head group
    pos_ref  : (heads, C)  pos_embed[0]
    wqkv_ref : (C, 3C)     qkv.weight^T, softmax scale folded into Q, columns
                           permuted into per-head [q_h | k_h | v_h] blocks
    wp_ref   : (C, C)      proj.weight^T
    bp_ref   : (1, C)      proj.bias
    xout_ref : (bt, N, C)  output tokens
    rest     : optional (bt, heads, S, S) attn output, then VMEM scratch:
               xcat_scr (bt*S, C), ctx_scr (bt*S, C)
    """
    f32 = jnp.float32
    dh = dim_head
    S = n_tokens + heads

    if return_attn:
        attn_ref, xcat_scr, ctx_scr = rest
    else:
        attn_ref = None
        xcat_scr, ctx_scr = rest
    cdt = xcat_scr.dtype                      # matmul compute dtype (f32 or bf16)

    # ---- head tokens + x_cat assembly (written into VMEM scratch, no concat) ----
    for b in range(bt):                       # static unroll over the batch block
        xb = x_ref[b]                                            # (N, C)
        xcat_scr[b * S:b * S + n_tokens, :] = xb.astype(cdt)

        col_mean = jnp.mean(xb, axis=0, keepdims=True)           # (1, C) token mean
        m_sel = mask_ref[...] * col_mean                         # (heads, C)
        y = jnp.dot(m_sel, wht_ref[...], preferred_element_type=f32) + bht_ref[...]
        # grouped LayerNorm over dim_head-sized channel groups via block-diag avg
        mu = jnp.dot(y, gavg_ref[...], preferred_element_type=f32)
        d = y - mu
        var = jnp.dot(d * d, gavg_ref[...], preferred_element_type=f32)
        normed = d * jax.lax.rsqrt(var + eps) * gamma_ref[...] + beta_ref[...]
        ht = _gelu_exact(normed) + pos_ref[...]                  # (heads, C)
        xcat_scr[b * S + n_tokens:(b + 1) * S, :] = ht.astype(cdt)

    # ---- fused QKV over the whole (bt*S, C) slab (scale pre-folded into Wq) ----
    qkv = jnp.dot(xcat_scr[...], wqkv_ref[...], preferred_element_type=f32)  # (bt*S, 3C)

    # ---- per (batch, head) attention; contexts written into ctx scratch ----
    for b in range(bt):
        r0 = b * S
        p_tiles = []
        for h in range(heads):
            c0 = h * 3 * dh          # per-head [q_h | k_h | v_h] column block
            qh = qkv[r0:r0 + S, c0:c0 + dh]
            kh = qkv[r0:r0 + S, c0 + dh:c0 + 2 * dh]
            vh = qkv[r0:r0 + S, c0 + 2 * dh:c0 + 3 * dh]
            s = jax.lax.dot_general(qh, kh, (((1,), (1,)), ((), ())),
                                    preferred_element_type=f32)  # (S, S), scale in q
            s = s - jnp.max(s, axis=-1, keepdims=True)
            e = jnp.exp(s)
            p = e * pl.reciprocal(jnp.sum(e, axis=-1, keepdims=True), approx=True)
            if return_attn:
                p_tiles.append(p)
            ctx_h = jnp.dot(p, vh, preferred_element_type=f32)   # (S, dh)
            ctx_scr[r0:r0 + S, h * dh:(h + 1) * dh] = ctx_h.astype(cdt)
        if return_attn:
            # single slab store per batch element (stack along a leading axis only)
            attn_ref[b] = jnp.stack(p_tiles, axis=0)             # (heads, S, S)

    # ---- output projection over the whole (bt*S, C) slab ----
    proj = jnp.dot(ctx_scr[...], wp_ref[...], preferred_element_type=f32) + bp_ref[...]

    # ---- cls / patch / head-token recombination (direct stores, no concat) ----
    for b in range(bt):
        pb = proj[b * S:(b + 1) * S, :]
        cls = pb[0:1, :]
        patch = pb[1:n_tokens, :]
        ht_out = pb[n_tokens:, :]
        cls = (cls
               + jnp.mean(ht_out, axis=0, keepdims=True)
               + jnp.mean(patch, axis=0, keepdims=True))
        xout_ref[b, 0:1, :] = cls
        xout_ref[b, 1:n_tokens, :] = patch


# ------------------------- one-time parameter preparation ----------------------

def prepare_attention_params(params, *, heads, dim_head, compute_dtype=jnp.float32):
    """Hoisted weight preprocessing (done once, not per forward call)."""
    f32 = jnp.float32
    C = heads * dim_head
    dh = dim_head
    scale = dim_head ** (-0.5)

    wqkv_t = jnp.asarray(params["w_qkv"], f32).T                 # (C, 3C) = [q | k | v]
    wqkv_t = wqkv_t.at[:, :C].multiply(scale)                    # fold softmax scale into Wq
    # permute columns into per-head [q_h | k_h | v_h] blocks -> the kernel's per-head
    # loop slices the fused QKV result contiguously (no intermediate q/k/v tensors).
    perm = np.concatenate([t * C + h * dh + np.arange(dh)
                           for h in range(heads) for t in range(3)])
    wqkv_t = wqkv_t[:, perm].astype(compute_dtype)

    w_proj_t = jnp.asarray(params["w_proj"], f32).T.astype(compute_dtype)  # (C, C)
    b_proj = jnp.asarray(params["b_proj"], f32).reshape(1, C)

    w_ht_rep = jnp.tile(jnp.asarray(params["w_ht"], f32).T, (heads, 1))    # (C, C)
    b_ht = jnp.asarray(params["b_ht"], f32).reshape(1, C)

    head_mask = jnp.repeat(jnp.eye(heads, dtype=f32), dim_head, axis=1)    # (heads, C)
    group_avg = jnp.kron(jnp.eye(heads, dtype=f32),
                         jnp.full((dh, dh), 1.0 / dh, f32))                # (C, C)

    gamma = jnp.tile(jnp.asarray(params["ln_g"], f32), heads).reshape(1, C)
    beta = jnp.tile(jnp.asarray(params["ln_b"], f32), heads).reshape(1, C)
    pos = jnp.asarray(params["pos"], f32).reshape(heads, C)

    return dict(w_qkv_t=wqkv_t, w_proj_t=w_proj_t, b_proj=b_proj,
                w_ht_rep=w_ht_rep, b_ht=b_ht, head_mask=head_mask,
                group_avg=group_avg, gamma=gamma, beta=beta, pos=pos,
                compute_dtype=compute_dtype)


# --------------------------------- wrapper ------------------------------------

def attention_forward(x, prep, *, heads, dim_head, batch_block=None, return_attn=False):
    """batch_block: batch elements per grid step.
       None -> whole batch in one step (best on v5e/v6e, 1 TensorCore).
       Use >=2 grid steps (batch_block = B//2) on v7x to engage both TensorCores."""
    B, N, C = x.shape
    assert C == heads * dim_head, "forward requires dim == heads * dim_head"
    S = N + heads
    f32 = jnp.float32
    cdt = prep["compute_dtype"]

    bt = B if batch_block is None else int(batch_block)
    assert B % bt == 0, "batch_block must divide the batch size"
    grid = (B // bt,)

    in_specs = [
        pl.BlockSpec((bt, N, C), lambda g: (g, 0, 0)),      # x (batch block)
        pl.BlockSpec((heads, C), lambda g: (0, 0)),         # head_mask
        pl.BlockSpec((C, C), lambda g: (0, 0)),             # w_ht_rep
        pl.BlockSpec((1, C), lambda g: (0, 0)),             # b_ht
        pl.BlockSpec((C, C), lambda g: (0, 0)),             # group_avg
        pl.BlockSpec((1, C), lambda g: (0, 0)),             # gamma
        pl.BlockSpec((1, C), lambda g: (0, 0)),             # beta
        pl.BlockSpec((heads, C), lambda g: (0, 0)),         # pos
        pl.BlockSpec((C, 3 * C), lambda g: (0, 0)),         # w_qkv_t (scaled, per-head cols)
        pl.BlockSpec((C, C), lambda g: (0, 0)),             # w_proj_t
        pl.BlockSpec((1, C), lambda g: (0, 0)),             # b_proj
    ]

    out_shapes = [jax.ShapeDtypeStruct((B, N, C), f32)]
    out_specs = [pl.BlockSpec((bt, N, C), lambda g: (g, 0, 0))]
    if return_attn:
        out_shapes.append(jax.ShapeDtypeStruct((B, heads, S, S), f32))
        out_specs.append(pl.BlockSpec((bt, heads, S, S), lambda g: (g, 0, 0, 0)))

    scratch_shapes = [
        pltpu.VMEM((bt * S, C), cdt),     # x_cat: tokens + head tokens (no concat)
        pltpu.VMEM((bt * S, C), cdt),     # ctx:   per-head attention outputs
    ]

    res = pl.pallas_call(
        partial(_conformer_attention_kernel, bt=bt, heads=heads, dim_head=dim_head,
                n_tokens=N, eps=1e-5, return_attn=return_attn),
        out_shape=tuple(out_shapes),
        grid_spec=pltpu.PrefetchScalarGridSpec(
            num_scalar_prefetch=0, grid=grid,
            in_specs=in_specs, out_specs=tuple(out_specs),
            scratch_shapes=scratch_shapes),
        compiler_params=pltpu.CompilerParams(
            dimension_semantics=("parallel",),
            # explicit budget so the (double-buffered) blocks stay v7x-safe (64 MiB VMEM)
            vmem_limit_bytes=32 * 1024 * 1024),
    )(x, prep["head_mask"], prep["w_ht_rep"], prep["b_ht"], prep["group_avg"],
      prep["gamma"], prep["beta"], prep["pos"], prep["w_qkv_t"],
      prep["w_proj_t"], prep["b_proj"])

    if return_attn:
        return res[0], res[1]
    return res[0], None


# --------------------------- pure-JAX reference --------------------------------

def reference_forward(x, params, *, heads, dim_head):
    B, N, C = x.shape
    S = N + heads
    head_pos = jnp.broadcast_to(params["pos"], (B, heads, C))
    x_ = x.reshape(B, N, heads, dim_head).transpose(0, 2, 1, 3).mean(axis=2)   # (B,H,dh)
    x_ = x_ @ params["w_ht"].T + params["b_ht"]                                # (B,H,C)
    x_ = x_.reshape(B, heads, heads, dim_head)
    mu = x_.mean(-1, keepdims=True)
    var = ((x_ - mu) ** 2).mean(-1, keepdims=True)
    x_ = (x_ - mu) / jnp.sqrt(var + 1e-5) * params["ln_g"] + params["ln_b"]
    x_ = jax.nn.gelu(x_, approximate=False)
    x_ = x_.reshape(B, heads, C) + head_pos
    xc = jnp.concatenate([x, x_], axis=1)                                      # (B,S,C)
    qkv = (xc @ params["w_qkv"].T).reshape(B, S, 3, heads, dim_head).transpose(2, 0, 3, 1, 4)
    q, k, v = qkv[0], qkv[1], qkv[2]
    attn = jnp.einsum("bhid,bhjd->bhij", q, k) * (dim_head ** -0.5)
    attn = jax.nn.softmax(attn, axis=-1)
    o = jnp.einsum("bhij,bhjd->bhid", attn, v).transpose(0, 2, 1, 3).reshape(B, S, C)
    o = o @ params["w_proj"].T + params["b_proj"]
    cls, patch, ht = o[:, :1], o[:, 1:N], o[:, N:]
    cls = cls + ht.mean(axis=1, keepdims=True) + patch.mean(axis=1, keepdims=True)
    return jnp.concatenate([cls, patch], axis=1), attn


# ----------------------------------- main --------------------------------------

if __name__ == "__main__":
    # small shapes consistent with the module: dim = heads * dim_head
    B, N = 2, 9          # 1 cls token + 8 patch tokens
    HEADS, DIM_HEAD = 4, 8
    DIM = HEADS * DIM_HEAD  # 32

    key = jax.random.PRNGKey(0)
    ks = jax.random.split(key, 10)
    params = {
        "w_qkv": (jax.random.normal(ks[0], (3 * DIM, DIM), jnp.float32) * 0.05),
        "w_proj": (jax.random.normal(ks[1], (DIM, DIM), jnp.float32) * 0.05),
        "b_proj": (jax.random.normal(ks[2], (DIM,), jnp.float32) * 0.01),
        "w_ht": (jax.random.normal(ks[3], (DIM, DIM_HEAD), jnp.float32) * 0.05),
        "b_ht": (jax.random.normal(ks[4], (DIM,), jnp.float32) * 0.01),
        "ln_g": jnp.ones((DIM_HEAD,), jnp.float32)
                + jax.random.normal(ks[5], (DIM_HEAD,), jnp.float32) * 0.01,
        "ln_b": (jax.random.normal(ks[6], (DIM_HEAD,), jnp.float32) * 0.01),
        "pos": (jax.random.normal(ks[7], (1, HEADS, DIM), jnp.float32) * 0.02),
    }
    x = jax.random.normal(ks[8], (B, N, DIM), jnp.float32)

    # one-time weight preparation (hoisted out of the forward path)
    prep = prepare_attention_params(params, heads=HEADS, dim_head=DIM_HEAD)

    # full path: whole batch folded into one grid step, attention slab returned
    out, attn = attention_forward(x, prep, heads=HEADS, dim_head=DIM_HEAD,
                                  return_attn=True)
    jax.block_until_ready((out, attn))

    # fast path: no (B,H,S,S) HBM write; batch_block=1 -> grid=(2,) "parallel",
    # the layout that lets v7x use both TensorCores.
    out_fast, _ = attention_forward(x, prep, heads=HEADS, dim_head=DIM_HEAD,
                                    batch_block=1, return_attn=False)
    jax.block_until_ready(out_fast)

    # bf16 MXU path (weights + x_cat/ctx scratch in bfloat16, f32 accumulation)
    prep_bf16 = prepare_attention_params(params, heads=HEADS, dim_head=DIM_HEAD,
                                         compute_dtype=jnp.bfloat16)
    out_bf16, _ = attention_forward(x, prep_bf16, heads=HEADS, dim_head=DIM_HEAD,
                                    return_attn=False)
    jax.block_until_ready(out_bf16)

    ref_out, ref_attn = reference_forward(x, params, heads=HEADS, dim_head=DIM_HEAD)
    # tolerance admits the EUP approx reciprocal in the softmax and MXU f32 rounding
    np.testing.assert_allclose(np.asarray(attn), np.asarray(ref_attn), rtol=3e-3, atol=3e-3)
    np.testing.assert_allclose(np.asarray(out), np.asarray(ref_out), rtol=3e-3, atol=3e-3)
    np.testing.assert_allclose(np.asarray(out_fast), np.asarray(ref_out), rtol=3e-3, atol=3e-3)
    # bf16 matmul inputs -> looser tolerance
    np.testing.assert_allclose(np.asarray(out_bf16), np.asarray(ref_out), rtol=3e-2, atol=3e-2)

    print("KERNEL_OK")
</pallas_src>

<mosaic_0001>
module attributes {stable_mosaic.version = 11 : i64} {
  func.func @_conformer_attention_kernel(%arg0: i32, %arg1: memref<2x9x32xf32, #tpu.memory_space<vmem>>, %arg2: memref<4x32xf32, #tpu.memory_space<vmem>>, %arg3: memref<32x32xf32, #tpu.memory_space<vmem>>, %arg4: memref<1x32xf32, #tpu.memory_space<vmem>>, %arg5: memref<32x32xf32, #tpu.memory_space<vmem>>, %arg6: memref<1x32xf32, #tpu.memory_space<vmem>>, %arg7: memref<1x32xf32, #tpu.memory_space<vmem>>, %arg8: memref<4x32xf32, #tpu.memory_space<vmem>>, %arg9: memref<32x96xf32, #tpu.memory_space<vmem>>, %arg10: memref<32x32xf32, #tpu.memory_space<vmem>>, %arg11: memref<1x32xf32, #tpu.memory_space<vmem>>, %arg12: memref<2x9x32xf32, #tpu.memory_space<vmem>>, %arg13: memref<2x4x13x13xf32, #tpu.memory_space<vmem>>, %arg14: memref<26x32xf32, #tpu.memory_space<vmem>>, %arg15: memref<26x32xf32, #tpu.memory_space<vmem>>) attributes {dimension_semantics = [#tpu.dimension_semantics<parallel>], iteration_bounds = array<i64: 1>, scalar_prefetch = 0 : i64, scratch_operands = 2 : i64, tpu.core_type = #tpu.core_type<tc>, window_params = [{transform_indices = @transform_0, window_bounds = array<i64: 2, 9, 32>}, {pipeline_mode = #tpu.pipeline_mode<synchronous>, transform_indices = @transform_1, window_bounds = array<i64: 4, 32>}, {pipeline_mode = #tpu.pipeline_mode<synchronous>, transform_indices = @transform_2, window_bounds = array<i64: 32, 32>}, {pipeline_mode = #tpu.pipeline_mode<synchronous>, transform_indices = @transform_3, window_bounds = array<i64: 1, 32>}, {pipeline_mode = #tpu.pipeline_mode<synchronous>, transform_indices = @transform_4, window_bounds = array<i64: 32, 32>}, {pipeline_mode = #tpu.pipeline_mode<synchronous>, transform_indices = @transform_5, window_bounds = array<i64: 1, 32>}, {pipeline_mode = #tpu.pipeline_mode<synchronous>, transform_indices = @transform_6, window_bounds = array<i64: 1, 32>}, {pipeline_mode = #tpu.pipeline_mode<synchronous>, transform_indices = @transform_7, window_bounds = array<i64: 4, 32>}, {pipeline_mode = #tpu.pipeline_mode<synchronous>, transform_indices = @transform_8, window_bounds = array<i64: 32, 96>}, {pipeline_mode = #tpu.pipeline_mode<synchronous>, transform_indices = @transform_9, window_bounds = array<i64: 32, 32>}, {pipeline_mode = #tpu.pipeline_mode<synchronous>, transform_indices = @transform_10, window_bounds = array<i64: 1, 32>}, {transform_indices = @transform_11, window_bounds = array<i64: 2, 9, 32>}, {transform_indices = @transform_12, window_bounds = array<i64: 2, 4, 13, 13>}]} {
    %c0 = arith.constant 0 : index
    %c0_0 = arith.constant 0 : index
    %c0_1 = arith.constant 0 : index
    %0 = vector.load %arg1[%c0, %c0_0, %c0_1] : memref<2x9x32xf32, #tpu.memory_space<vmem>>, vector<1x9x32xf32>
    %1 = vector.shape_cast %0 : vector<1x9x32xf32> to vector<9x32xf32>
    %c0_2 = arith.constant 0 : index
    %c0_3 = arith.constant 0 : index
    %2 = vector.load %arg14[%c0_2, %c0_3] : memref<26x32xf32, #tpu.memory_space<vmem>>, vector<9x32xf32>
    tpu.vector_store %arg14[%c0_2, %c0_3], %1 {strides = array<i32>} : memref<26x32xf32, #tpu.memory_space<vmem>>, vector<9x32xf32>,
    %cst = arith.constant dense<0.000000e+00> : vector<32xf32>
    %3 = vector.multi_reduction <add>, %1, %cst [0] : vector<9x32xf32> to vector<32xf32>
    %4 = vector.shape_cast %3 : vector<32xf32> to vector<1x32xf32>
    %cst_4 = arith.constant 9.000000e+00 : f32
    %5 = vector.broadcast %cst_4 : f32 to vector<1x32xf32>
    %6 = arith.divf %4, %5 : vector<1x32xf32>
    %c0_5 = arith.constant 0 : index
    %c0_6 = arith.constant 0 : index
    %7 = vector.load %arg2[%c0_5, %c0_6] : memref<4x32xf32, #tpu.memory_space<vmem>>, vector<4x32xf32>
    %8 = vector.broadcast %6 : vector<1x32xf32> to vector<4x32xf32>
    %9 = arith.mulf %7, %8 : vector<4x32xf32>
    %c0_7 = arith.constant 0 : index
    %c0_8 = arith.constant 0 : index
    %10 = vector.load %arg3[%c0_7, %c0_8] : memref<32x32xf32, #tpu.memory_space<vmem>>, vector<32x32xf32>
    %cst_9 = arith.constant dense<0.000000e+00> : vector<4x32xf32>
    %11 = tpu.matmul %9, %10, %cst_9 {dimension_numbers = #tpu.dot_dimension_numbers<[1], [0], [0], [1], [0, 0, 1, 1], [], []>} : vector<4x32xf32>, vector<32x32xf32>, vector<4x32xf32> -> vector<4x32xf32>
    %c0_10 = arith.constant 0 : index
    %c0_11 = arith.constant 0 : index
    %12 = vector.load %arg4[%c0_10, %c0_11] : memref<1x32xf32, #tpu.memory_space<vmem>>, vector<1x32xf32>
    %13 = vector.broadcast %12 : vector<1x32xf32> to vector<4x32xf32>
    %14 = arith.addf %11, %13 : vector<4x32xf32>
    %c0_12 = arith.constant 0 : index
    %c0_13 = arith.constant 0 : index
    %15 = vector.load %arg5[%c0_12, %c0_13] : memref<32x32xf32, #tpu.memory_space<vmem>>, vector<32x32xf32>
    %cst_14 = arith.constant dense<0.000000e+00> : vector<4x32xf32>
    %16 = tpu.matmul %14, %15, %cst_14 {dimension_numbers = #tpu.dot_dimension_numbers<[1], [0], [0], [1], [0, 0, 1, 1], [], []>} : vector<4x32xf32>, vector<32x32xf32>, vector<4x32xf32> -> vector<4x32xf32>
    %17 = arith.subf %14, %16 : vector<4x32xf32>
    %18 = arith.mulf %17, %17 : vector<4x32xf32>
    %c0_15 = arith.constant 0 : index
    %c0_16 = arith.constant 0 : index
    %19 = vector.load %arg5[%c0_15, %c0_16] : memref<32x32xf32, #tpu.memory_space<vmem>>, vector<32x32xf32>
    %cst_17 = arith.constant dense<0.000000e+00> : vector<4x32xf32>
    %20 = tpu.matmul %18, %19, %cst_17 {dimension_numbers = #tpu.dot_dimension_numbers<[1], [0], [0], [1], [0, 0, 1, 1], [], []>} : vector<4x32xf32>, vector<32x32xf32>, vector<4x32xf32> -> vector<4x32xf32>
    %cst_18 = arith.constant 9.99999974E-6 : f32
    %21 = vector.broadcast %cst_18 : f32 to vector<4x32xf32>
    %22 = arith.addf %20, %21 : vector<4x32xf32>
    %23 = math.rsqrt %22 : vector<4x32xf32>
    %24 = arith.mulf %17, %23 : vector<4x32xf32>
    %c0_19 = arith.constant 0 : index
    %c0_20 = arith.constant 0 : index
    %25 = vector.load %arg6[%c0_19, %c0_20] : memref<1x32xf32, #tpu.memory_space<vmem>>, vector<1x32xf32>
    %26 = vector.broadcast %25 : vector<1x32xf32> to vector<4x32xf32>
    %27 = arith.mulf %24, %26 : vector<4x32xf32>
    %c0_21 = arith.constant 0 : index
    %c0_22 = arith.constant 0 : index
    %28 = vector.load %arg7[%c0_21, %c0_22] : memref<1x32xf32, #tpu.memory_space<vmem>>, vector<1x32xf32>
    %29 = vector.broadcast %28 : vector<1x32xf32> to vector<4x32xf32>
    %30 = arith.addf %27, %29 : vector<4x32xf32>
    %cst_23 = arith.constant 5.000000e-01 : f32
    %31 = vector.broadcast %cst_23 : f32 to vector<4x32xf32>
    %32 = arith.mulf %31, %30 : vector<4x32xf32>
    %cst_24 = arith.constant 0.707106769 : f32
    %33 = vector.broadcast %cst_24 : f32 to vector<4x32xf32>
    %34 = arith.mulf %30, %33 : vector<4x32xf32>
    %35 = math.absf %34 : vector<4x32xf32>
    %cst_25 = arith.constant 0.327591091 : f32
    %36 = vector.broadcast %cst_25 : f32 to vector<4x32xf32>
    %37 = arith.mulf %36, %35 : vector<4x32xf32>
    %cst_26 = arith.constant 1.000000e+00 : f32
    %38 = vector.broadcast %cst_26 : f32 to vector<4x32xf32>
    %39 = arith.addf %38, %37 : vector<4x32xf32>
    %cst_27 = arith.constant 1.000000e+00 : f32
    %40 = vector.broadcast %cst_27 : f32 to vector<4x32xf32>
    %41 = arith.divf %40, %39 : vector<4x32xf32>
    %cst_28 = arith.constant 1.06140542 : f32
    %42 = vector.broadcast %cst_28 : f32 to vector<4x32xf32>
    %43 = arith.mulf %42, %41 : vector<4x32xf32>
    %cst_29 = arith.constant -1.45315206 : f32
    %44 = vector.broadcast %cst_29 : f32 to vector<4x32xf32>
    %45 = arith.addf %43, %44 : vector<4x32xf32>
    %46 = arith.mulf %45, %41 : vector<4x32xf32>
    %cst_30 = arith.constant 1.42141378 : f32
    %47 = vector.broadcast %cst_30 : f32 to vector<4x32xf32>
    %48 = arith.addf %46, %47 : vector<4x32xf32>
    %49 = arith.mulf %48, %41 : vector<4x32xf32>
    %cst_31 = arith.constant -0.284496725 : f32
    %50 = vector.broadcast %cst_31 : f32 to vector<4x32xf32>
    %51 = arith.addf %49, %50 : vector<4x32xf32>
    %52 = arith.mulf %51, %41 : vector<4x32xf32>
    %cst_32 = arith.constant 0.254829586 : f32
    %53 = vector.broadcast %cst_32 : f32 to vector<4x32xf32>
    %54 = arith.addf %52, %53 : vector<4x32xf32>
    %55 = arith.mulf %54, %41 : vector<4x32xf32>
    %cst_33 = arith.constant 0.000000e+00 : f32
    %56 = vector.broadcast %cst_33 : f32 to vector<4x32xf32>
    %57 = arith.subf %56, %35 : vector<4x32xf32>
    %58 = arith.mulf %57, %35 : vector<4x32xf32>
    %59 = math.exp %58 : vector<4x32xf32>
    %60 = arith.mulf %55, %59 : vector<4x32xf32>
    %cst_34 = arith.constant 1.000000e+00 : f32
    %61 = vector.broadcast %cst_34 : f32 to vector<4x32xf32>
    %62 = arith.subf %61, %60 : vector<4x32xf32>
    %cst_35 = arith.constant 0.000000e+00 : f32
    %63 = vector.broadcast %cst_35 : f32 to vector<4x32xf32>
    %64 = arith.cmpf oge, %34, %63 : vector<4x32xf32>
    %cst_36 = arith.constant 0.000000e+00 : f32
    %65 = vector.broadcast %cst_36 : f32 to vector<4x32xf32>
    %66 = arith.subf %65, %62 : vector<4x32xf32>
    %67 = arith.select %64, %62, %66 : vector<4x32xi1>, vector<4x32xf32>
    %cst_37 = arith.constant 1.000000e+00 : f32
    %68 = vector.broadcast %cst_37 : f32 to vector<4x32xf32>
    %69 = arith.addf %68, %67 : vector<4x32xf32>
    %70 = arith.mulf %32, %69 : vector<4x32xf32>
    %c0_38 = arith.constant 0 : index
    %c0_39 = arith.constant 0 : index
    %71 = vector.load %arg8[%c0_38, %c0_39] : memref<4x32xf32, #tpu.memory_space<vmem>>, vector<4x32xf32>
    %72 = arith.addf %70, %71 : vector<4x32xf32>
    %c9 = arith.constant 9 : index
    %c0_40 = arith.constant 0 : index
    %73 = vector.load %arg14[%c9, %c0_40] : memref<26x32xf32, #tpu.memory_space<vmem>>, vector<4x32xf32>
    tpu.vector_store %arg14[%c9, %c0_40], %72 {strides = array<i32>} : memref<26x32xf32, #tpu.memory_space<vmem>>, vector<4x32xf32>,
    %c1 = arith.constant 1 : index
    %c0_41 = arith.constant 0 : index
    %c0_42 = arith.constant 0 : index
    %74 = vector.load %arg1[%c1, %c0_41, %c0_42] : memref<2x9x32xf32, #tpu.memory_space<vmem>>, vector<1x9x32xf32>
    %75 = vector.shape_cast %74 : vector<1x9x32xf32> to vector<9x32xf32>
    %c13 = arith.constant 13 : index
    %c0_43 = arith.constant 0 : index
    %76 = vector.load %arg14[%c13, %c0_43] : memref<26x32xf32, #tpu.memory_space<vmem>>, vector<9x32xf32>
    tpu.vector_store %arg14[%c13, %c0_43], %75 {strides = array<i32>} : memref<26x32xf32, #tpu.memory_space<vmem>>, vector<9x32xf32>,
    %cst_44 = arith.constant dense<0.000000e+00> : vector<32xf32>
    %77 = vector.multi_reduction <add>, %75, %cst_44 [0] : vector<9x32xf32> to vector<32xf32>
    %78 = vector.shape_cast %77 : vector<32xf32> to vector<1x32xf32>
    %cst_45 = arith.constant 9.000000e+00 : f32
    %79 = vector.broadcast %cst_45 : f32 to vector<1x32xf32>
    %80 = arith.divf %78, %79 : vector<1x32xf32>
    %c0_46 = arith.constant 0 : index
    %c0_47 = arith.constant 0 : index
    %81 = vector.load %arg2[%c0_46, %c0_47] : memref<4x32xf32, #tpu.memory_space<vmem>>, vector<4x32xf32>
    %82 = vector.broadcast %80 : vector<1x32xf32> to vector<4x32xf32>
    %83 = arith.mulf %81, %82 : vector<4x32xf32>
    %c0_48 = arith.constant 0 : index
    %c0_49 = arith.constant 0 : index
    %84 = vector.load %arg3[%c0_48, %c0_49] : memref<32x32xf32, #tpu.memory_space<vmem>>, vector<32x32xf32>
    %cst_50 = arith.constant dense<0.000000e+00> : vector<4x32xf32>
    %85 = tpu.matmul %83, %84, %cst_50 {dimension_numbers = #tpu.dot_dimension_numbers<[1], [0], [0], [1], [0, 0, 1, 1], [], []>} : vector<4x32xf32>, vector<32x32xf32>, vector<4x32xf32> -> vector<4x32xf32>
    %c0_51 = arith.constant 0 : index
    %c0_52 = arith.constant 0 : index
    %86 = vector.load %arg4[%c0_51, %c0_52] : memref<1x32xf32, #tpu.memory_space<vmem>>, vector<1x32xf32>
    %87 = vector.broadcast %86 : vector<1x32xf32> to vector<4x32xf32>
    %88 = arith.addf %85, %87 : vector<4x32xf32>
    %c0_53 = arith.constant 0 : index
    %c0_54 = arith.constant 0 : index
    %89 = vector.load %arg5[%c0_53, %c0_54] : memref<32x32xf32, #tpu.memory_space<vmem>>, vector<32x32xf32>
    %cst_55 = arith.constant dense<0.000000e+00> : vector<4x32xf32>
    %90 = tpu.matmul %88, %89, %cst_55 {dimension_numbers = #tpu.dot_dimension_numbers<[1], [0], [0], [1], [0, 0, 1, 1], [], []>} : vector<4x32xf32>, vector<32x32xf32>, vector<4x32xf32> -> vector<4x32xf32>
    %91 = arith.subf %88, %90 : vector<4x32xf32>
    %92 = arith.mulf %91, %91 : vector<4x32xf32>
    %c0_56 = arith.constant 0 : index
    %c0_57 = arith.constant 0 : index
    %93 = vector.load %arg5[%c0_56, %c0_57] : memref<32x32xf32, #tpu.memory_space<vmem>>, vector<32x32xf32>
    %cst_58 = arith.constant dense<0.000000e+00> : vector<4x32xf32>
    %94 = tpu.matmul %92, %93, %cst_58 {dimension_numbers = #tpu.dot_dimension_numbers<[1], [0], [0], [1], [0, 0, 1, 1], [], []>} : vector<4x32xf32>, vector<32x32xf32>, vector<4x32xf32> -> vector<4x32xf32>
    %cst_59 = arith.constant 9.99999974E-6 : f32
    %95 = vector.broadcast %cst_59 : f32 to vector<4x32xf32>
    %96 = arith.addf %94, %95 : vector<4x32xf32>
    %97 = math.rsqrt %96 : vector<4x32xf32>
    %98 = arith.mulf %91, %97 : vector<4x32xf32>
    %c0_60 = arith.constant 0 : index
    %c0_61 = arith.constant 0 : index
    %99 = vector.load %arg6[%c0_60, %c0_61] : memref<1x32xf32, #tpu.memory_space<vmem>>, vector<1x32xf32>
    %100 = vector.broadcast %99 : vector<1x32xf32> to vector<4x32xf32>
    %101 = arith.mulf %98, %100 : vector<4x32xf32>
    %c0_62 = arith.constant 0 : index
    %c0_63 = arith.constant 0 : index
    %102 = vector.load %arg7[%c0_62, %c0_63] : memref<1x32xf32, #tpu.memory_space<vmem>>, vector<1x32xf32>
    %103 = vector.broadcast %102 : vector<1x32xf32> to vector<4x32xf32>
    %104 = arith.addf %101, %103 : vector<4x32xf32>
    %cst_64 = arith.constant 5.000000e-01 : f32
    %105 = vector.broadcast %cst_64 : f32 to vector<4x32xf32>
    %106 = arith.mulf %105, %104 : vector<4x32xf32>
    %cst_65 = arith.constant 0.707106769 : f32
    %107 = vector.broadcast %cst_65 : f32 to vector<4x32xf32>
    %108 = arith.mulf %104, %107 : vector<4x32xf32>
    %109 = math.absf %108 : vector<4x32xf32>
    %cst_66 = arith.constant 0.327591091 : f32
    %110 = vector.broadcast %cst_66 : f32 to vector<4x32xf32>
    %111 = arith.mulf %110, %109 : vector<4x32xf32>
    %cst_67 = arith.constant 1.000000e+00 : f32
    %112 = vector.broadcast %cst_67 : f32 to vector<4x32xf32>
    %113 = arith.addf %112, %111 : vector<4x32xf32>
    %cst_68 = arith.constant 1.000000e+00 : f32
    %114 = vector.broadcast %cst_68 : f32 to vector<4x32xf32>
    %115 = arith.divf %114, %113 : vector<4x32xf32>
    %cst_69 = arith.constant 1.06140542 : f32
    %116 = vector.broadcast %cst_69 : f32 to vector<4x32xf32>
    %117 = arith.mulf %116, %115 : vector<4x32xf32>
    %cst_70 = arith.constant -1.45315206 : f32
    %118 = vector.broadcast %cst_70 : f32 to vector<4x32xf32>
    %119 = arith.addf %117, %118 : vector<4x32xf32>
    %120 = arith.mulf %119, %115 : vector<4x32xf32>
    %cst_71 = arith.constant 1.42141378 : f32
    %121 = vector.broadcast %cst_71 : f32 to vector<4x32xf32>
    %122 = arith.addf %120, %121 : vector<4x32xf32>
    %123 = arith.mulf %122, %115 : vector<4x32xf32>
    %cst_72 = arith.constant -0.284496725 : f32
    %124 = vector.broadcast %cst_72 : f32 to vector<4x32xf32>
    %125 = arith.addf %123, %124 : vector<4x32xf32>
    %126 = arith.mulf %125, %115 : vector<4x32xf32>
    %cst_73 = arith.constant 0.254829586 : f32
    %127 = vector.broadcast %cst_73 : f32 to vector<4x32xf32>
    %128 = arith.addf %126, %127 : vector<4x32xf32>
    %129 = arith.mulf %128, %115 : vector<4x32xf32>
    %cst_74 = arith.constant 0.000000e+00 : f32
    %130 = vector.broadcast %cst_74 : f32 to vector<4x32xf32>
    %131 = arith.subf %130, %109 : vector<4x32xf32>
    %132 = arith.mulf %131, %109 : vector<4x32xf32>
    %133 = math.exp %132 : vector<4x32xf32>
    %134 = arith.mulf %129, %133 : vector<4x32xf32>
    %cst_75 = arith.constant 1.000000e+00 : f32
    %135 = vector.broadcast %cst_75 : f32 to vector<4x32xf32>
    %136 = arith.subf %135, %134 : vector<4x32xf32>
    %cst_76 = arith.constant 0.000000e+00 : f32
    %137 = vector.broadcast %cst_76 : f32 to vector<4x32xf32>
    %138 = arith.cmpf oge, %108, %137 : vector<4x32xf32>
    %cst_77 = arith.constant 0.000000e+00 : f32
    %139 = vector.broadcast %cst_77 : f32 to vector<4x32xf32>
    %140 = arith.subf %139, %136 : vector<4x32xf32>
    %141 = arith.select %138, %136, %140 : vector<4x32xi1>, vector<4x32xf32>
    %cst_78 = arith.constant 1.000000e+00 : f32
    %142 = vector.broadcast %cst_78 : f32 to vector<4x32xf32>
    %143 = arith.addf %142, %141 : vector<4x32xf32>
    %144 = arith.mulf %106, %143 : vector<4x32xf32>
    %c0_79 = arith.constant 0 : index
    %c0_80 = arith.constant 0 : index
    %145 = vector.load %arg8[%c0_79, %c0_80] : memref<4x32xf32, #tpu.memory_space<vmem>>, vector<4x32xf32>
    %146 = arith.addf %144, %145 : vector<4x32xf32>
    %c22 = arith.constant 22 : index
    %c0_81 = arith.constant 0 : index
    %147 = vector.load %arg14[%c22, %c0_81] : memref<26x32xf32, #tpu.memory_space<vmem>>, vector<4x32xf32>
    tpu.vector_store %arg14[%c22, %c0_81], %146 {strides = array<i32>} : memref<26x32xf32, #tpu.memory_space<vmem>>, vector<4x32xf32>,
    %c0_82 = arith.constant 0 : index
    %c0_83 = arith.constant 0 : index
    %148 = vector.load %arg14[%c0_82, %c0_83] : memref<26x32xf32, #tpu.memory_space<vmem>>, vector<26x32xf32>
    %c0_84 = arith.constant 0 : index
    %c0_85 = arith.constant 0 : index
    %149 = vector.load %arg9[%c0_84, %c0_85] : memref<32x96xf32, #tpu.memory_space<vmem>>, vector<32x96xf32>
    %cst_86 = arith.constant dense<0.000000e+00> : vector<26x96xf32>
    %150 = tpu.matmul %148, %149, %cst_86 {dimension_numbers = #tpu.dot_dimension_numbers<[1], [0], [0], [1], [0, 0, 1, 1], [], []>} : vector<26x32xf32>, vector<32x96xf32>, vector<26x96xf32> -> vector<26x96xf32>
    %151 = vector.extract_strided_slice %150 {offsets = [0, 0], sizes = [13, 8], strides = [1, 1]} : vector<26x96xf32> to vector<13x8xf32>
    %152 = vector.extract_strided_slice %150 {offsets = [0, 8], sizes = [13, 8], strides = [1, 1]} : vector<26x96xf32> to vector<13x8xf32>
    %153 = vector.extract_strided_slice %150 {offsets = [0, 16], sizes = [13, 8], strides = [1, 1]} : vector<26x96xf32> to vector<13x8xf32>
    %cst_87 = arith.constant dense<0.000000e+00> : vector<13x13xf32>
    %154 = tpu.matmul %151, %152, %cst_87 {dimension_numbers = #tpu.dot_dimension_numbers<[1], [1], [0], [0], [0, 0, 1, 0], [], []>} : vector<13x8xf32>, vector<13x8xf32>, vector<13x13xf32> -> vector<13x13xf32>
    %cst_88 = arith.constant dense<0xFF800000> : vector<13xf32>
    %155 = vector.multi_reduction <maximumf>, %154, %cst_88 [1] : vector<13x13xf32> to vector<13xf32>
    %156 = vector.shape_cast %155 : vector<13xf32> to vector<13x1xf32>
    %157 = vector.broadcast %156 : vector<13x1xf32> to vector<13x13xf32>
    %158 = arith.subf %154, %157 : vector<13x13xf32>
    %159 = math.exp %158 : vector<13x13xf32>
    %cst_89 = arith.constant dense<0.000000e+00> : vector<13xf32>
    %160 = vector.multi_reduction <add>, %159, %cst_89 [1] : vector<13x13xf32> to vector<13xf32>
    %161 = vector.shape_cast %160 : vector<13xf32> to vector<13x1xf32>
    %162 = tpu.reciprocal %161 {approx = true} : vector<13x1xf32> -> vector<13x1xf32>
    %163 = vector.broadcast %162 : vector<13x1xf32> to vector<13x13xf32>
    %164 = arith.mulf %159, %163 : vector<13x13xf32>
    %cst_90 = arith.constant dense<0.000000e+00> : vector<13x8xf32>
    %165 = tpu.matmul %164, %153, %cst_90 {dimension_numbers = #tpu.dot_dimension_numbers<[1], [0], [0], [1], [0, 0, 1, 1], [], []>} : vector<13x13xf32>, vector<13x8xf32>, vector<13x8xf32> -> vector<13x8xf32>
    %c0_91 = arith.constant 0 : index
    %c0_92 = arith.constant 0 : index
    %166 = vector.load %arg15[%c0_91, %c0_92] : memref<26x32xf32, #tpu.memory_space<vmem>>, vector<13x8xf32>
    tpu.vector_store %arg15[%c0_91, %c0_92], %165 {strides = array<i32>} : memref<26x32xf32, #tpu.memory_space<vmem>>, vector<13x8xf32>,
    %167 = vector.extract_strided_slice %150 {offsets = [0, 24], sizes = [13, 8], strides = [1, 1]} : vector<26x96xf32> to vector<13x8xf32>
    %168 = vector.extract_strided_slice %150 {offsets = [0, 32], sizes = [13, 8], strides = [1, 1]} : vector<26x96xf32> to vector<13x8xf32>
    %169 = vector.extract_strided_slice %150 {offsets = [0, 40], sizes = [13, 8], strides = [1, 1]} : vector<26x96xf32> to vector<13x8xf32>
    %cst_93 = arith.constant dense<0.000000e+00> : vector<13x13xf32>
    %170 = tpu.matmul %167, %168, %cst_93 {dimension_numbers = #tpu.dot_dimension_numbers<[1], [1], [0], [0], [0, 0, 1, 0], [], []>} : vector<13x8xf32>, vector<13x8xf32>, vector<13x13xf32> -> vector<13x13xf32>
    %cst_94 = arith.constant dense<0xFF800000> : vector<13xf32>
    %171 = vector.multi_reduction <maximumf>, %170, %cst_94 [1] : vector<13x13xf32> to vector<13xf32>
    %172 = vector.shape_cast %171 : vector<13xf32> to vector<13x1xf32>
    %173 = vector.broadcast %172 : vector<13x1xf32> to vector<13x13xf32>
    %174 = arith.subf %170, %173 : vector<13x13xf32>
    %175 = math.exp %174 : vector<13x13xf32>
    %cst_95 = arith.constant dense<0.000000e+00> : vector<13xf32>
    %176 = vector.multi_reduction <add>, %175, %cst_95 [1] : vector<13x13xf32> to vector<13xf32>
    %177 = vector.shape_cast %176 : vector<13xf32> to vector<13x1xf32>
    %178 = tpu.reciprocal %177 {approx = true} : vector<13x1xf32> -> vector<13x1xf32>
    %179 = vector.broadcast %178 : vector<13x1xf32> to vector<13x13xf32>
    %180 = arith.mulf %175, %179 : vector<13x13xf32>
    %cst_96 = arith.constant dense<0.000000e+00> : vector<13x8xf32>
    %181 = tpu.matmul %180, %169, %cst_96 {dimension_numbers = #tpu.dot_dimension_numbers<[1], [0], [0], [1], [0, 0, 1, 1], [], []>} : vector<13x13xf32>, vector<13x8xf32>, vector<13x8xf32> -> vector<13x8xf32>
    %c0_97 = arith.constant 0 : index
    %c8 = arith.constant 8 : index
    %182 = vector.load %arg15[%c0_97, %c8] : memref<26x32xf32, #tpu.memory_space<vmem>>, vector<13x8xf32>
    tpu.vector_store %arg15[%c0_97, %c8], %181 {strides = array<i32>} : memref<26x32xf32, #tpu.memory_space<vmem>>, vector<13x8xf32>,
    %183 = vector.extract_strided_slice %150 {offsets = [0, 48], sizes = [13, 8], strides = [1, 1]} : vector<26x96xf32> to vector<13x8xf32>
    %184 = vector.extract_strided_slice %150 {offsets = [0, 56], sizes = [13, 8], strides = [1, 1]} : vector<26x96xf32> to vector<13x8xf32>
    %185 = vector.extract_strided_slice %150 {offsets = [0, 64], sizes = [13, 8], strides = [1, 1]} : vector<26x96xf32> to vector<13x8xf32>
    %cst_98 = arith.constant dense<0.000000e+00> : vector<13x13xf32>
    %186 = tpu.matmul %183, %184, %cst_98 {dimension_numbers = #tpu.dot_dimension_numbers<[1], [1], [0], [0], [0, 0, 1, 0], [], []>} : vector<13x8xf32>, vector<13x8xf32>, vector<13x13xf32> -> vector<13x13xf32>
    %cst_99 = arith.constant dense<0xFF800000> : vector<13xf32>
    %187 = vector.multi_reduction <maximumf>, %186, %cst_99 [1] : vector<13x13xf32> to vector<13xf32>
    %188 = vector.shape_cast %187 : vector<13xf32> to vector<13x1xf32>
    %189 = vector.broadcast %188 : vector<13x1xf32> to vector<13x13xf32>
    %190 = arith.subf %186, %189 : vector<13x13xf32>
    %191 = math.exp %190 : vector<13x13xf32>
    %cst_100 = arith.constant dense<0.000000e+00> : vector<13xf32>
    %192 = vector.multi_reduction <add>, %191, %cst_100 [1] : vector<13x13xf32> to vector<13xf32>
    %193 = vector.shape_cast %192 : vector<13xf32> to vector<13x1xf32>
    %194 = tpu.reciprocal %193 {approx = true} : vector<13x1xf32> -> vector<13x1xf32>
    %195 = vector.broadcast %194 : vector<13x1xf32> to vector<13x13xf32>
    %196 = arith.mulf %191, %195 : vector<13x13xf32>
    %cst_101 = arith.constant dense<0.000000e+00> : vector<13x8xf32>
    %197 = tpu.matmul %196, %185, %cst_101 {dimension_numbers = #tpu.dot_dimension_numbers<[1], [0], [0], [1], [0, 0, 1, 1], [], []>} : vector<13x13xf32>, vector<13x8xf32>, vector<13x8xf32> -> vector<13x8xf32>
    %c0_102 = arith.constant 0 : index
    %c16 = arith.constant 16 : index
    %198 = vector.load %arg15[%c0_102, %c16] : memref<26x32xf32, #tpu.memory_space<vmem>>, vector<13x8xf32>
    tpu.vector_store %arg15[%c0_102, %c16], %197 {strides = array<i32>} : memref<26x32xf32, #tpu.memory_space<vmem>>, vector<13x8xf32>,
    %199 = vector.extract_strided_slice %150 {offsets = [0, 72], sizes = [13, 8], strides = [1, 1]} : vector<26x96xf32> to vector<13x8xf32>
    %200 = vector.extract_strided_slice %150 {offsets = [0, 80], sizes = [13, 8], strides = [1, 1]} : vector<26x96xf32> to vector<13x8xf32>
    %201 = vector.extract_strided_slice %150 {offsets = [0, 88], sizes = [13, 8], strides = [1, 1]} : vector<26x96xf32> to vector<13x8xf32>
    %cst_103 = arith.constant dense<0.000000e+00> : vector<13x13xf32>
    %202 = tpu.matmul %199, %200, %cst_103 {dimension_numbers = #tpu.dot_dimension_numbers<[1], [1], [0], [0], [0, 0, 1, 0], [], []>} : vector<13x8xf32>, vector<13x8xf32>, vector<13x13xf32> -> vector<13x13xf32>
    %cst_104 = arith.constant dense<0xFF800000> : vector<13xf32>
    %203 = vector.multi_reduction <maximumf>, %202, %cst_104 [1] : vector<13x13xf32> to vector<13xf32>
    %204 = vector.shape_cast %203 : vector<13xf32> to vector<13x1xf32>
    %205 = vector.broadcast %204 : vector<13x1xf32> to vector<13x13xf32>
    %206 = arith.subf %202, %205 : vector<13x13xf32>
    %207 = math.exp %206 : vector<13x13xf32>
    %cst_105 = arith.constant dense<0.000000e+00> : vector<13xf32>
    %208 = vector.multi_reduction <add>, %207, %cst_105 [1] : vector<13x13xf32> to vector<13xf32>
    %209 = vector.shape_cast %208 : vector<13xf32> to vector<13x1xf32>
    %210 = tpu.reciprocal %209 {approx = true} : vector<13x1xf32> -> vector<13x1xf32>
    %211 = vector.broadcast %210 : vector<13x1xf32> to vector<13x13xf32>
    %212 = arith.mulf %207, %211 : vector<13x13xf32>
    %cst_106 = arith.constant dense<0.000000e+00> : vector<13x8xf32>
    %213 = tpu.matmul %212, %201, %cst_106 {dimension_numbers = #tpu.dot_dimension_numbers<[1], [0], [0], [1], [0, 0, 1, 1], [], []>} : vector<13x13xf32>, vector<13x8xf32>, vector<13x8xf32> -> vector<13x8xf32>
    %c0_107 = arith.constant 0 : index
    %c24 = arith.constant 24 : index
    %214 = vector.load %arg15[%c0_107, %c24] : memref<26x32xf32, #tpu.memory_space<vmem>>, vector<13x8xf32>
    tpu.vector_store %arg15[%c0_107, %c24], %213 {strides = array<i32>} : memref<26x32xf32, #tpu.memory_space<vmem>>, vector<13x8xf32>,
    %215 = vector.shape_cast %164 : vector<13x13xf32> to vector<1x13x13xf32>
    %216 = vector.shape_cast %180 : vector<13x13xf32> to vector<1x13x13xf32>
    %217 = vector.shape_cast %196 : vector<13x13xf32> to vector<1x13x13xf32>
    %218 = vector.shape_cast %212 : vector<13x13xf32> to vector<1x13x13xf32>
    %219 = tpu.concatenate %215, %216, %217, %218 in 0 : vector<1x13x13xf32>, vector<1x13x13xf32>, vector<1x13x13xf32>, vector<1x13x13xf32> -> vector<4x13x13xf32>
    %c0_108 = arith.constant 0 : index
    %c0_109 = arith.constant 0 : index
    %c0_110 = arith.constant 0 : index
    %c0_111 = arith.constant 0 : index
    %220 = vector.load %arg13[%c0_108, %c0_109, %c0_110, %c0_111] : memref<2x4x13x13xf32, #tpu.memory_space<vmem>>, vector<1x4x13x13xf32>
    %221 = vector.shape_cast %220 : vector<1x4x13x13xf32> to vector<4x13x13xf32>
    %222 = vector.shape_cast %219 : vector<4x13x13xf32> to vector<1x4x13x13xf32>
    tpu.vector_store %arg13[%c0_108, %c0_109, %c0_110, %c0_111], %222 {strides = array<i32>} : memref<2x4x13x13xf32, #tpu.memory_space<vmem>>, vector<1x4x13x13xf32>,
    %223 = vector.extract_strided_slice %150 {offsets = [13, 0], sizes = [13, 8], strides = [1, 1]} : vector<26x96xf32> to vector<13x8xf32>
    %224 = vector.extract_strided_slice %150 {offsets = [13, 8], sizes = [13, 8], strides = [1, 1]} : vector<26x96xf32> to vector<13x8xf32>
    %225 = vector.extract_strided_slice %150 {offsets = [13, 16], sizes = [13, 8], strides = [1, 1]} : vector<26x96xf32> to vector<13x8xf32>
    %cst_112 = arith.constant dense<0.000000e+00> : vector<13x13xf32>
    %226 = tpu.matmul %223, %224, %cst_112 {dimension_numbers = #tpu.dot_dimension_numbers<[1], [1], [0], [0], [0, 0, 1, 0], [], []>} : vector<13x8xf32>, vector<13x8xf32>, vector<13x13xf32> -> vector<13x13xf32>
    %cst_113 = arith.constant dense<0xFF800000> : vector<13xf32>
    %227 = vector.multi_reduction <maximumf>, %226, %cst_113 [1] : vector<13x13xf32> to vector<13xf32>
    %228 = vector.shape_cast %227 : vector<13xf32> to vector<13x1xf32>
    %229 = vector.broadcast %228 : vector<13x1xf32> to vector<13x13xf32>
    %230 = arith.subf %226, %229 : vector<13x13xf32>
    %231 = math.exp %230 : vector<13x13xf32>
    %cst_114 = arith.constant dense<0.000000e+00> : vector<13xf32>
    %232 = vector.multi_reduction <add>, %231, %cst_114 [1] : vector<13x13xf32> to vector<13xf32>
    %233 = vector.shape_cast %232 : vector<13xf32> to vector<13x1xf32>
    %234 = tpu.reciprocal %233 {approx = true} : vector<13x1xf32> -> vector<13x1xf32>
    %235 = vector.broadcast %234 : vector<13x1xf32> to vector<13x13xf32>
    %236 = arith.mulf %231, %235 : vector<13x13xf32>
    %cst_115 = arith.constant dense<0.000000e+00> : vector<13x8xf32>
    %237 = tpu.matmul %236, %225, %cst_115 {dimension_numbers = #tpu.dot_dimension_numbers<[1], [0], [0], [1], [0, 0, 1, 1], [], []>} : vector<13x13xf32>, vector<13x8xf32>, vector<13x8xf32> -> vector<13x8xf32>
    %c13_116 = arith.constant 13 : index
    %c0_117 = arith.constant 0 : index
    %238 = vector.load %arg15[%c13_116, %c0_117] : memref<26x32xf32, #tpu.memory_space<vmem>>, vector<13x8xf32>
    tpu.vector_store %arg15[%c13_116, %c0_117], %237 {strides = array<i32>} : memref<26x32xf32, #tpu.memory_space<vmem>>, vector<13x8xf32>,
    %239 = vector.extract_strided_slice %150 {offsets = [13, 24], sizes = [13, 8], strides = [1, 1]} : vector<26x96xf32> to vector<13x8xf32>
    %240 = vector.extract_strided_slice %150 {offsets = [13, 32], sizes = [13, 8], strides = [1, 1]} : vector<26x96xf32> to vector<13x8xf32>
    %241 = vector.extract_strided_slice %150 {offsets = [13, 40], sizes = [13, 8], strides = [1, 1]} : vector<26x96xf32> to vector<13x8xf32>
    %cst_118 = arith.constant dense<0.000000e+00> : vector<13x13xf32>
    %242 = tpu.matmul %239, %240, %cst_118 {dimension_numbers = #tpu.dot_dimension_numbers<[1], [1], [0], [0], [0, 0, 1, 0], [], []>} : vector<13x8xf32>, vector<13x8xf32>, vector<13x13xf32> -> vector<13x13xf32>
    %cst_119 = arith.constant dense<0xFF800000> : vector<13xf32>
    %243 = vector.multi_reduction <maximumf>, %242, %cst_119 [1] : vector<13x13xf32> to vector<13xf32>
    %244 = vector.shape_cast %243 : vector<13xf32> to vector<13x1xf32>
    %245 = vector.broadcast %244 : vector<13x1xf32> to vector<13x13xf32>
    %246 = arith.subf %242, %245 : vector<13x13xf32>
    %247 = math.exp %246 : vector<13x13xf32>
    %cst_120 = arith.constant dense<0.000000e+00> : vector<13xf32>
    %248 = vector.multi_reduction <add>, %247, %cst_120 [1] : vector<13x13xf32> to vector<13xf32>
    %249 = vector.shape_cast %248 : vector<13xf32> to vector<13x1xf32>
    %250 = tpu.reciprocal %249 {approx = true} : vector<13x1xf32> -> vector<13x1xf32>
    %251 = vector.broadcast %250 : vector<13x1xf32> to vector<13x13xf32>
    %252 = arith.mulf %247, %251 : vector<13x13xf32>
    %cst_121 = arith.constant dense<0.000000e+00> : vector<13x8xf32>
    %253 = tpu.matmul %252, %241, %cst_121 {dimension_numbers = #tpu.dot_dimension_numbers<[1], [0], [0], [1], [0, 0, 1, 1], [], []>} : vector<13x13xf32>, vector<13x8xf32>, vector<13x8xf32> -> vector<13x8xf32>
    %c13_122 = arith.constant 13 : index
    %c8_123 = arith.constant 8 : index
    %254 = vector.load %arg15[%c13_122, %c8_123] : memref<26x32xf32, #tpu.memory_space<vmem>>, vector<13x8xf32>
    tpu.vector_store %arg15[%c13_122, %c8_123], %253 {strides = array<i32>} : memref<26x32xf32, #tpu.memory_space<vmem>>, vector<13x8xf32>,
    %255 = vector.extract_strided_slice %150 {offsets = [13, 48], sizes = [13, 8], strides = [1, 1]} : vector<26x96xf32> to vector<13x8xf32>
    %256 = vector.extract_strided_slice %150 {offsets = [13, 56], sizes = [13, 8], strides = [1, 1]} : vector<26x96xf32> to vector<13x8xf32>
    %257 = vector.extract_strided_slice %150 {offsets = [13, 64], sizes = [13, 8], strides = [1, 1]} : vector<26x96xf32> to vector<13x8xf32>
    %cst_124 = arith.constant dense<0.000000e+00> : vector<13x13xf32>
    %258 = tpu.matmul %255, %256, %cst_124 {dimension_numbers = #tpu.dot_dimension_numbers<[1], [1], [0], [0], [0, 0, 1, 0], [], []>} : vector<13x8xf32>, vector<13x8xf32>, vector<13x13xf32> -> vector<13x13xf32>
    %cst_125 = arith.constant dense<0xFF800000> : vector<13xf32>
    %259 = vector.multi_reduction <maximumf>, %258, %cst_125 [1] : vector<13x13xf32> to vector<13xf32>
    %260 = vector.shape_cast %259 : vector<13xf32> to vector<13x1xf32>
    %261 = vector.broadcast %260 : vector<13x1xf32> to vector<13x13xf32>
    %262 = arith.subf %258, %261 : vector<13x13xf32>
    %263 = math.exp %262 : vector<13x13xf32>
    %cst_126 = arith.constant dense<0.000000e+00> : vector<13xf32>
    %264 = vector.multi_reduction <add>, %263, %cst_126 [1] : vector<13x13xf32> to vector<13xf32>
    %265 = vector.shape_cast %264 : vector<13xf32> to vector<13x1xf32>
    %266 = tpu.reciprocal %265 {approx = true} : vector<13x1xf32> -> vector<13x1xf32>
    %267 = vector.broadcast %266 : vector<13x1xf32> to vector<13x13xf32>
    %268 = arith.mulf %263, %267 : vector<13x13xf32>
    %cst_127 = arith.constant dense<0.000000e+00> : vector<13x8xf32>
    %269 = tpu.matmul %268, %257, %cst_127 {dimension_numbers = #tpu.dot_dimension_numbers<[1], [0], [0], [1], [0, 0, 1, 1], [], []>} : vector<13x13xf32>, vector<13x8xf32>, vector<13x8xf32> -> vector<13x8xf32>
    %c13_128 = arith.constant 13 : index
    %c16_129 = arith.constant 16 : index
    %270 = vector.load %arg15[%c13_128, %c16_129] : memref<26x32xf32, #tpu.memory_space<vmem>>, vector<13x8xf32>
    tpu.vector_store %arg15[%c13_128, %c16_129], %269 {strides = array<i32>} : memref<26x32xf32, #tpu.memory_space<vmem>>, vector<13x8xf32>,
    %271 = vector.extract_strided_slice %150 {offsets = [13, 72], sizes = [13, 8], strides = [1, 1]} : vector<26x96xf32> to vector<13x8xf32>
    %272 = vector.extract_strided_slice %150 {offsets = [13, 80], sizes = [13, 8], strides = [1, 1]} : vector<26x96xf32> to vector<13x8xf32>
    %273 = vector.extract_strided_slice %150 {offsets = [13, 88], sizes = [13, 8], strides = [1, 1]} : vector<26x96xf32> to vector<13x8xf32>
    %cst_130 = arith.constant dense<0.000000e+00> : vector<13x13xf32>
    %274 = tpu.matmul %271, %272, %cst_130 {dimension_numbers = #tpu.dot_dimension_numbers<[1], [1], [0], [0], [0, 0, 1, 0], [], []>} : vector<13x8xf32>, vector<13x8xf32>, vector<13x13xf32> -> vector<13x13xf32>
    %cst_131 = arith.constant dense<0xFF800000> : vector<13xf32>
    %275 = vector.multi_reduction <maximumf>, %274, %cst_131 [1] : vector<13x13xf32> to vector<13xf32>
    %276 = vector.shape_cast %275 : vector<13xf32> to vector<13x1xf32>
    %277 = vector.broadcast %276 : vector<13x1xf32> to vector<13x13xf32>
    %278 = arith.subf %274, %277 : vector<13x13xf32>
    %279 = math.exp %278 : vector<13x13xf32>
    %cst_132 = arith.constant dense<0.000000e+00> : vector<13xf32>
    %280 = vector.multi_reduction <add>, %279, %cst_132 [1] : vector<13x13xf32> to vector<13xf32>
    %281 = vector.shape_cast %280 : vector<13xf32> to vector<13x1xf32>
    %282 = tpu.reciprocal %281 {approx = true} : vector<13x1xf32> -> vector<13x1xf32>
    %283 = vector.broadcast %282 : vector<13x1xf32> to vector<13x13xf32>
    %284 = arith.mulf %279, %283 : vector<13x13xf32>
    %cst_133 = arith.constant dense<0.000000e+00> : vector<13x8xf32>
    %285 = tpu.matmul %284, %273, %cst_133 {dimension_numbers = #tpu.dot_dimension_numbers<[1], [0], [0], [1], [0, 0, 1, 1], [], []>} : vector<13x13xf32>, vector<13x8xf32>, vector<13x8xf32> -> vector<13x8xf32>
    %c13_134 = arith.constant 13 : index
    %c24_135 = arith.constant 24 : index
    %286 = vector.load %arg15[%c13_134, %c24_135] : memref<26x32xf32, #tpu.memory_space<vmem>>, vector<13x8xf32>
    tpu.vector_store %arg15[%c13_134, %c24_135], %285 {strides = array<i32>} : memref<26x32xf32, #tpu.memory_space<vmem>>, vector<13x8xf32>,
    %287 = vector.shape_cast %236 : vector<13x13xf32> to vector<1x13x13xf32>
    %288 = vector.shape_cast %252 : vector<13x13xf32> to vector<1x13x13xf32>
    %289 = vector.shape_cast %268 : vector<13x13xf32> to vector<1x13x13xf32>
    %290 = vector.shape_cast %284 : vector<13x13xf32> to vector<1x13x13xf32>
    %291 = tpu.concatenate %287, %288, %289, %290 in 0 : vector<1x13x13xf32>, vector<1x13x13xf32>, vector<1x13x13xf32>, vector<1x13x13xf32> -> vector<4x13x13xf32>
    %c1_136 = arith.constant 1 : index
    %c0_137 = arith.constant 0 : index
    %c0_138 = arith.constant 0 : index
    %c0_139 = arith.constant 0 : index
    %292 = vector.load %arg13[%c1_136, %c0_137, %c0_138, %c0_139] : memref<2x4x13x13xf32, #tpu.memory_space<vmem>>, vector<1x4x13x13xf32>
    %293 = vector.shape_cast %292 : vector<1x4x13x13xf32> to vector<4x13x13xf32>
    %294 = vector.shape_cast %291 : vector<4x13x13xf32> to vector<1x4x13x13xf32>
    tpu.vector_store %arg13[%c1_136, %c0_137, %c0_138, %c0_139], %294 {strides = array<i32>} : memref<2x4x13x13xf32, #tpu.memory_space<vmem>>, vector<1x4x13x13xf32>,
    %c0_140 = arith.constant 0 : index
    %c0_141 = arith.constant 0 : index
    %295 = vector.load %arg15[%c0_140, %c0_141] : memref<26x32xf32, #tpu.memory_space<vmem>>, vector<26x32xf32>
    %c0_142 = arith.constant 0 : index
    %c0_143 = arith.constant 0 : index
    %296 = vector.load %arg10[%c0_142, %c0_143] : memref<32x32xf32, #tpu.memory_space<vmem>>, vector<32x32xf32>
    %cst_144 = arith.constant dense<0.000000e+00> : vector<26x32xf32>
    %297 = tpu.matmul %295, %296, %cst_144 {dimension_numbers = #tpu.dot_dimension_numbers<[1], [0], [0], [1], [0, 0, 1, 1], [], []>} : vector<26x32xf32>, vector<32x32xf32>, vector<26x32xf32> -> vector<26x32xf32>
    %c0_145 = arith.constant 0 : index
    %c0_146 = arith.constant 0 : index
    %298 = vector.load %arg11[%c0_145, %c0_146] : memref<1x32xf32, #tpu.memory_space<vmem>>, vector<1x32xf32>
    %299 = vector.broadcast %298 : vector<1x32xf32> to vector<26x32xf32>
    %300 = arith.addf %297, %299 : vector<26x32xf32>
    %301 = vector.extract_strided_slice %300 {offsets = [0, 0], sizes = [13, 32], strides = [1, 1]} : vector<26x32xf32> to vector<13x32xf32>
    %302 = vector.extract_strided_slice %301 {offsets = [0, 0], sizes = [1, 32], strides = [1, 1]} : vector<13x32xf32> to vector<1x32xf32>
    %303 = vector.extract_strided_slice %301 {offsets = [1, 0], sizes = [8, 32], strides = [1, 1]} : vector<13x32xf32> to vector<8x32xf32>
    %304 = vector.extract_strided_slice %301 {offsets = [9, 0], sizes = [4, 32], strides = [1, 1]} : vector<13x32xf32> to vector<4x32xf32>
    %cst_147 = arith.constant dense<0.000000e+00> : vector<32xf32>
    %305 = vector.multi_reduction <add>, %304, %cst_147 [0] : vector<4x32xf32> to vector<32xf32>
    %306 = vector.shape_cast %305 : vector<32xf32> to vector<1x32xf32>
    %cst_148 = arith.constant 4.000000e+00 : f32
    %307 = vector.broadcast %cst_148 : f32 to vector<1x32xf32>
    %308 = arith.divf %306, %307 : vector<1x32xf32>
    %309 = arith.addf %302, %308 : vector<1x32xf32>
    %cst_149 = arith.constant dense<0.000000e+00> : vector<32xf32>
    %310 = vector.multi_reduction <add>, %303, %cst_149 [0] : vector<8x32xf32> to vector<32xf32>
    %311 = vector.shape_cast %310 : vector<32xf32> to vector<1x32xf32>
    %cst_150 = arith.constant 8.000000e+00 : f32
    %312 = vector.broadcast %cst_150 : f32 to vector<1x32xf32>
    %313 = arith.divf %311, %312 : vector<1x32xf32>
    %314 = arith.addf %309, %313 : vector<1x32xf32>
    %c0_151 = arith.constant 0 : index
    %c0_152 = arith.constant 0 : index
    %c0_153 = arith.constant 0 : index
    %315 = vector.load %arg12[%c0_151, %c0_152, %c0_153] : memref<2x9x32xf32, #tpu.memory_space<vmem>>, vector<1x1x32xf32>
    %316 = vector.shape_cast %315 : vector<1x1x32xf32> to vector<1x32xf32>
    %317 = vector.shape_cast %314 : vector<1x32xf32> to vector<1x1x32xf32>
    tpu.vector_store %arg12[%c0_151, %c0_152, %c0_153], %317 {strides = array<i32>} : memref<2x9x32xf32, #tpu.memory_space<vmem>>, vector<1x1x32xf32>,
    %c0_154 = arith.constant 0 : index
    %c1_155 = arith.constant 1 : index
    %c0_156 = arith.constant 0 : index
    %318 = vector.load %arg12[%c0_154, %c1_155, %c0_156] : memref<2x9x32xf32, #tpu.memory_space<vmem>>, vector<1x8x32xf32>
    %319 = vector.shape_cast %318 : vector<1x8x32xf32> to vector<8x32xf32>
    %320 = vector.shape_cast %303 : vector<8x32xf32> to vector<1x8x32xf32>
    tpu.vector_store %arg12[%c0_154, %c1_155, %c0_156], %320 {strides = array<i32>} : memref<2x9x32xf32, #tpu.memory_space<vmem>>, vector<1x8x32xf32>,
    %321 = vector.extract_strided_slice %300 {offsets = [13, 0], sizes = [13, 32], strides = [1, 1]} : vector<26x32xf32> to vector<13x32xf32>
    %322 = vector.extract_strided_slice %321 {offsets = [0, 0], sizes = [1, 32], strides = [1, 1]} : vector<13x32xf32> to vector<1x32xf32>
    %323 = vector.extract_strided_slice %321 {offsets = [1, 0], sizes = [8, 32], strides = [1, 1]} : vector<13x32xf32> to vector<8x32xf32>
    %324 = vector.extract_strided_slice %321 {offsets = [9, 0], sizes = [4, 32], strides = [1, 1]} : vector<13x32xf32> to vector<4x32xf32>
    %cst_157 = arith.constant dense<0.000000e+00> : vector<32xf32>
    %325 = vector.multi_reduction <add>, %324, %cst_157 [0] : vector<4x32xf32> to vector<32xf32>
    %326 = vector.shape_cast %325 : vector<32xf32> to vector<1x32xf32>
    %cst_158 = arith.constant 4.000000e+00 : f32
    %327 = vector.broadcast %cst_158 : f32 to vector<1x32xf32>
    %328 = arith.divf %326, %327 : vector<1x32xf32>
    %329 = arith.addf %322, %328 : vector<1x32xf32>
    %cst_159 = arith.constant dense<0.000000e+00> : vector<32xf32>
    %330 = vector.multi_reduction <add>, %323, %cst_159 [0] : vector<8x32xf32> to vector<32xf32>
    %331 = vector.shape_cast %330 : vector<32xf32> to vector<1x32xf32>
    %cst_160 = arith.constant 8.000000e+00 : f32
    %332 = vector.broadcast %cst_160 : f32 to vector<1x32xf32>
    %333 = arith.divf %331, %332 : vector<1x32xf32>
    %334 = arith.addf %329, %333 : vector<1x32xf32>
    %c1_161 = arith.constant 1 : index
    %c0_162 = arith.constant 0 : index
    %c0_163 = arith.constant 0 : index
    %335 = vector.load %arg12[%c1_161, %c0_162, %c0_163] : memref<2x9x32xf32, #tpu.memory_space<vmem>>, vector<1x1x32xf32>
    %336 = vector.shape_cast %335 : vector<1x1x32xf32> to vector<1x32xf32>
    %337 = vector.shape_cast %334 : vector<1x32xf32> to vector<1x1x32xf32>
    tpu.vector_store %arg12[%c1_161, %c0_162, %c0_163], %337 {strides = array<i32>} : memref<2x9x32xf32, #tpu.memory_space<vmem>>, vector<1x1x32xf32>,
    %c1_164 = arith.constant 1 : index
    %c1_165 = arith.constant 1 : index
    %c0_166 = arith.constant 0 : index
    %338 = vector.load %arg12[%c1_164, %c1_165, %c0_166] : memref<2x9x32xf32, #tpu.memory_space<vmem>>, vector<1x8x32xf32>
    %339 = vector.shape_cast %338 : vector<1x8x32xf32> to vector<8x32xf32>
    %340 = vector.shape_cast %323 : vector<8x32xf32> to vector<1x8x32xf32>
    tpu.vector_store %arg12[%c1_164, %c1_165, %c0_166], %340 {strides = array<i32>} : memref<2x9x32xf32, #tpu.memory_space<vmem>>, vector<1x8x32xf32>,
    return
  }
  func.func @transform_0(%arg0: i32) -> (i32, i32, i32) {
    %c0_i32 = arith.constant 0 : i32
    %c0_i32_0 = arith.constant 0 : i32
    %c0_i32_1 = arith.constant 0 : i32
    return %arg0, %c0_i32, %c0_i32_0 : i32, i32, i32
  }
  func.func @transform_1(%arg0: i32) -> (i32, i32) {
    %c0_i32 = arith.constant 0 : i32
    %c0_i32_0 = arith.constant 0 : i32
    %c0_i32_1 = arith.constant 0 : i32
    return %c0_i32, %c0_i32_0 : i32, i32
  }
  func.func @transform_2(%arg0: i32) -> (i32, i32) {
    %c0_i32 = arith.constant 0 : i32
    %c0_i32_0 = arith.constant 0 : i32
    %c0_i32_1 = arith.constant 0 : i32
    return %c0_i32, %c0_i32_0 : i32, i32
  }
  func.func @transform_3(%arg0: i32) -> (i32, i32) {
    %c0_i32 = arith.constant 0 : i32
    %c0_i32_0 = arith.constant 0 : i32
    %c0_i32_1 = arith.constant 0 : i32
    return %c0_i32, %c0_i32_0 : i32, i32
  }
  func.func @transform_4(%arg0: i32) -> (i32, i32) {
    %c0_i32 = arith.constant 0 : i32
    %c0_i32_0 = arith.constant 0 : i32
    %c0_i32_1 = arith.constant 0 : i32
    return %c0_i32, %c0_i32_0 : i32, i32
  }
  func.func @transform_5(%arg0: i32) -> (i32, i32) {
    %c0_i32 = arith.constant 0 : i32
    %c0_i32_0 = arith.constant 0 : i32
    %c0_i32_1 = arith.constant 0 : i32
    return %c0_i32, %c0_i32_0 : i32, i32
  }
  func.func @transform_6(%arg0: i32) -> (i32, i32) {
    %c0_i32 = arith.constant 0 : i32
    %c0_i32_0 = arith.constant 0 : i32
    %c0_i32_1 = arith.constant 0 : i32
    return %c0_i32, %c0_i32_0 : i32, i32
  }
  func.func @transform_7(%arg0: i32) -> (i32, i32) {
    %c0_i32 = arith.constant 0 : i32
    %c0_i32_0 = arith.constant 0 : i32
    %c0_i32_1 = arith.constant 0 : i32
    return %c0_i32, %c0_i32_0 : i32, i32
  }
  func.func @transform_8(%arg0: i32) -> (i32, i32) {
    %c0_i32 = arith.constant 0 : i32
    %c0_i32_0 = arith.constant 0 : i32
    %c0_i32_1 = arith.constant 0 : i32
    return %c0_i32, %c0_i32_0 : i32, i32
  }
  func.func @transform_9(%arg0: i32) -> (i32, i32) {
    %c0_i32 = arith.constant 0 : i32
    %c0_i32_0 = arith.constant 0 : i32
    %c0_i32_1 = arith.constant 0 : i32
    return %c0_i32, %c0_i32_0 : i32, i32
  }
  func.func @transform_10(%arg0: i32) -> (i32, i32) {
    %c0_i32 = arith.constant 0 : i32
    %c0_i32_0 = arith.constant 0 : i32
    %c0_i32_1 = arith.constant 0 : i32
    return %c0_i32, %c0_i32_0 : i32, i32
  }
  func.func @transform_11(%arg0: i32) -> (i32, i32, i32) {
    %c0_i32 = arith.constant 0 : i32
    %c0_i32_0 = arith.constant 0 : i32
    %c0_i32_1 = arith.constant 0 : i32
    return %arg0, %c0_i32, %c0_i32_0 : i32, i32, i32
  }
  func.func @transform_12(%arg0: i32) -> (i32, i32, i32, i32) {
    %c0_i32 = arith.constant 0 : i32
    %c0_i32_0 = arith.constant 0 : i32
    %c0_i32_1 = arith.constant 0 : i32
    %c0_i32_2 = arith.constant 0 : i32
    return %arg0, %c0_i32, %c0_i32_0, %c0_i32_1 : i32, i32, i32, i32
  }
}

</mosaic_0001>

<llo_original>
// kernel: tpu_custom_call.1
$region0: #{tpu_custom_call.1}
  #allocation0 [shape = 'u32[]', space=smem, size = 0x4, offset = 0x4, fixed_abs, tag = 'smem constant byte address 0x4 - core index']
  #allocation1 [shape = 'u32[144,128]{1,0:T(1,128)}', space=vmem, size = 0x12000, scoped, tag = 'internal scratch']
  #allocation2 [shape = 'f32[26,32]{1,0:T(8,128)}', space=vmem, size = 0x4000, scoped, tag = 'scratch operand']
  #allocation3 [shape = 'f32[26,32]{1,0:T(8,128)}', space=vmem, size = 0x4000, scoped, tag = 'scratch operand']
  %s0 = inlined_call_operand.vmem [shape: f32[2,9,32], index: 0, kind: input, shape index: {}]
  %s1 = inlined_call_operand.hbm [shape: f32[4,32], index: 1, kind: input, shape index: {}]
  %s2 = inlined_call_operand.vmem [shape: f32[32,32], index: 2, kind: input, shape index: {}]
  %s3 = inlined_call_operand.hbm [shape: f32[1,32], index: 3, kind: input, shape index: {}]
  %s4 = inlined_call_operand.hbm [shape: f32[32,32], index: 4, kind: input, shape index: {}]
  %s5 = inlined_call_operand.hbm [shape: f32[1,32], index: 5, kind: input, shape index: {}]
  %s6 = inlined_call_operand.hbm [shape: f32[1,32], index: 6, kind: input, shape index: {}]
  %s7 = inlined_call_operand.hbm [shape: f32[4,32], index: 7, kind: input, shape index: {}]
  %s8 = inlined_call_operand.vmem [shape: f32[32,96], index: 8, kind: input, shape index: {}]
  %s9 = inlined_call_operand.hbm [shape: f32[32,32], index: 9, kind: input, shape index: {}]
  %s10 = inlined_call_operand.vmem [shape: f32[1,32], index: 10, kind: input, shape index: {}]
  %s11 = inlined_call_operand.vmem [shape: f32[2,9,32], index: 11, kind: output, shape index: {0}]
  %s12 = inlined_call_operand.vmem [shape: f32[2,4,13,13], index: 12, kind: output, shape index: {1}]
  %13 = xla_tuple %s11, %s12
  %s14 = sld [smem:[#allocation0]]
  $region90: #{tpu_custom_call.1} parent=0
    _
  %s16 = ssub.s32 1, %s14
  %s17 = scalar_select 0, %s16, %s14
  $region1: #{tpu_custom_call.1} parent=0
    #allocation4 [shape = 'u8[2048]{0}', space=vmem, size = 0x800, scoped, tag = 'input window, operand 1, single buffered']
    #allocation5 [shape = 's32[1]{0}', space=sflag, size = 0x4, scoped, tag = 'scoped memory for tpu_custom_call.1']
    #allocation6 [shape = 'u8[512]{0}', space=vmem, size = 0x400, scoped, tag = 'input window, operand 3, single buffered']
    #allocation7 [shape = 's32[1]{0}', space=sflag, size = 0x4, scoped, tag = 'scoped memory for tpu_custom_call.1']
    #allocation8 [shape = 'u8[16384]{0}', space=vmem, size = 0x4000, scoped, tag = 'input window, operand 4, single buffered']
    #allocation9 [shape = 'u8[512]{0}', space=vmem, size = 0x400, scoped, tag = 'input window, operand 5, single buffered']
    #allocation10 [shape = 's32[1]{0}', space=sflag, size = 0x4, scoped, tag = 'scoped memory for tpu_custom_call.1']
    #allocation11 [shape = 'u8[512]{0}', space=vmem, size = 0x400, scoped, tag = 'input window, operand 6, single buffered']
    #allocation12 [shape = 'u8[2048]{0}', space=vmem, size = 0x800, scoped, tag = 'input window, operand 7, single buffered']
    #allocation13 [shape = 's32[1]{0}', space=sflag, size = 0x4, scoped, tag = 'scoped memory for tpu_custom_call.1']
    #allocation14 [shape = 'u8[16384]{0}', space=vmem, size = 0x4000, scoped, tag = 'input window, operand 9, single buffered']
    %18 = vsyncpa [#allocation5], 0
    %19 = vsyncpa [#allocation7], 0
    %20 = vsyncpa [#allocation10], 0
    %21 = vsyncpa [#allocation13], 0
    // Predicated region
    $region2: #{tpu_custom_call.1} parent=1 // pred_check
      _
    $region3: #{tpu_custom_call.1} parent=1 // pred_check_branch
      %23 = sbr.rel (0) target = $region5
    $region4: #{tpu_custom_call.1} parent=1 // pred_region
      _
    $region5: #{tpu_custom_call.1} parent=1 // pred_fallthru
      _
    // Predicated region
    $region6: #{tpu_custom_call.1} parent=1 // pred_check
      _
    $region7: #{tpu_custom_call.1} parent=1 // pred_check_branch
      %25 = sbr.rel (0) target = $region9
    $region8: #{tpu_custom_call.1} parent=1 // pred_region
      %s27 = ssub.s32 64, 64
      %28 = vsyncadd [#allocation5], %s27
      %s30 = sshll.u32 [#allocation4], 4
      %s31 = int_to_ptr.vmem [resolvable:$true] %s30
      %33 = dma.hbm_to_vmem [thread:$0]  %s1, 64, %s31, [#allocation5]
    $region9: #{tpu_custom_call.1} parent=1 // pred_fallthru
      _
    // Predicated region
    $region10: #{tpu_custom_call.1} parent=1 // pred_check
      _
    $region11: #{tpu_custom_call.1} parent=1 // pred_check_branch
      %35 = sbr.rel (0) target = $region13
    $region12: #{tpu_custom_call.1} parent=1 // pred_region
      _
    $region13: #{tpu_custom_call.1} parent=1 // pred_fallthru
      _
    // Predicated region
    $region14: #{tpu_custom_call.1} parent=1 // pred_check
      _
    $region15: #{tpu_custom_call.1} parent=1 // pred_check_branch
      %37 = sbr.rel (0) target = $region17
    $region16: #{tpu_custom_call.1} parent=1 // pred_region
      %s39 = ssub.s32 16, 16
      %40 = vsyncadd [#allocation7], %s39
      %s42 = sshll.u32 [#allocation6], 4
      %s43 = int_to_ptr.vmem [resolvable:$true] %s42
      %45 = dma.hbm_to_vmem [thread:$0]  %s3, 16, %s43, [#allocation7]
    $region17: #{tpu_custom_call.1} parent=1 // pred_fallthru
      _
    // Predicated region
    $region18: #{tpu_custom_call.1} parent=1 // pred_check
      _
    $region19: #{tpu_custom_call.1} parent=1 // pred_check_branch
      %47 = sbr.rel (0) target = $region21
    $region20: #{tpu_custom_call.1} parent=1 // pred_region
      %s49 = ssub.s32 512, 512
      %50 = vsyncadd [#allocation7], %s49
      %s51 = sshll.u32 [#allocation8], 4
      %s52 = int_to_ptr.vmem [resolvable:$true] %s51
      %57 = dma.hbm_to_vmem [thread:$0]  %s4, 512, %s52, [#allocation7], 128, 128, 8
    $region21: #{tpu_custom_call.1} parent=1 // pred_fallthru
      _
    // Predicated region
    $region22: #{tpu_custom_call.1} parent=1 // pred_check
      _
    $region23: #{tpu_custom_call.1} parent=1 // pred_check_branch
      %59 = sbr.rel (0) target = $region25
    $region24: #{tpu_custom_call.1} parent=1 // pred_region
      %s61 = ssub.s32 16, 16
      %62 = vsyncadd [#allocation10], %s61
      %s64 = sshll.u32 [#allocation9], 4
      %s65 = int_to_ptr.vmem [resolvable:$true] %s64
      %67 = dma.hbm_to_vmem [thread:$0]  %s5, 16, %s65, [#allocation10]
    $region25: #{tpu_custom_call.1} parent=1 // pred_fallthru
      _
    // Predicated region
    $region26: #{tpu_custom_call.1} parent=1 // pred_check
      _
    $region27: #{tpu_custom_call.1} parent=1 // pred_check_branch
      %69 = sbr.rel (0) target = $region29
    $region28: #{tpu_custom_call.1} parent=1 // pred_region
      %s71 = ssub.s32 16, 16
      %72 = vsyncadd [#allocation10], %s71
      %s74 = sshll.u32 [#allocation11], 4
      %s75 = int_to_ptr.vmem [resolvable:$true] %s74
      %77 = dma.hbm_to_vmem [thread:$0]  %s6, 16, %s75, [#allocation10]
    $region29: #{tpu_custom_call.1} parent=1 // pred_fallthru
      _
    // Predicated region
    $region30: #{tpu_custom_call.1} parent=1 // pred_check
      _
    $region31: #{tpu_custom_call.1} parent=1 // pred_check_branch
      %79 = sbr.rel (0) target = $region33
    $region32: #{tpu_custom_call.1} parent=1 // pred_region
      %s81 = ssub.s32 64, 64
      %82 = vsyncadd [#allocation13], %s81
      %s84 = sshll.u32 [#allocation12], 4
      %s85 = int_to_ptr.vmem [resolvable:$true] %s84
      %87 = dma.hbm_to_vmem [thread:$0]  %s7, 64, %s85, [#allocation13]
    $region33: #{tpu_custom_call.1} parent=1 // pred_fallthru
      _
    // Predicated region
    $region34: #{tpu_custom_call.1} parent=1 // pred_check
      _
    $region35: #{tpu_custom_call.1} parent=1 // pred_check_branch
      %89 = sbr.rel (0) target = $region37
    $region36: #{tpu_custom_call.1} parent=1 // pred_region
      _
    $region37: #{tpu_custom_call.1} parent=1 // pred_fallthru
      _
    // Predicated region
    $region38: #{tpu_custom_call.1} parent=1 // pred_check
      _
    $region39: #{tpu_custom_call.1} parent=1 // pred_check_branch
      %91 = sbr.rel (0) target = $region41
    $region40: #{tpu_custom_call.1} parent=1 // pred_region
      %s93 = ssub.s32 512, 512
      %94 = vsyncadd [#allocation13], %s93
      %s95 = sshll.u32 [#allocation14], 4
      %s96 = int_to_ptr.vmem [resolvable:$true] %s95
      %101 = dma.hbm_to_vmem [thread:$0]  %s9, 512, %s96, [#allocation13], 128, 128, 8
    $region41: #{tpu_custom_call.1} parent=1 // pred_fallthru
      _
    // Predicated region
    $region42: #{tpu_custom_call.1} parent=1 // pred_check
      _
    $region43: #{tpu_custom_call.1} parent=1 // pred_check_branch
      %103 = sbr.rel (0) target = $region45
    $region44: #{tpu_custom_call.1} parent=1 // pred_region
      _
    $region45: #{tpu_custom_call.1} parent=1 // pred_fallthru
      _
    // Predicated region
    $region46: #{tpu_custom_call.1} parent=1 // pred_check
      _
    $region47: #{tpu_custom_call.1} parent=1 // pred_check_branch
      %105 = sbr.rel (0) target = $region49
    $region48: #{tpu_custom_call.1} parent=1 // pred_region
      %106 = dma.done [#allocation5], 64
    $region49: #{tpu_custom_call.1} parent=1 // pred_fallthru
      _
    // Predicated region
    $region50: #{tpu_custom_call.1} parent=1 // pred_check
      _
    $region51: #{tpu_custom_call.1} parent=1 // pred_check_branch
      %108 = sbr.rel (0) target = $region53
    $region52: #{tpu_custom_call.1} parent=1 // pred_region
      %109 = dma.done [#allocation7], 16
    $region53: #{tpu_custom_call.1} parent=1 // pred_fallthru
      _
    // Predicated region
    $region54: #{tpu_custom_call.1} parent=1 // pred_check
      _
    $region55: #{tpu_custom_call.1} parent=1 // pred_check_branch
      %111 = sbr.rel (0) target = $region57
    $region56: #{tpu_custom_call.1} parent=1 // pred_region
      %112 = dma.done [#allocation7], 512
    $region57: #{tpu_custom_call.1} parent=1 // pred_fallthru
      _
    // Predicated region
    $region58: #{tpu_custom_call.1} parent=1 // pred_check
      _
    $region59: #{tpu_custom_call.1} parent=1 // pred_check_branch
      %114 = sbr.rel (0) target = $region61
    $region60: #{tpu_custom_call.1} parent=1 // pred_region
      %115 = dma.done [#allocation10], 16
    $region61: #{tpu_custom_call.1} parent=1 // pred_fallthru
      _
    // Predicated region
    $region62: #{tpu_custom_call.1} parent=1 // pred_check
      _
    $region63: #{tpu_custom_call.1} parent=1 // pred_check_branch
      %117 = sbr.rel (0) target = $region65
    $region64: #{tpu_custom_call.1} parent=1 // pred_region
      %118 = dma.done [#allocation10], 16
    $region65: #{tpu_custom_call.1} parent=1 // pred_fallthru
      _
    // Predicated region
    $region66: #{tpu_custom_call.1} parent=1 // pred_check
      _
    $region67: #{tpu_custom_call.1} parent=1 // pred_check_branch
      %120 = sbr.rel (0) target = $region69
    $region68: #{tpu_custom_call.1} parent=1 // pred_region
      %121 = dma.done [#allocation13], 64
    $region69: #{tpu_custom_call.1} parent=1 // pred_fallthru
      _
    // Predicated region
    $region70: #{tpu_custom_call.1} parent=1 // pred_check
      _
    $region71: #{tpu_custom_call.1} parent=1 // pred_check_branch
      %123 = sbr.rel (0) target = $region73
    $region72: #{tpu_custom_call.1} parent=1 // pred_region
      %124 = dma.done [#allocation13], 512
    $region73: #{tpu_custom_call.1} parent=1 // pred_fallthru
      _
    %v125 = vld [vmem:[%s0] sm:$0xff]
    %v126 = vld [vmem:[%s0 + $0x8] sm:$0x1]
    %vm127 = vcmask 261120
    %128 = vst.msk [vmem:[#allocation2] sm:$0xff] %vm127, %v125
    %vm129 = vcmask 253952
    %130 = vst.msk [vmem:[#allocation2 + $0x8] sm:$0x1] %vm129, %v126
    %v131 = vsel %vm127, %v125, 0.0
    %v132 = vsel %vm129, %v126, 0.0
    %v133 = vadd.f32 %v131, %v132
    %v134 = vrot.slane %v133, 4
    %v135 = vadd.f32 %v133, %v134
    %v136 = vrot.slane %v135, 2
    %v137 = vadd.f32 %v135, %v136
    %v138 = vrot.slane %v137, 1
    %v139 = vadd.f32 %v137, %v138
    %v140 = vrcp.pop 9.0
    %v141 = vmul.f32 %v139, %v140
    %v142 = vld [vmem:[#allocation4] sm:$0xf]
    %v143 = vmul.f32 %v142, %v141
    %v144 = vld [vmem:[%s2] sm:$0xff]
    %v145 = vld [vmem:[%s2 + $0x8] sm:$0xff]
    %v146 = vld [vmem:[%s2 + $0x10] sm:$0xff]
    %v147 = vld [vmem:[%s2 + $0x18] sm:$0xff]
    %v148 = vld [vmem:[#allocation6] sm:$0x1]
    %v150 = vlaneseq
    %v151 = vshrl.u32 %v150, 7
    %v152 = vsub.s32 0, %v151
    %v153 = vrot.slane %v148, %v152
    %v156 = vsel %vm127, %v143, 0
    %158 = vmatprep.subr.mxu0 0.0
    %159 = vmatpush1.msra.mxu0 0.0
    %160 = vmatprep.subr.mxu0 0.0
    %161 = vmatpush1.msra.mxu0 0.0
    %162 = vmatprep.subr.mxu0 0.0
    %163 = vmatpush1.msra.mxu0 0.0
    %164 = vmatprep.subr.mxu0 0.0
    %165 = vmatpush1.msra.mxu0 0.0
    %166 = vmatprep.subr.mxu0 0.0
    %167 = vmatpush1.msra.mxu0 0.0
    %168 = vmatprep.subr.mxu0 0.0
    %169 = vmatpush1.msra.mxu0 0.0
    %170 = vmatprep.subr.mxu0 0.0
    %171 = vmatpush1.msra.mxu0 0.0
    %172 = vmatprep.subr.mxu0 0.0
    %173 = vmatpush1.msra.mxu0 0.0
    %174 = vmatprep.subr.mxu0 0.0
    %175 = vmatpush1.msra.mxu0 0.0
    %176 = vmatprep.subr.mxu0 0.0
    %177 = vmatpush1.msra.mxu0 0.0
    %178 = vmatprep.subr.mxu0 0.0
    %179 = vmatpush1.msra.mxu0 0.0
    %180 = vmatprep.subr.mxu0 0.0
    %181 = vmatpush1.msra.mxu0 0.0
    %182 = vmatprep.subr.mxu0 0.0
    %183 = vmatpush1.msra.mxu0 %v147
    %184 = vmatprep.subr.mxu0 0.0
    %185 = vmatpush1.msra.mxu0 %v146
    %186 = vmatprep.subr.mxu0 0.0
    %187 = vmatpush1.msra.mxu0 %v145
    %188 = vmatprep.subr.mxu0 0.0
    %189 = vmatpush1.msra.mxu0 %v144
    %190 = vmatprep.subr.mxu0 0.0
    %191 = vmatpush2.msra.mxu0 0.0
    %192 = vmatprep.subr.mxu0 0.0
    %193 = vmatpush2.msra.mxu0 0.0
    %194 = vmatprep.subr.mxu0 0.0
    %195 = vmatpush2.msra.mxu0 0.0
    %196 = vmatprep.subr.mxu0 0.0
    %197 = vmatpush2.msra.mxu0 0.0
    %198 = vmatprep.subr.mxu0 0.0
    %199 = vmatpush2.msra.mxu0 0.0
    %200 = vmatprep.subr.mxu0 0.0
    %201 = vmatpush2.msra.mxu0 0.0
    %202 = vmatprep.subr.mxu0 0.0
    %203 = vmatpush2.msra.mxu0 0.0
    %204 = vmatprep.subr.mxu0 0.0
    %205 = vmatpush2.msra.mxu0 0.0
    %206 = vmatprep.subr.mxu0 0.0
    %207 = vmatpush2.msra.mxu0 0.0
    %208 = vmatprep.subr.mxu0 0.0
    %209 = vmatpush2.msra.mxu0 0.0
    %210 = vmatprep.subr.mxu0 0.0
    %211 = vmatpush2.msra.mxu0 0.0
    %212 = vmatprep.subr.mxu0 0.0
    %213 = vmatpush2.msra.mxu0 0.0
    %214 = vmatprep.subr.mxu0 0.0
    %215 = vmatpush2.msra.mxu0 0.0
    %216 = vmatprep.subr.mxu0 0.0
    %217 = vmatpush2.msra.mxu0 0.0
    %218 = vmatprep.subr.mxu0 0.0
    %219 = vmatpush2.msra.mxu0 0.0
    %220 = vmatprep.subr.mxu0 0.0
    %221 = vmatpush2.msra.mxu0 0.0
    %222 = vmatprep.mubr.f32.mxu0 0.0
    %223 = vmatmul.mubr.f32.gmra.mxu0 %v156
    %v224 = vpop.f32.mrf.mxu0
    %v225 = vadd.f32 %v153, %v224
    %v226 = vpop.f32.mrf.mxu0
    %227 = vdwg.mxu0
    %v228 = vld [vmem:[#allocation8] sm:$0xff]
    %v229 = vld [vmem:[#allocation8 + $0x8] sm:$0xff]
    %v230 = vld [vmem:[#allocation8 + $0x10] sm:$0xff]
    %v231 = vld [vmem:[#allocation8 + $0x18] sm:$0xff]
    %v233 = vsel %vm127, %v225, 0
    %235 = vmatprep.subr.mxu0 0.0
    %236 = vmatpush1.msra.mxu0 0.0
    %237 = vmatprep.subr.mxu0 0.0
    %238 = vmatpush1.msra.mxu0 0.0
    %239 = vmatprep.subr.mxu0 0.0
    %240 = vmatpush1.msra.mxu0 0.0
    %241 = vmatprep.subr.mxu0 0.0
    %242 = vmatpush1.msra.mxu0 0.0
    %243 = vmatprep.subr.mxu0 0.0
    %244 = vmatpush1.msra.mxu0 0.0
    %245 = vmatprep.subr.mxu0 0.0
    %246 = vmatpush1.msra.mxu0 0.0
    %247 = vmatprep.subr.mxu0 0.0
    %248 = vmatpush1.msra.mxu0 0.0
    %249 = vmatprep.subr.mxu0 0.0
    %250 = vmatpush1.msra.mxu0 0.0
    %251 = vmatprep.subr.mxu0 0.0
    %252 = vmatpush1.msra.mxu0 0.0
    %253 = vmatprep.subr.mxu0 0.0
    %254 = vmatpush1.msra.mxu0 0.0
    %255 = vmatprep.subr.mxu0 0.0
    %256 = vmatpush1.msra.mxu0 0.0
    %257 = vmatprep.subr.mxu0 0.0
    %258 = vmatpush1.msra.mxu0 0.0
    %259 = vmatprep.subr.mxu0 0.0
    %260 = vmatpush1.msra.mxu0 %v231
    %261 = vmatprep.subr.mxu0 0.0
    %262 = vmatpush1.msra.mxu0 %v230
    %263 = vmatprep.subr.mxu0 0.0
    %264 = vmatpush1.msra.mxu0 %v229
    %265 = vmatprep.subr.mxu0 0.0
    %266 = vmatpush1.msra.mxu0 %v228
    %267 = vmatprep.subr.mxu0 0.0
    %268 = vmatpush2.msra.mxu0 0.0
    %269 = vmatprep.subr.mxu0 0.0
    %270 = vmatpush2.msra.mxu0 0.0
    %271 = vmatprep.subr.mxu0 0.0
    %272 = vmatpush2.msra.mxu0 0.0
    %273 = vmatprep.subr.mxu0 0.0
    %274 = vmatpush2.msra.mxu0 0.0
    %275 = vmatprep.subr.mxu0 0.0
    %276 = vmatpush2.msra.mxu0 0.0
    %277 = vmatprep.subr.mxu0 0.0
    %278 = vmatpush2.msra.mxu0 0.0
    %279 = vmatprep.subr.mxu0 0.0
    %280 = vmatpush2.msra.mxu0 0.0
    %281 = vmatprep.subr.mxu0 0.0
    %282 = vmatpush2.msra.mxu0 0.0
    %283 = vmatprep.subr.mxu0 0.0
    %284 = vmatpush2.msra.mxu0 0.0
    %285 = vmatprep.subr.mxu0 0.0
    %286 = vmatpush2.msra.mxu0 0.0
    %287 = vmatprep.subr.mxu0 0.0
    %288 = vmatpush2.msra.mxu0 0.0
    %289 = vmatprep.subr.mxu0 0.0
    %290 = vmatpush2.msra.mxu0 0.0
    %291 = vmatprep.subr.mxu0 0.0
    %292 = vmatpush2.msra.mxu0 0.0
    %293 = vmatprep.subr.mxu0 0.0
    %294 = vmatpush2.msra.mxu0 0.0
    %295 = vmatprep.subr.mxu0 0.0
    %296 = vmatpush2.msra.mxu0 0.0
    %297 = vmatprep.subr.mxu0 0.0
    %298 = vmatpush2.msra.mxu0 0.0
    %299 = vmatprep.mubr.f32.mxu0 0.0
    %300 = vmatmul.mubr.f32.gmra.mxu0 %v233
    %v301 = vpop.f32.mrf.mxu0
    %v302 = vadd.f32 0.0, %v301
    %v303 = vpop.f32.mrf.mxu0
    %304 = vdwg.mxu0
    %v305 = vsub.f32 %v225, %v302
    %v306 = vmul.f32 %v305, %v305
    %v308 = vsel %vm127, %v306, 0
    %310 = vmatprep.subr.mxu0 0.0
    %311 = vmatpush1.msra.mxu0 0.0
    %312 = vmatprep.subr.mxu0 0.0
    %313 = vmatpush1.msra.mxu0 0.0
    %314 = vmatprep.subr.mxu0 0.0
    %315 = vmatpush1.msra.mxu0 0.0
    %316 = vmatprep.subr.mxu0 0.0
    %317 = vmatpush1.msra.mxu0 0.0
    %318 = vmatprep.subr.mxu0 0.0
    %319 = vmatpush1.msra.mxu0 0.0
    %320 = vmatprep.subr.mxu0 0.0
    %321 = vmatpush1.msra.mxu0 0.0
    %322 = vmatprep.subr.mxu0 0.0
    %323 = vmatpush1.msra.mxu0 0.0
    %324 = vmatprep.subr.mxu0 0.0
    %325 = vmatpush1.msra.mxu0 0.0
    %326 = vmatprep.subr.mxu0 0.0
    %327 = vmatpush1.msra.mxu0 0.0
    %328 = vmatprep.subr.mxu0 0.0
    %329 = vmatpush1.msra.mxu0 0.0
    %330 = vmatprep.subr.mxu0 0.0
    %331 = vmatpush1.msra.mxu0 0.0
    %332 = vmatprep.subr.mxu0 0.0
    %333 = vmatpush1.msra.mxu0 0.0
    %334 = vmatprep.subr.mxu0 0.0
    %335 = vmatpush1.msra.mxu0 %v231
    %336 = vmatprep.subr.mxu0 0.0
    %337 = vmatpush1.msra.mxu0 %v230
    %338 = vmatprep.subr.mxu0 0.0
    %339 = vmatpush1.msra.mxu0 %v229
    %340 = vmatprep.subr.mxu0 0.0
    %341 = vmatpush1.msra.mxu0 %v228
    %342 = vmatprep.subr.mxu0 0.0
    %343 = vmatpush2.msra.mxu0 0.0
    %344 = vmatprep.subr.mxu0 0.0
    %345 = vmatpush2.msra.mxu0 0.0
    %346 = vmatprep.subr.mxu0 0.0
    %347 = vmatpush2.msra.mxu0 0.0
    %348 = vmatprep.subr.mxu0 0.0
    %349 = vmatpush2.msra.mxu0 0.0
    %350 = vmatprep.subr.mxu0 0.0
    %351 = vmatpush2.msra.mxu0 0.0
    %352 = vmatprep.subr.mxu0 0.0
    %353 = vmatpush2.msra.mxu0 0.0
    %354 = vmatprep.subr.mxu0 0.0
    %355 = vmatpush2.msra.mxu0 0.0
    %356 = vmatprep.subr.mxu0 0.0
    %357 = vmatpush2.msra.mxu0 0.0
    %358 = vmatprep.subr.mxu0 0.0
    %359 = vmatpush2.msra.mxu0 0.0
    %360 = vmatprep.subr.mxu0 0.0
    %361 = vmatpush2.msra.mxu0 0.0
    %362 = vmatprep.subr.mxu0 0.0
    %363 = vmatpush2.msra.mxu0 0.0
    %364 = vmatprep.subr.mxu0 0.0
    %365 = vmatpush2.msra.mxu0 0.0
    %366 = vmatprep.subr.mxu0 0.0
    %367 = vmatpush2.msra.mxu0 0.0
    %368 = vmatprep.subr.mxu0 0.0
    %369 = vmatpush2.msra.mxu0 0.0
    %370 = vmatprep.subr.mxu0 0.0
    %371 = vmatpush2.msra.mxu0 0.0
    %372 = vmatprep.subr.mxu0 0.0
    %373 = vmatpush2.msra.mxu0 0.0
    %374 = vmatprep.mubr.f32.mxu0 0.0
    %375 = vmatmul.mubr.f32.gmra.mxu0 %v308
    %v376 = vpop.f32.mrf.mxu0
    %v377 = vadd.f32 1e-05, %v376
    %v378 = vpop.f32.mrf.mxu0
    %379 = vdwg.mxu0
    %v380 = vrsqrt.pop %v377
    %v381 = vmul.f32 %v305, %v380
    %v382 = vld [vmem:[#allocation9] sm:$0x1]
    %v384 = vlaneseq
    %v385 = vshrl.u32 %v384, 7
    %v386 = vsub.s32 0, %v385
    %v387 = vrot.slane %v382, %v386
    %v389 = vmul.f32 %v381, %v387
    %v390 = vld [vmem:[#allocation11] sm:$0x1]
    %v392 = vlaneseq
    %v393 = vshrl.u32 %v392, 7
    %v394 = vsub.s32 0, %v393
    %v395 = vrot.slane %v390, %v394
    %v397 = vadd.f32 %v389, %v395
    %v398 = vmul.f32 %v397, 0.5
    %v399 = vmul.f32 %v397, 0.70710677
    %v400 = vand.u32 2147483647, %v399
    %v401 = vmul.f32 %v400, 0.3275911
    %v402 = vadd.f32 %v401, 1.0
    %v403 = vrcp.pop %v402
    %v404 = vmul.f32 1.0, %v403
    %v405 = vmul.f32 %v404, 1.0614054
    %v406 = vadd.f32 %v405, -1.4531521
    %v407 = vmul.f32 %v406, %v404
    %v408 = vadd.f32 %v407, 1.4214138
    %v409 = vmul.f32 %v408, %v404
    %v410 = vadd.f32 %v409, -0.28449672
    %v411 = vmul.f32 %v410, %v404
    %v412 = vadd.f32 %v411, 0.2548296
    %v413 = vmul.f32 %v412, %v404
    %v414 = vsub.f32 0.0, %v400
    %v415 = vmul.f32 %v414, %v400
    %v416 = vmul.f32 %v415, 1.442695
    %v417 = vpow.pop %v416
    %v418 = vmul.f32 %v413, %v417
    %v419 = vsub.f32 1.0, %v418
    %vm420 = vcmp.ge.f32.partialorder %v399, 0.0
    %v421 = vsub.f32 0.0, %v419
    %v422 = vsel %vm420, %v419, %v421
    %v423 = vadd.f32 %v422, 1.0
    %v424 = vmul.f32 %v398, %v423
    %v425 = vld [vmem:[#allocation12] sm:$0xf]
    %v426 = vadd.f32 %v424, %v425
    %vm427 = vcmask 257024
    %428 = vst.msk [vmem:[#allocation2 + $0x9] sm:$0xf] %vm427, %v426
    %s429 = scalar_lea.vmem %s0, 16
    %v430 = vld [vmem:[%s429] sm:$0xff]
    %v431 = vld [vmem:[%s429 + $0x8] sm:$0x1]
    %432 = vst.msk [vmem:[#allocation2 + $0xd] sm:$0xff] %vm127, %v430
    %433 = vst.msk [vmem:[#allocation2 + $0x15] sm:$0x1] %vm129, %v431
    %v434 = vsel %vm127, %v430, 0.0
    %v435 = vsel %vm129, %v431, 0.0
    %v436 = vadd.f32 %v434, %v435
    %v437 = vrot.slane %v436, 4
    %v438 = vadd.f32 %v436, %v437
    %v439 = vrot.slane %v438, 2
    %v440 = vadd.f32 %v438, %v439
    %v441 = vrot.slane %v440, 1
    %v442 = vadd.f32 %v440, %v441
    %v443 = vmul.f32 %v442, %v140
    %v444 = vld [vmem:[#allocation4] sm:$0xf]
    %v445 = vmul.f32 %v444, %v443
    %v446 = vld [vmem:[%s2] sm:$0xff]
    %v447 = vld [vmem:[%s2 + $0x8] sm:$0xff]
    %v448 = vld [vmem:[%s2 + $0x10] sm:$0xff]
    %v449 = vld [vmem:[%s2 + $0x18] sm:$0xff]
    %v450 = vld [vmem:[#allocation6] sm:$0x1]
    %v452 = vlaneseq
    %v453 = vshrl.u32 %v452, 7
    %v454 = vsub.s32 0, %v453
    %v455 = vrot.slane %v450, %v454
    %v458 = vsel %vm127, %v445, 0
    %460 = vmatprep.subr.mxu0 0.0
    %461 = vmatpush1.msra.mxu0 0.0
    %462 = vmatprep.subr.mxu0 0.0
    %463 = vmatpush1.msra.mxu0 0.0
    %464 = vmatprep.subr.mxu0 0.0
    %465 = vmatpush1.msra.mxu0 0.0
    %466 = vmatprep.subr.mxu0 0.0
    %467 = vmatpush1.msra.mxu0 0.0
    %468 = vmatprep.subr.mxu0 0.0
    %469 = vmatpush1.msra.mxu0 0.0
    %470 = vmatprep.subr.mxu0 0.0
    %471 = vmatpush1.msra.mxu0 0.0
    %472 = vmatprep.subr.mxu0 0.0
    %473 = vmatpush1.msra.mxu0 0.0
    %474 = vmatprep.subr.mxu0 0.0
    %475 = vmatpush1.msra.mxu0 0.0
    %476 = vmatprep.subr.mxu0 0.0
    %477 = vmatpush1.msra.mxu0 0.0
    %478 = vmatprep.subr.mxu0 0.0
    %479 = vmatpush1.msra.mxu0 0.0
    %480 = vmatprep.subr.mxu0 0.0
    %481 = vmatpush1.msra.mxu0 0.0
    %482 = vmatprep.subr.mxu0 0.0
    %483 = vmatpush1.msra.mxu0 0.0
    %484 = vmatprep.subr.mxu0 0.0
    %485 = vmatpush1.msra.mxu0 %v449
    %486 = vmatprep.subr.mxu0 0.0
    %487 = vmatpush1.msra.mxu0 %v448
    %488 = vmatprep.subr.mxu0 0.0
    %489 = vmatpush1.msra.mxu0 %v447
    %490 = vmatprep.subr.mxu0 0.0
    %491 = vmatpush1.msra.mxu0 %v446
    %492 = vmatprep.subr.mxu0 0.0
    %493 = vmatpush2.msra.mxu0 0.0
    %494 = vmatprep.subr.mxu0 0.0
    %495 = vmatpush2.msra.mxu0 0.0
    %496 = vmatprep.subr.mxu0 0.0
    %497 = vmatpush2.msra.mxu0 0.0
    %498 = vmatprep.subr.mxu0 0.0
    %499 = vmatpush2.msra.mxu0 0.0
    %500 = vmatprep.subr.mxu0 0.0
    %501 = vmatpush2.msra.mxu0 0.0
    %502 = vmatprep.subr.mxu0 0.0
    %503 = vmatpush2.msra.mxu0 0.0
    %504 = vmatprep.subr.mxu0 0.0
    %505 = vmatpush2.msra.mxu0 0.0
    %506 = vmatprep.subr.mxu0 0.0
    %507 = vmatpush2.msra.mxu0 0.0
    %508 = vmatprep.subr.mxu0 0.0
    %509 = vmatpush2.msra.mxu0 0.0
    %510 = vmatprep.subr.mxu0 0.0
    %511 = vmatpush2.msra.mxu0 0.0
    %512 = vmatprep.subr.mxu0 0.0
    %513 = vmatpush2.msra.mxu0 0.0
    %514 = vmatprep.subr.mxu0 0.0
    %515 = vmatpush2.msra.mxu0 0.0
    %516 = vmatprep.subr.mxu0 0.0
    %517 = vmatpush2.msra.mxu0 0.0
    %518 = vmatprep.subr.mxu0 0.0
    %519 = vmatpush2.msra.mxu0 0.0
    %520 = vmatprep.subr.mxu0 0.0
    %521 = vmatpush2.msra.mxu0 0.0
    %522 = vmatprep.subr.mxu0 0.0
    %523 = vmatpush2.msra.mxu0 0.0
    %524 = vmatprep.mubr.f32.mxu0 0.0
    %525 = vmatmul.mubr.f32.gmra.mxu0 %v458
    %v526 = vpop.f32.mrf.mxu0
    %v527 = vadd.f32 %v455, %v526
    %v528 = vpop.f32.mrf.mxu0
    %529 = vdwg.mxu0
    %v530 = vld [vmem:[#allocation8] sm:$0xff]
    %v531 = vld [vmem:[#allocation8 + $0x8] sm:$0xff]
    %v532 = vld [vmem:[#allocation8 + $0x10] sm:$0xff]
    %v533 = vld [vmem:[#allocation8 + $0x18] sm:$0xff]
    %v535 = vsel %vm127, %v527, 0
    %537 = vmatprep.subr.mxu0 0.0
    %538 = vmatpush1.msra.mxu0 0.0
    %539 = vmatprep.subr.mxu0 0.0
    %540 = vmatpush1.msra.mxu0 0.0
    %541 = vmatprep.subr.mxu0 0.0
    %542 = vmatpush1.msra.mxu0 0.0
    %543 = vmatprep.subr.mxu0 0.0
    %544 = vmatpush1.msra.mxu0 0.0
    %545 = vmatprep.subr.mxu0 0.0
    %546 = vmatpush1.msra.mxu0 0.0
    %547 = vmatprep.subr.mxu0 0.0
    %548 = vmatpush1.msra.mxu0 0.0
    %549 = vmatprep.subr.mxu0 0.0
    %550 = vmatpush1.msra.mxu0 0.0
    %551 = vmatprep.subr.mxu0 0.0
    %552 = vmatpush1.msra.mxu0 0.0
    %553 = vmatprep.subr.mxu0 0.0
    %554 = vmatpush1.msra.mxu0 0.0
    %555 = vmatprep.subr.mxu0 0.0
    %556 = vmatpush1.msra.mxu0 0.0
    %557 = vmatprep.subr.mxu0 0.0
    %558 = vmatpush1.msra.mxu0 0.0
    %559 = vmatprep.subr.mxu0 0.0
    %560 = vmatpush1.msra.mxu0 0.0
    %561 = vmatprep.subr.mxu0 0.0
    %562 = vmatpush1.msra.mxu0 %v533
    %563 = vmatprep.subr.mxu0 0.0
    %564 = vmatpush1.msra.mxu0 %v532
    %565 = vmatprep.subr.mxu0 0.0
    %566 = vmatpush1.msra.mxu0 %v531
    %567 = vmatprep.subr.mxu0 0.0
    %568 = vmatpush1.msra.mxu0 %v530
    %569 = vmatprep.subr.mxu0 0.0
    %570 = vmatpush2.msra.mxu0 0.0
    %571 = vmatprep.subr.mxu0 0.0
    %572 = vmatpush2.msra.mxu0 0.0
    %573 = vmatprep.subr.mxu0 0.0
    %574 = vmatpush2.msra.mxu0 0.0
    %575 = vmatprep.subr.mxu0 0.0
    %576 = vmatpush2.msra.mxu0 0.0
    %577 = vmatprep.subr.mxu0 0.0
    %578 = vmatpush2.msra.mxu0 0.0
    %579 = vmatprep.subr.mxu0 0.0
    %580 = vmatpush2.msra.mxu0 0.0
    %581 = vmatprep.subr.mxu0 0.0
    %582 = vmatpush2.msra.mxu0 0.0
    %583 = vmatprep.subr.mxu0 0.0
    %584 = vmatpush2.msra.mxu0 0.0
    %585 = vmatprep.subr.mxu0 0.0
    %586 = vmatpush2.msra.mxu0 0.0
    %587 = vmatprep.subr.mxu0 0.0
    %588 = vmatpush2.msra.mxu0 0.0
    %589 = vmatprep.subr.mxu0 0.0
    %590 = vmatpush2.msra.mxu0 0.0
    %591 = vmatprep.subr.mxu0 0.0
    %592 = vmatpush2.msra.mxu0 0.0
    %593 = vmatprep.subr.mxu0 0.0
    %594 = vmatpush2.msra.mxu0 0.0
    %595 = vmatprep.subr.mxu0 0.0
    %596 = vmatpush2.msra.mxu0 0.0
    %597 = vmatprep.subr.mxu0 0.0
    %598 = vmatpush2.msra.mxu0 0.0
    %599 = vmatprep.subr.mxu0 0.0
    %600 = vmatpush2.msra.mxu0 0.0
    %601 = vmatprep.mubr.f32.mxu0 0.0
    %602 = vmatmul.mubr.f32.gmra.mxu0 %v535
    %v603 = vpop.f32.mrf.mxu0
    %v604 = vadd.f32 0.0, %v603
    %v605 = vpop.f32.mrf.mxu0
    %606 = vdwg.mxu0
    %v607 = vsub.f32 %v527, %v604
    %v608 = vmul.f32 %v607, %v607
    %v610 = vsel %vm127, %v608, 0
    %612 = vmatprep.subr.mxu0 0.0
    %613 = vmatpush1.msra.mxu0 0.0
    %614 = vmatprep.subr.mxu0 0.0
    %615 = vmatpush1.msra.mxu0 0.0
    %616 = vmatprep.subr.mxu0 0.0
    %617 = vmatpush1.msra.mxu0 0.0
    %618 = vmatprep.subr.mxu0 0.0
    %619 = vmatpush1.msra.mxu0 0.0
    %620 = vmatprep.subr.mxu0 0.0
    %621 = vmatpush1.msra.mxu0 0.0
    %622 = vmatprep.subr.mxu0 0.0
    %623 = vmatpush1.msra.mxu0 0.0
    %624 = vmatprep.subr.mxu0 0.0
    %625 = vmatpush1.msra.mxu0 0.0
    %626 = vmatprep.subr.mxu0 0.0
    %627 = vmatpush1.msra.mxu0 0.0
    %628 = vmatprep.subr.mxu0 0.0
    %629 = vmatpush1.msra.mxu0 0.0
    %630 = vmatprep.subr.mxu0 0.0
    %631 = vmatpush1.msra.mxu0 0.0
    %632 = vmatprep.subr.mxu0 0.0
    %633 = vmatpush1.msra.mxu0 0.0
    %634 = vmatprep.subr.mxu0 0.0
    %635 = vmatpush1.msra.mxu0 0.0
    %636 = vmatprep.subr.mxu0 0.0
    %637 = vmatpush1.msra.mxu0 %v533
    %638 = vmatprep.subr.mxu0 0.0
    %639 = vmatpush1.msra.mxu0 %v532
    %640 = vmatprep.subr.mxu0 0.0
    %641 = vmatpush1.msra.mxu0 %v531
    %642 = vmatprep.subr.mxu0 0.0
    %643 = vmatpush1.msra.mxu0 %v530
    %644 = vmatprep.subr.mxu0 0.0
    %645 = vmatpush2.msra.mxu0 0.0
    %646 = vmatprep.subr.mxu0 0.0
    %647 = vmatpush2.msra.mxu0 0.0
    %648 = vmatprep.subr.mxu0 0.0
    %649 = vmatpush2.msra.mxu0 0.0
    %650 = vmatprep.subr.mxu0 0.0
    %651 = vmatpush2.msra.mxu0 0.0
    %652 = vmatprep.subr.mxu0 0.0
    %653 = vmatpush2.msra.mxu0 0.0
    %654 = vmatprep.subr.mxu0 0.0
    %655 = vmatpush2.msra.mxu0 0.0
    %656 = vmatprep.subr.mxu0 0.0
    %657 = vmatpush2.msra.mxu0 0.0
    %658 = vmatprep.subr.mxu0 0.0
    %659 = vmatpush2.msra.mxu0 0.0
    %660 = vmatprep.subr.mxu0 0.0
    %661 = vmatpush2.msra.mxu0 0.0
    %662 = vmatprep.subr.mxu0 0.0
    %663 = vmatpush2.msra.mxu0 0.0
    %664 = vmatprep.subr.mxu0 0.0
    %665 = vmatpush2.msra.mxu0 0.0
    %666 = vmatprep.subr.mxu0 0.0
    %667 = vmatpush2.msra.mxu0 0.0
    %668 = vmatprep.subr.mxu0 0.0
    %669 = vmatpush2.msra.mxu0 0.0
    %670 = vmatprep.subr.mxu0 0.0
    %671 = vmatpush2.msra.mxu0 0.0
    %672 = vmatprep.subr.mxu0 0.0
    %673 = vmatpush2.msra.mxu0 0.0
    %674 = vmatprep.subr.mxu0 0.0
    %675 = vmatpush2.msra.mxu0 0.0
    %676 = vmatprep.mubr.f32.mxu0 0.0
    %677 = vmatmul.mubr.f32.gmra.mxu0 %v610
    %v678 = vpop.f32.mrf.mxu0
    %v679 = vadd.f32 1e-05, %v678
    %v680 = vpop.f32.mrf.mxu0
    %681 = vdwg.mxu0
    %v682 = vrsqrt.pop %v679
    %v683 = vmul.f32 %v607, %v682
    %v684 = vld [vmem:[#allocation9] sm:$0x1]
    %v686 = vlaneseq
    %v687 = vshrl.u32 %v686, 7
    %v688 = vsub.s32 0, %v687
    %v689 = vrot.slane %v684, %v688
    %v691 = vmul.f32 %v683, %v689
    %v692 = vld [vmem:[#allocation11] sm:$0x1]
    %v694 = vlaneseq
    %v695 = vshrl.u32 %v694, 7
    %v696 = vsub.s32 0, %v695
    %v697 = vrot.slane %v692, %v696
    %v699 = vadd.f32 %v691, %v697
    %v700 = vmul.f32 %v699, 0.5
    %v701 = vmul.f32 %v699, 0.70710677
    %v702 = vand.u32 2147483647, %v701
    %v703 = vmul.f32 %v702, 0.3275911
    %v704 = vadd.f32 %v703, 1.0
    %v705 = vrcp.pop %v704
    %v706 = vmul.f32 1.0, %v705
    %v707 = vmul.f32 %v706, 1.0614054
    %v708 = vadd.f32 %v707, -1.4531521
    %v709 = vmul.f32 %v708, %v706
    %v710 = vadd.f32 %v709, 1.4214138
    %v711 = vmul.f32 %v710, %v706
    %v712 = vadd.f32 %v711, -0.28449672
    %v713 = vmul.f32 %v712, %v706
    %v714 = vadd.f32 %v713, 0.2548296
    %v715 = vmul.f32 %v714, %v706
    %v716 = vsub.f32 0.0, %v702
    %v717 = vmul.f32 %v716, %v702
    %v718 = vmul.f32 %v717, 1.442695
    %v719 = vpow.pop %v718
    %v720 = vmul.f32 %v715, %v719
    %v721 = vsub.f32 1.0, %v720
    %vm722 = vcmp.ge.f32.partialorder %v701, 0.0
    %v723 = vsub.f32 0.0, %v721
    %v724 = vsel %vm722, %v721, %v723
    %v725 = vadd.f32 %v724, 1.0
    %v726 = vmul.f32 %v700, %v725
    %v727 = vld [vmem:[#allocation12] sm:$0xf]
    %v728 = vadd.f32 %v726, %v727
    %729 = vst.msk [vmem:[#allocation2 + $0x16] sm:$0xf] %vm427, %v728
    %v730 = vld [vmem:[#allocation2] sm:$0xff]
    %v731 = vld [vmem:[#allocation2 + $0x8] sm:$0xff]
    %v732 = vld [vmem:[#allocation2 + $0x10] sm:$0xff]
    %v733 = vld [vmem:[#allocation2 + $0x18] sm:$0x3]
    %v734 = vld [vmem:[%s8] sm:$0xff]
    %v735 = vld [vmem:[%s8 + $0x8] sm:$0xff]
    %v736 = vld [vmem:[%s8 + $0x10] sm:$0xff]
    %v737 = vld [vmem:[%s8 + $0x18] sm:$0xff]
    %v739 = vsel %vm127, %v730, 0
    %v742 = vsel %vm127, %v731, 0
    %v745 = vsel %vm127, %v732, 0
    %v748 = vsel %vm127, %v733, 0
    %750 = vmatprep.subr.mxu0 0.0
    %751 = vmatpush1.msra.mxu0 0.0
    %752 = vmatprep.subr.mxu0 0.0
    %753 = vmatpush1.msra.mxu0 0.0
    %754 = vmatprep.subr.mxu0 0.0
    %755 = vmatpush1.msra.mxu0 0.0
    %756 = vmatprep.subr.mxu0 0.0
    %757 = vmatpush1.msra.mxu0 0.0
    %758 = vmatprep.subr.mxu0 0.0
    %759 = vmatpush1.msra.mxu0 0.0
    %760 = vmatprep.subr.mxu0 0.0
    %761 = vmatpush1.msra.mxu0 0.0
    %762 = vmatprep.subr.mxu0 0.0
    %763 = vmatpush1.msra.mxu0 0.0
    %764 = vmatprep.subr.mxu0 0.0
    %765 = vmatpush1.msra.mxu0 0.0
    %766 = vmatprep.subr.mxu0 0.0
    %767 = vmatpush1.msra.mxu0 0.0
    %768 = vmatprep.subr.mxu0 0.0
    %769 = vmatpush1.msra.mxu0 0.0
    %770 = vmatprep.subr.mxu0 0.0
    %771 = vmatpush1.msra.mxu0 0.0
    %772 = vmatprep.subr.mxu0 0.0
    %773 = vmatpush1.msra.mxu0 0.0
    %774 = vmatprep.subr.mxu0 0.0
    %775 = vmatpush1.msra.mxu0 %v737
    %776 = vmatprep.subr.mxu0 0.0
    %777 = vmatpush1.msra.mxu0 %v736
    %778 = vmatprep.subr.mxu0 0.0
    %779 = vmatpush1.msra.mxu0 %v735
    %780 = vmatprep.subr.mxu0 0.0
    %781 = vmatpush1.msra.mxu0 %v734
    %782 = vmatprep.subr.mxu0 0.0
    %783 = vmatpush2.msra.mxu0 0.0
    %784 = vmatprep.subr.mxu0 0.0
    %785 = vmatpush2.msra.mxu0 0.0
    %786 = vmatprep.subr.mxu0 0.0
    %787 = vmatpush2.msra.mxu0 0.0
    %788 = vmatprep.subr.mxu0 0.0
    %789 = vmatpush2.msra.mxu0 0.0
    %790 = vmatprep.subr.mxu0 0.0
    %791 = vmatpush2.msra.mxu0 0.0
    %792 = vmatprep.subr.mxu0 0.0
    %793 = vmatpush2.msra.mxu0 0.0
    %794 = vmatprep.subr.mxu0 0.0
    %795 = vmatpush2.msra.mxu0 0.0
    %796 = vmatprep.subr.mxu0 0.0
    %797 = vmatpush2.msra.mxu0 0.0
    %798 = vmatprep.subr.mxu0 0.0
    %799 = vmatpush2.msra.mxu0 0.0
    %800 = vmatprep.subr.mxu0 0.0
    %801 = vmatpush2.msra.mxu0 0.0
    %802 = vmatprep.subr.mxu0 0.0
    %803 = vmatpush2.msra.mxu0 0.0
    %804 = vmatprep.subr.mxu0 0.0
    %805 = vmatpush2.msra.mxu0 0.0
    %806 = vmatprep.subr.mxu0 0.0
    %807 = vmatpush2.msra.mxu0 0.0
    %808 = vmatprep.subr.mxu0 0.0
    %809 = vmatpush2.msra.mxu0 0.0
    %810 = vmatprep.subr.mxu0 0.0
    %811 = vmatpush2.msra.mxu0 0.0
    %812 = vmatprep.subr.mxu0 0.0
    %813 = vmatpush2.msra.mxu0 0.0
    %814 = vmatprep.mubr.f32.mxu0 0.0
    %815 = vmatmul.mubr.f32.gmra.mxu0 %v739
    %v816 = vpop.f32.mrf.mxu0
    %v817 = vadd.f32 0.0, %v816
    %v818 = vpop.f32.mrf.mxu0
    %819 = vmatprep.mubr.f32.mxu0 0.0
    %820 = vmatmul.mubr.f32.gmra.mxu0 %v742
    %v821 = vpop.f32.mrf.mxu0
    %v822 = vadd.f32 0.0, %v821
    %v823 = vpop.f32.mrf.mxu0
    %824 = vmatprep.mubr.f32.mxu0 0.0
    %825 = vmatmul.mubr.f32.gmra.mxu0 %v745
    %v826 = vpop.f32.mrf.mxu0
    %v827 = vadd.f32 0.0, %v826
    %v828 = vpop.f32.mrf.mxu0
    %829 = vmatprep.mubr.f32.mxu0 0.0
    %830 = vmatmul.mubr.f32.gmra.mxu0 %v748
    %v831 = vpop.f32.mrf.mxu0
    %v832 = vadd.f32 0.0, %v831
    %v833 = vpop.f32.mrf.mxu0
    %834 = vdwg.mxu0
    %837 = vrot.lane.b32.xlu0 %v817, 120
    %v838 = vpop.permute.xlu0 %837
    %839 = vrot.lane.b32.xlu0 %v822, 120
    %v840 = vpop.permute.xlu0 %839
    %vm841 = vcmask 64512
    %v842 = vsel %vm841, %v817, 0
    %v844 = vsel %vm841, %v822, 0
    %v846 = vsel %vm841, %v838, 0
    %v848 = vsel %vm841, %v840, 0
    %850 = vmatprep.subr.mxu0 0.0
    %851 = vmatpush1.xpose.msra.mxu0 0.0
    %852 = vmatprep.subr.mxu0 0.0
    %853 = vmatpush1.xpose.msra.mxu0 0.0
    %854 = vmatprep.subr.mxu0 0.0
    %855 = vmatpush1.xpose.msra.mxu0 0.0
    %856 = vmatprep.subr.mxu0 0.0
    %857 = vmatpush1.xpose.msra.mxu0 0.0
    %858 = vmatprep.subr.mxu0 0.0
    %859 = vmatpush1.xpose.msra.mxu0 0.0
    %860 = vmatprep.subr.mxu0 0.0
    %861 = vmatpush1.xpose.msra.mxu0 0.0
    %862 = vmatprep.subr.mxu0 0.0
    %863 = vmatpush1.xpose.msra.mxu0 0.0
    %864 = vmatprep.subr.mxu0 0.0
    %865 = vmatpush1.xpose.msra.mxu0 0.0
    %866 = vmatprep.subr.mxu0 0.0
    %867 = vmatpush1.xpose.msra.mxu0 0.0
    %868 = vmatprep.subr.mxu0 0.0
    %869 = vmatpush1.xpose.msra.mxu0 0.0
    %870 = vmatprep.subr.mxu0 0.0
    %871 = vmatpush1.xpose.msra.mxu0 0.0
    %872 = vmatprep.subr.mxu0 0.0
    %873 = vmatpush1.xpose.msra.mxu0 0.0
    %874 = vmatprep.subr.mxu0 0.0
    %875 = vmatpush1.xpose.msra.mxu0 0.0
    %876 = vmatprep.subr.mxu0 0.0
    %877 = vmatpush1.xpose.msra.mxu0 0.0
    %878 = vmatprep.subr.mxu0 0.0
    %879 = vmatpush1.xpose.msra.mxu0 %v848
    %880 = vmatprep.subr.mxu0 0.0
    %881 = vmatpush1.xpose.msra.mxu0 %v846
    %882 = vmatprep.subr.mxu0 0.0
    %883 = vmatpush2.xpose.msra.mxu0 0.0
    %884 = vmatprep.subr.mxu0 0.0
    %885 = vmatpush2.xpose.msra.mxu0 0.0
    %886 = vmatprep.subr.mxu0 0.0
    %887 = vmatpush2.xpose.msra.mxu0 0.0
    %888 = vmatprep.subr.mxu0 0.0
    %889 = vmatpush2.xpose.msra.mxu0 0.0
    %890 = vmatprep.subr.mxu0 0.0
    %891 = vmatpush2.xpose.msra.mxu0 0.0
    %892 = vmatprep.subr.mxu0 0.0
    %893 = vmatpush2.xpose.msra.mxu0 0.0
    %894 = vmatprep.subr.mxu0 0.0
    %895 = vmatpush2.xpose.msra.mxu0 0.0
    %896 = vmatprep.subr.mxu0 0.0
    %897 = vmatpush2.xpose.msra.mxu0 0.0
    %898 = vmatprep.subr.mxu0 0.0
    %899 = vmatpush2.xpose.msra.mxu0 0.0
    %900 = vmatprep.subr.mxu0 0.0
    %901 = vmatpush2.xpose.msra.mxu0 0.0
    %902 = vmatprep.subr.mxu0 0.0
    %903 = vmatpush2.xpose.msra.mxu0 0.0
    %904 = vmatprep.subr.mxu0 0.0
    %905 = vmatpush2.xpose.msra.mxu0 0.0
    %906 = vmatprep.subr.mxu0 0.0
    %907 = vmatpush2.xpose.msra.mxu0 0.0
    %908 = vmatprep.subr.mxu0 0.0
    %909 = vmatpush2.xpose.msra.mxu0 0.0
    %910 = vmatprep.subr.mxu0 0.0
    %911 = vmatpush2.xpose.msra.mxu0 0.0
    %912 = vmatprep.subr.mxu0 0.0
    %913 = vmatpush2.xpose.msra.mxu0 0.0
    %914 = vmatprep.mubr.f32.mxu0 0.0
    %915 = vmatmul.mubr.f32.gmra.mxu0 %v842
    %v916 = vpop.f32.mrf.mxu0
    %v917 = vadd.f32 0.0, %v916
    %v918 = vpop.f32.mrf.mxu0
    %919 = vmatprep.mubr.f32.mxu0 0.0
    %920 = vmatmul.mubr.f32.gmra.mxu0 %v844
    %v921 = vpop.f32.mrf.mxu0
    %v922 = vadd.f32 0.0, %v921
    %v923 = vpop.f32.mrf.mxu0
    %924 = vdwg.mxu0
    %vm925 = vcmask 105472
    %v926 = vsel %vm925, %v917, -inf
    %927 = vmax.xlane.f32.xlu0 %v926
    %v928 = vpop.xlane.xlu0 %927
    %vm929 = vcmask 102400
    %v930 = vsel %vm929, %v922, -inf
    %931 = vmax.xlane.f32.xlu0 %v930
    %v932 = vpop.xlane.xlu0 %931
    %v933 = vsub.f32 %v917, %v928
    %v934 = vsub.f32 %v922, %v932
    %v935 = vmul.f32 %v933, 1.442695
    %v936 = vpow.pop %v935
    %v937 = vmul.f32 %v934, 1.442695
    %v938 = vpow.pop %v937
    %v939 = vsel %vm925, %v936, 0.0
    %940 = vadd.xlane.f32.xlu0 %v939
    %v941 = vpop.xlane.xlu0 %940
    %v942 = vsel %vm929, %v938, 0.0
    %943 = vadd.xlane.f32.xlu0 %v942
    %v944 = vpop.xlane.xlu0 %943
    %v945 = vrcp.pop %v941
    %v946 = vrcp.pop %v944
    %v947 = vmul.f32 %v936, %v945
    %v948 = vmul.f32 %v938, %v946
    %949 = vrot.lane.b32.xlu0 %v817, 112
    %v950 = vpop.permute.xlu0 %949
    %951 = vrot.lane.b32.xlu0 %v822, 112
    %v952 = vpop.permute.xlu0 %951
    %v955 = vsel %vm925, %v947, 0
    %v958 = vsel %vm925, %v948, 0
    %vm960 = vcmask 1044480
    %v961 = vsel %vm960, %v952, 0
    %963 = vmatprep.subr.mxu0 0.0
    %964 = vmatpush1.msra.mxu0 0.0
    %965 = vmatprep.subr.mxu0 0.0
    %966 = vmatpush1.msra.mxu0 0.0
    %967 = vmatprep.subr.mxu0 0.0
    %968 = vmatpush1.msra.mxu0 0.0
    %969 = vmatprep.subr.mxu0 0.0
    %970 = vmatpush1.msra.mxu0 0.0
    %971 = vmatprep.subr.mxu0 0.0
    %972 = vmatpush1.msra.mxu0 0.0
    %973 = vmatprep.subr.mxu0 0.0
    %974 = vmatpush1.msra.mxu0 0.0
    %975 = vmatprep.subr.mxu0 0.0
    %976 = vmatpush1.msra.mxu0 0.0
    %977 = vmatprep.subr.mxu0 0.0
    %978 = vmatpush1.msra.mxu0 0.0
    %979 = vmatprep.subr.mxu0 0.0
    %980 = vmatpush1.msra.mxu0 0.0
    %981 = vmatprep.subr.mxu0 0.0
    %982 = vmatpush1.msra.mxu0 0.0
    %983 = vmatprep.subr.mxu0 0.0
    %984 = vmatpush1.msra.mxu0 0.0
    %985 = vmatprep.subr.mxu0 0.0
    %986 = vmatpush1.msra.mxu0 0.0
    %987 = vmatprep.subr.mxu0 0.0
    %988 = vmatpush1.msra.mxu0 0.0
    %989 = vmatprep.subr.mxu0 0.0
    %990 = vmatpush1.msra.mxu0 0.0
    %991 = vmatprep.subr.mxu0 0.0
    %992 = vmatpush1.msra.mxu0 %v961
    %993 = vmatprep.subr.mxu0 0.0
    %994 = vmatpush1.msra.mxu0 %v950
    %995 = vmatprep.subr.mxu0 0.0
    %996 = vmatpush2.msra.mxu0 0.0
    %997 = vmatprep.subr.mxu0 0.0
    %998 = vmatpush2.msra.mxu0 0.0
    %999 = vmatprep.subr.mxu0 0.0
    %1000 = vmatpush2.msra.mxu0 0.0
    %1001 = vmatprep.subr.mxu0 0.0
    %1002 = vmatpush2.msra.mxu0 0.0
    %1003 = vmatprep.subr.mxu0 0.0
    %1004 = vmatpush2.msra.mxu0 0.0
    %1005 = vmatprep.subr.mxu0 0.0
    %1006 = vmatpush2.msra.mxu0 0.0
    %1007 = vmatprep.subr.mxu0 0.0
    %1008 = vmatpush2.msra.mxu0 0.0
    %1009 = vmatprep.subr.mxu0 0.0
    %1010 = vmatpush2.msra.mxu0 0.0
    %1011 = vmatprep.subr.mxu0 0.0
    %1012 = vmatpush2.msra.mxu0 0.0
    %1013 = vmatprep.subr.mxu0 0.0
    %1014 = vmatpush2.msra.mxu0 0.0
    %1015 = vmatprep.subr.mxu0 0.0
    %1016 = vmatpush2.msra.mxu0 0.0
    %1017 = vmatprep.subr.mxu0 0.0
    %1018 = vmatpush2.msra.mxu0 0.0
    %1019 = vmatprep.subr.mxu0 0.0
    %1020 = vmatpush2.msra.mxu0 0.0
    %1021 = vmatprep.subr.mxu0 0.0
    %1022 = vmatpush2.msra.mxu0 0.0
    %1023 = vmatprep.subr.mxu0 0.0
    %1024 = vmatpush2.msra.mxu0 0.0
    %1025 = vmatprep.subr.mxu0 0.0
    %1026 = vmatpush2.msra.mxu0 0.0
    %1027 = vmatprep.mubr.f32.mxu0 0.0
    %1028 = vmatmul.mubr.f32.gmra.mxu0 %v955
    %v1029 = vpop.f32.mrf.mxu0
    %v1030 = vadd.f32 0.0, %v1029
    %v1031 = vpop.f32.mrf.mxu0
    %1032 = vmatprep.mubr.f32.mxu0 0.0
    %1033 = vmatmul.mubr.f32.gmra.mxu0 %v958
    %v1034 = vpop.f32.mrf.mxu0
    %v1035 = vadd.f32 0.0, %v1034
    %v1036 = vpop.f32.mrf.mxu0
    %1037 = vdwg.mxu0
    %1038 = vst.msk [vmem:[#allocation3] sm:$0xff] %vm841, %v1030
    %vm1039 = vcmask 61440
    %1040 = vst.msk [vmem:[#allocation3 + $0x8] sm:$0x1f] %vm1039, %v1035
    %1041 = vrot.lane.b32.xlu0 %v817, 104
    %v1042 = vpop.permute.xlu0 %1041
    %1043 = vrot.lane.b32.xlu0 %v822, 104
    %v1044 = vpop.permute.xlu0 %1043
    %1045 = vrot.lane.b32.xlu0 %v817, 96
    %v1046 = vpop.permute.xlu0 %1045
    %1047 = vrot.lane.b32.xlu0 %v822, 96
    %v1048 = vpop.permute.xlu0 %1047
    %v1049 = vsel %vm841, %v1042, 0
    %v1051 = vsel %vm841, %v1044, 0
    %v1053 = vsel %vm841, %v1046, 0
    %v1055 = vsel %vm841, %v1048, 0
    %1057 = vmatprep.subr.mxu0 0.0
    %1058 = vmatpush1.xpose.msra.mxu0 0.0
    %1059 = vmatprep.subr.mxu0 0.0
    %1060 = vmatpush1.xpose.msra.mxu0 0.0
    %1061 = vmatprep.subr.mxu0 0.0
    %1062 = vmatpush1.xpose.msra.mxu0 0.0
    %1063 = vmatprep.subr.mxu0 0.0
    %1064 = vmatpush1.xpose.msra.mxu0 0.0
    %1065 = vmatprep.subr.mxu0 0.0
    %1066 = vmatpush1.xpose.msra.mxu0 0.0
    %1067 = vmatprep.subr.mxu0 0.0
    %1068 = vmatpush1.xpose.msra.mxu0 0.0
    %1069 = vmatprep.subr.mxu0 0.0
    %1070 = vmatpush1.xpose.msra.mxu0 0.0
    %1071 = vmatprep.subr.mxu0 0.0
    %1072 = vmatpush1.xpose.msra.mxu0 0.0
    %1073 = vmatprep.subr.mxu0 0.0
    %1074 = vmatpush1.xpose.msra.mxu0 0.0
    %1075 = vmatprep.subr.mxu0 0.0
    %1076 = vmatpush1.xpose.msra.mxu0 0.0
    %1077 = vmatprep.subr.mxu0 0.0
    %1078 = vmatpush1.xpose.msra.mxu0 0.0
    %1079 = vmatprep.subr.mxu0 0.0
    %1080 = vmatpush1.xpose.msra.mxu0 0.0
    %1081 = vmatprep.subr.mxu0 0.0
    %1082 = vmatpush1.xpose.msra.mxu0 0.0
    %1083 = vmatprep.subr.mxu0 0.0
    %1084 = vmatpush1.xpose.msra.mxu0 0.0
    %1085 = vmatprep.subr.mxu0 0.0
    %1086 = vmatpush1.xpose.msra.mxu0 %v1055
    %1087 = vmatprep.subr.mxu0 0.0
    %1088 = vmatpush1.xpose.msra.mxu0 %v1053
    %1089 = vmatprep.subr.mxu0 0.0
    %1090 = vmatpush2.xpose.msra.mxu0 0.0
    %1091 = vmatprep.subr.mxu0 0.0
    %1092 = vmatpush2.xpose.msra.mxu0 0.0
    %1093 = vmatprep.subr.mxu0 0.0
    %1094 = vmatpush2.xpose.msra.mxu0 0.0
    %1095 = vmatprep.subr.mxu0 0.0
    %1096 = vmatpush2.xpose.msra.mxu0 0.0
    %1097 = vmatprep.subr.mxu0 0.0
    %1098 = vmatpush2.xpose.msra.mxu0 0.0
    %1099 = vmatprep.subr.mxu0 0.0
    %1100 = vmatpush2.xpose.msra.mxu0 0.0
    %1101 = vmatprep.subr.mxu0 0.0
    %1102 = vmatpush2.xpose.msra.mxu0 0.0
    %1103 = vmatprep.subr.mxu0 0.0
    %1104 = vmatpush2.xpose.msra.mxu0 0.0
    %1105 = vmatprep.subr.mxu0 0.0
    %1106 = vmatpush2.xpose.msra.mxu0 0.0
    %1107 = vmatprep.subr.mxu0 0.0
    %1108 = vmatpush2.xpose.msra.mxu0 0.0
    %1109 = vmatprep.subr.mxu0 0.0
    %1110 = vmatpush2.xpose.msra.mxu0 0.0
    %1111 = vmatprep.subr.mxu0 0.0
    %1112 = vmatpush2.xpose.msra.mxu0 0.0
    %1113 = vmatprep.subr.mxu0 0.0
    %1114 = vmatpush2.xpose.msra.mxu0 0.0
    %1115 = vmatprep.subr.mxu0 0.0
    %1116 = vmatpush2.xpose.msra.mxu0 0.0
    %1117 = vmatprep.subr.mxu0 0.0
    %1118 = vmatpush2.xpose.msra.mxu0 0.0
    %1119 = vmatprep.subr.mxu0 0.0
    %1120 = vmatpush2.xpose.msra.mxu0 0.0
    %1121 = vmatprep.mubr.f32.mxu0 0.0
    %1122 = vmatmul.mubr.f32.gmra.mxu0 %v1049
    %v1123 = vpop.f32.mrf.mxu0
    %v1124 = vadd.f32 0.0, %v1123
    %v1125 = vpop.f32.mrf.mxu0
    %1126 = vmatprep.mubr.f32.mxu0 0.0
    %1127 = vmatmul.mubr.f32.gmra.mxu0 %v1051
    %v1128 = vpop.f32.mrf.mxu0
    %v1129 = vadd.f32 0.0, %v1128
    %v1130 = vpop.f32.mrf.mxu0
    %1131 = vdwg.mxu0
    %v1132 = vsel %vm925, %v1124, -inf
    %1133 = vmax.xlane.f32.xlu0 %v1132
    %v1134 = vpop.xlane.xlu0 %1133
    %v1135 = vsel %vm929, %v1129, -inf
    %1136 = vmax.xlane.f32.xlu0 %v1135
    %v1137 = vpop.xlane.xlu0 %1136
    %v1138 = vsub.f32 %v1124, %v1134
    %v1139 = vsub.f32 %v1129, %v1137
    %v1140 = vmul.f32 %v1138, 1.442695
    %v1141 = vpow.pop %v1140
    %v1142 = vmul.f32 %v1139, 1.442695
    %v1143 = vpow.pop %v1142
    %v1144 = vsel %vm925, %v1141, 0.0
    %1145 = vadd.xlane.f32.xlu0 %v1144
    %v1146 = vpop.xlane.xlu0 %1145
    %v1147 = vsel %vm929, %v1143, 0.0
    %1148 = vadd.xlane.f32.xlu0 %v1147
    %v1149 = vpop.xlane.xlu0 %1148
    %v1150 = vrcp.pop %v1146
    %v1151 = vrcp.pop %v1149
    %v1152 = vmul.f32 %v1141, %v1150
    %v1153 = vmul.f32 %v1143, %v1151
    %1154 = vrot.lane.b32.xlu0 %v817, 88
    %v1155 = vpop.permute.xlu0 %1154
    %1156 = vrot.lane.b32.xlu0 %v822, 88
    %v1157 = vpop.permute.xlu0 %1156
    %v1160 = vsel %vm925, %v1152, 0
    %v1163 = vsel %vm925, %v1153, 0
    %v1165 = vsel %vm960, %v1157, 0
    %1167 = vmatprep.subr.mxu0 0.0
    %1168 = vmatpush1.msra.mxu0 0.0
    %1169 = vmatprep.subr.mxu0 0.0
    %1170 = vmatpush1.msra.mxu0 0.0
    %1171 = vmatprep.subr.mxu0 0.0
    %1172 = vmatpush1.msra.mxu0 0.0
    %1173 = vmatprep.subr.mxu0 0.0
    %1174 = vmatpush1.msra.mxu0 0.0
    %1175 = vmatprep.subr.mxu0 0.0
    %1176 = vmatpush1.msra.mxu0 0.0
    %1177 = vmatprep.subr.mxu0 0.0
    %1178 = vmatpush1.msra.mxu0 0.0
    %1179 = vmatprep.subr.mxu0 0.0
    %1180 = vmatpush1.msra.mxu0 0.0
    %1181 = vmatprep.subr.mxu0 0.0
    %1182 = vmatpush1.msra.mxu0 0.0
    %1183 = vmatprep.subr.mxu0 0.0
    %1184 = vmatpush1.msra.mxu0 0.0
    %1185 = vmatprep.subr.mxu0 0.0
    %1186 = vmatpush1.msra.mxu0 0.0
    %1187 = vmatprep.subr.mxu0 0.0
    %1188 = vmatpush1.msra.mxu0 0.0
    %1189 = vmatprep.subr.mxu0 0.0
    %1190 = vmatpush1.msra.mxu0 0.0
    %1191 = vmatprep.subr.mxu0 0.0
    %1192 = vmatpush1.msra.mxu0 0.0
    %1193 = vmatprep.subr.mxu0 0.0
    %1194 = vmatpush1.msra.mxu0 0.0
    %1195 = vmatprep.subr.mxu0 0.0
    %1196 = vmatpush1.msra.mxu0 %v1165
    %1197 = vmatprep.subr.mxu0 0.0
    %1198 = vmatpush1.msra.mxu0 %v1155
    %1199 = vmatprep.subr.mxu0 0.0
    %1200 = vmatpush2.msra.mxu0 0.0
    %1201 = vmatprep.subr.mxu0 0.0
    %1202 = vmatpush2.msra.mxu0 0.0
    %1203 = vmatprep.subr.mxu0 0.0
    %1204 = vmatpush2.msra.mxu0 0.0
    %1205 = vmatprep.subr.mxu0 0.0
    %1206 = vmatpush2.msra.mxu0 0.0
    %1207 = vmatprep.subr.mxu0 0.0
    %1208 = vmatpush2.msra.mxu0 0.0
    %1209 = vmatprep.subr.mxu0 0.0
    %1210 = vmatpush2.msra.mxu0 0.0
    %1211 = vmatprep.subr.mxu0 0.0
    %1212 = vmatpush2.msra.mxu0 0.0
    %1213 = vmatprep.subr.mxu0 0.0
    %1214 = vmatpush2.msra.mxu0 0.0
    %1215 = vmatprep.subr.mxu0 0.0
    %1216 = vmatpush2.msra.mxu0 0.0
    %1217 = vmatprep.subr.mxu0 0.0
    %1218 = vmatpush2.msra.mxu0 0.0
    %1219 = vmatprep.subr.mxu0 0.0
    %1220 = vmatpush2.msra.mxu0 0.0
    %1221 = vmatprep.subr.mxu0 0.0
    %1222 = vmatpush2.msra.mxu0 0.0
    %1223 = vmatprep.subr.mxu0 0.0
    %1224 = vmatpush2.msra.mxu0 0.0
    %1225 = vmatprep.subr.mxu0 0.0
    %1226 = vmatpush2.msra.mxu0 0.0
    %1227 = vmatprep.subr.mxu0 0.0
    %1228 = vmatpush2.msra.mxu0 0.0
    %1229 = vmatprep.subr.mxu0 0.0
    %1230 = vmatpush2.msra.mxu0 0.0
    %1231 = vmatprep.mubr.f32.mxu0 0.0
    %1232 = vmatmul.mubr.f32.gmra.mxu0 %v1160
    %v1233 = vpop.f32.mrf.mxu0
    %v1234 = vadd.f32 0.0, %v1233
    %v1235 = vpop.f32.mrf.mxu0
    %1236 = vmatprep.mubr.f32.mxu0 0.0
    %1237 = vmatmul.mubr.f32.gmra.mxu0 %v1163
    %v1238 = vpop.f32.mrf.mxu0
    %v1239 = vadd.f32 0.0, %v1238
    %v1240 = vpop.f32.mrf.mxu0
    %1241 = vdwg.mxu0
    %1244 = vrot.lane.b32.xlu0 %v1234, 8
    %v1245 = vpop.permute.xlu0 %1244
    %1246 = vrot.lane.b32.xlu0 %v1239, 8
    %v1247 = vpop.permute.xlu0 %1246
    %vm1250 = vcmask 130112
    %1251 = vst.msk [vmem:[#allocation3] sm:$0xff] %vm1250, %v1245
    %vm1252 = vcmask 127040
    %1253 = vst.msk [vmem:[#allocation3 + $0x8] sm:$0x1f] %vm1252, %v1247
    %1254 = vrot.lane.b32.xlu0 %v817, 80
    %v1255 = vpop.permute.xlu0 %1254
    %1256 = vrot.lane.b32.xlu0 %v822, 80
    %v1257 = vpop.permute.xlu0 %1256
    %1258 = vrot.lane.b32.xlu0 %v817, 72
    %v1259 = vpop.permute.xlu0 %1258
    %1260 = vrot.lane.b32.xlu0 %v822, 72
    %v1261 = vpop.permute.xlu0 %1260
    %v1262 = vsel %vm841, %v1255, 0
    %v1264 = vsel %vm841, %v1257, 0
    %v1266 = vsel %vm841, %v1259, 0
    %v1268 = vsel %vm841, %v1261, 0
    %1270 = vmatprep.subr.mxu0 0.0
    %1271 = vmatpush1.xpose.msra.mxu0 0.0
    %1272 = vmatprep.subr.mxu0 0.0
    %1273 = vmatpush1.xpose.msra.mxu0 0.0
    %1274 = vmatprep.subr.mxu0 0.0
    %1275 = vmatpush1.xpose.msra.mxu0 0.0
    %1276 = vmatprep.subr.mxu0 0.0
    %1277 = vmatpush1.xpose.msra.mxu0 0.0
    %1278 = vmatprep.subr.mxu0 0.0
    %1279 = vmatpush1.xpose.msra.mxu0 0.0
    %1280 = vmatprep.subr.mxu0 0.0
    %1281 = vmatpush1.xpose.msra.mxu0 0.0
    %1282 = vmatprep.subr.mxu0 0.0
    %1283 = vmatpush1.xpose.msra.mxu0 0.0
    %1284 = vmatprep.subr.mxu0 0.0
    %1285 = vmatpush1.xpose.msra.mxu0 0.0
    %1286 = vmatprep.subr.mxu0 0.0
    %1287 = vmatpush1.xpose.msra.mxu0 0.0
    %1288 = vmatprep.subr.mxu0 0.0
    %1289 = vmatpush1.xpose.msra.mxu0 0.0
    %1290 = vmatprep.subr.mxu0 0.0
    %1291 = vmatpush1.xpose.msra.mxu0 0.0
    %1292 = vmatprep.subr.mxu0 0.0
    %1293 = vmatpush1.xpose.msra.mxu0 0.0
    %1294 = vmatprep.subr.mxu0 0.0
    %1295 = vmatpush1.xpose.msra.mxu0 0.0
    %1296 = vmatprep.subr.mxu0 0.0
    %1297 = vmatpush1.xpose.msra.mxu0 0.0
    %1298 = vmatprep.subr.mxu0 0.0
    %1299 = vmatpush1.xpose.msra.mxu0 %v1268
    %1300 = vmatprep.subr.mxu0 0.0
    %1301 = vmatpush1.xpose.msra.mxu0 %v1266
    %1302 = vmatprep.subr.mxu0 0.0
    %1303 = vmatpush2.xpose.msra.mxu0 0.0
    %1304 = vmatprep.subr.mxu0 0.0
    %1305 = vmatpush2.xpose.msra.mxu0 0.0
    %1306 = vmatprep.subr.mxu0 0.0
    %1307 = vmatpush2.xpose.msra.mxu0 0.0
    %1308 = vmatprep.subr.mxu0 0.0
    %1309 = vmatpush2.xpose.msra.mxu0 0.0
    %1310 = vmatprep.subr.mxu0 0.0
    %1311 = vmatpush2.xpose.msra.mxu0 0.0
    %1312 = vmatprep.subr.mxu0 0.0
    %1313 = vmatpush2.xpose.msra.mxu0 0.0
    %1314 = vmatprep.subr.mxu0 0.0
    %1315 = vmatpush2.xpose.msra.mxu0 0.0
    %1316 = vmatprep.subr.mxu0 0.0
    %1317 = vmatpush2.xpose.msra.mxu0 0.0
    %1318 = vmatprep.subr.mxu0 0.0
    %1319 = vmatpush2.xpose.msra.mxu0 0.0
    %1320 = vmatprep.subr.mxu0 0.0
    %1321 = vmatpush2.xpose.msra.mxu0 0.0
    %1322 = vmatprep.subr.mxu0 0.0
    %1323 = vmatpush2.xpose.msra.mxu0 0.0
    %1324 = vmatprep.subr.mxu0 0.0
    %1325 = vmatpush2.xpose.msra.mxu0 0.0
    %1326 = vmatprep.subr.mxu0 0.0
    %1327 = vmatpush2.xpose.msra.mxu0 0.0
    %1328 = vmatprep.subr.mxu0 0.0
    %1329 = vmatpush2.xpose.msra.mxu0 0.0
    %1330 = vmatprep.subr.mxu0 0.0
    %1331 = vmatpush2.xpose.msra.mxu0 0.0
    %1332 = vmatprep.subr.mxu0 0.0
    %1333 = vmatpush2.xpose.msra.mxu0 0.0
    %1334 = vmatprep.mubr.f32.mxu0 0.0
    %1335 = vmatmul.mubr.f32.gmra.mxu0 %v1262
    %v1336 = vpop.f32.mrf.mxu0
    %v1337 = vadd.f32 0.0, %v1336
    %v1338 = vpop.f32.mrf.mxu0
    %1339 = vmatprep.mubr.f32.mxu0 0.0
    %1340 = vmatmul.mubr.f32.gmra.mxu0 %v1264
    %v1341 = vpop.f32.mrf.mxu0
    %v1342 = vadd.f32 0.0, %v1341
    %v1343 = vpop.f32.mrf.mxu0
    %1344 = vdwg.mxu0
    %v1345 = vsel %vm925, %v1337, -inf
    %1346 = vmax.xlane.f32.xlu0 %v1345
    %v1347 = vpop.xlane.xlu0 %1346
    %v1348 = vsel %vm929, %v1342, -inf
    %1349 = vmax.xlane.f32.xlu0 %v1348
    %v1350 = vpop.xlane.xlu0 %1349
    %v1351 = vsub.f32 %v1337, %v1347
    %v1352 = vsub.f32 %v1342, %v1350
    %v1353 = vmul.f32 %v1351, 1.442695
    %v1354 = vpow.pop %v1353
    %v1355 = vmul.f32 %v1352, 1.442695
    %v1356 = vpow.pop %v1355
    %v1357 = vsel %vm925, %v1354, 0.0
    %1358 = vadd.xlane.f32.xlu0 %v1357
    %v1359 = vpop.xlane.xlu0 %1358
    %v1360 = vsel %vm929, %v1356, 0.0
    %1361 = vadd.xlane.f32.xlu0 %v1360
    %v1362 = vpop.xlane.xlu0 %1361
    %v1363 = vrcp.pop %v1359
    %v1364 = vrcp.pop %v1362
    %v1365 = vmul.f32 %v1354, %v1363
    %v1366 = vmul.f32 %v1356, %v1364
    %1367 = vrot.lane.b32.xlu0 %v817, 64
    %v1368 = vpop.permute.xlu0 %1367
    %1369 = vrot.lane.b32.xlu0 %v822, 64
    %v1370 = vpop.permute.xlu0 %1369
    %v1373 = vsel %vm925, %v1365, 0
    %v1376 = vsel %vm925, %v1366, 0
    %v1378 = vsel %vm960, %v1370, 0
    %1380 = vmatprep.subr.mxu0 0.0
    %1381 = vmatpush1.msra.mxu0 0.0
    %1382 = vmatprep.subr.mxu0 0.0
    %1383 = vmatpush1.msra.mxu0 0.0
    %1384 = vmatprep.subr.mxu0 0.0
    %1385 = vmatpush1.msra.mxu0 0.0
    %1386 = vmatprep.subr.mxu0 0.0
    %1387 = vmatpush1.msra.mxu0 0.0
    %1388 = vmatprep.subr.mxu0 0.0
    %1389 = vmatpush1.msra.mxu0 0.0
    %1390 = vmatprep.subr.mxu0 0.0
    %1391 = vmatpush1.msra.mxu0 0.0
    %1392 = vmatprep.subr.mxu0 0.0
    %1393 = vmatpush1.msra.mxu0 0.0
    %1394 = vmatprep.subr.mxu0 0.0
    %1395 = vmatpush1.msra.mxu0 0.0
    %1396 = vmatprep.subr.mxu0 0.0
    %1397 = vmatpush1.msra.mxu0 0.0
    %1398 = vmatprep.subr.mxu0 0.0
    %1399 = vmatpush1.msra.mxu0 0.0
    %1400 = vmatprep.subr.mxu0 0.0
    %1401 = vmatpush1.msra.mxu0 0.0
    %1402 = vmatprep.subr.mxu0 0.0
    %1403 = vmatpush1.msra.mxu0 0.0
    %1404 = vmatprep.subr.mxu0 0.0
    %1405 = vmatpush1.msra.mxu0 0.0
    %1406 = vmatprep.subr.mxu0 0.0
    %1407 = vmatpush1.msra.mxu0 0.0
    %1408 = vmatprep.subr.mxu0 0.0
    %1409 = vmatpush1.msra.mxu0 %v1378
    %1410 = vmatprep.subr.mxu0 0.0
    %1411 = vmatpush1.msra.mxu0 %v1368
    %1412 = vmatprep.subr.mxu0 0.0
    %1413 = vmatpush2.msra.mxu0 0.0
    %1414 = vmatprep.subr.mxu0 0.0
    %1415 = vmatpush2.msra.mxu0 0.0
    %1416 = vmatprep.subr.mxu0 0.0
    %1417 = vmatpush2.msra.mxu0 0.0
    %1418 = vmatprep.subr.mxu0 0.0
    %1419 = vmatpush2.msra.mxu0 0.0
    %1420 = vmatprep.subr.mxu0 0.0
    %1421 = vmatpush2.msra.mxu0 0.0
    %1422 = vmatprep.subr.mxu0 0.0
    %1423 = vmatpush2.msra.mxu0 0.0
    %1424 = vmatprep.subr.mxu0 0.0
    %1425 = vmatpush2.msra.mxu0 0.0
    %1426 = vmatprep.subr.mxu0 0.0
    %1427 = vmatpush2.msra.mxu0 0.0
    %1428 = vmatprep.subr.mxu0 0.0
    %1429 = vmatpush2.msra.mxu0 0.0
    %1430 = vmatprep.subr.mxu0 0.0
    %1431 = vmatpush2.msra.mxu0 0.0
    %1432 = vmatprep.subr.mxu0 0.0
    %1433 = vmatpush2.msra.mxu0 0.0
    %1434 = vmatprep.subr.mxu0 0.0
    %1435 = vmatpush2.msra.mxu0 0.0
    %1436 = vmatprep.subr.mxu0 0.0
    %1437 = vmatpush2.msra.mxu0 0.0
    %1438 = vmatprep.subr.mxu0 0.0
    %1439 = vmatpush2.msra.mxu0 0.0
    %1440 = vmatprep.subr.mxu0 0.0
    %1441 = vmatpush2.msra.mxu0 0.0
    %1442 = vmatprep.subr.mxu0 0.0
    %1443 = vmatpush2.msra.mxu0 0.0
    %1444 = vmatprep.mubr.f32.mxu0 0.0
    %1445 = vmatmul.mubr.f32.gmra.mxu0 %v1373
    %v1446 = vpop.f32.mrf.mxu0
    %v1447 = vadd.f32 0.0, %v1446
    %v1448 = vpop.f32.mrf.mxu0
    %1449 = vmatprep.mubr.f32.mxu0 0.0
    %1450 = vmatmul.mubr.f32.gmra.mxu0 %v1376
    %v1451 = vpop.f32.mrf.mxu0
    %v1452 = vadd.f32 0.0, %v1451
    %v1453 = vpop.f32.mrf.mxu0
    %1454 = vdwg.mxu0
    %1457 = vrot.lane.b32.xlu0 %v1447, 16
    %v1458 = vpop.permute.xlu0 %1457
    %1459 = vrot.lane.b32.xlu0 %v1452, 16
    %v1460 = vpop.permute.xlu0 %1459
    %vm1463 = vcmask 195712
    %1464 = vst.msk [vmem:[#allocation3] sm:$0xff] %vm1463, %v1458
    %vm1465 = vcmask 192640
    %1466 = vst.msk [vmem:[#allocation3 + $0x8] sm:$0x1f] %vm1465, %v1460
    %1467 = vrot.lane.b32.xlu0 %v817, 56
    %v1468 = vpop.permute.xlu0 %1467
    %1469 = vrot.lane.b32.xlu0 %v822, 56
    %v1470 = vpop.permute.xlu0 %1469
    %1471 = vrot.lane.b32.xlu0 %v817, 48
    %v1472 = vpop.permute.xlu0 %1471
    %1473 = vrot.lane.b32.xlu0 %v822, 48
    %v1474 = vpop.permute.xlu0 %1473
    %v1475 = vsel %vm841, %v1468, 0
    %v1477 = vsel %vm841, %v1470, 0
    %v1479 = vsel %vm841, %v1472, 0
    %v1481 = vsel %vm841, %v1474, 0
    %1483 = vmatprep.subr.mxu0 0.0
    %1484 = vmatpush1.xpose.msra.mxu0 0.0
    %1485 = vmatprep.subr.mxu0 0.0
    %1486 = vmatpush1.xpose.msra.mxu0 0.0
    %1487 = vmatprep.subr.mxu0 0.0
    %1488 = vmatpush1.xpose.msra.mxu0 0.0
    %1489 = vmatprep.subr.mxu0 0.0
    %1490 = vmatpush1.xpose.msra.mxu0 0.0
    %1491 = vmatprep.subr.mxu0 0.0
    %1492 = vmatpush1.xpose.msra.mxu0 0.0
    %1493 = vmatprep.subr.mxu0 0.0
    %1494 = vmatpush1.xpose.msra.mxu0 0.0
    %1495 = vmatprep.subr.mxu0 0.0
    %1496 = vmatpush1.xpose.msra.mxu0 0.0
    %1497 = vmatprep.subr.mxu0 0.0
    %1498 = vmatpush1.xpose.msra.mxu0 0.0
    %1499 = vmatprep.subr.mxu0 0.0
    %1500 = vmatpush1.xpose.msra.mxu0 0.0
    %1501 = vmatprep.subr.mxu0 0.0
    %1502 = vmatpush1.xpose.msra.mxu0 0.0
    %1503 = vmatprep.subr.mxu0 0.0
    %1504 = vmatpush1.xpose.msra.mxu0 0.0
    %1505 = vmatprep.subr.mxu0 0.0
    %1506 = vmatpush1.xpose.msra.mxu0 0.0
    %1507 = vmatprep.subr.mxu0 0.0
    %1508 = vmatpush1.xpose.msra.mxu0 0.0
    %1509 = vmatprep.subr.mxu0 0.0
    %1510 = vmatpush1.xpose.msra.mxu0 0.0
    %1511 = vmatprep.subr.mxu0 0.0
    %1512 = vmatpush1.xpose.msra.mxu0 %v1481
    %1513 = vmatprep.subr.mxu0 0.0
    %1514 = vmatpush1.xpose.msra.mxu0 %v1479
    %1515 = vmatprep.subr.mxu0 0.0
    %1516 = vmatpush2.xpose.msra.mxu0 0.0
    %1517 = vmatprep.subr.mxu0 0.0
    %1518 = vmatpush2.xpose.msra.mxu0 0.0
    %1519 = vmatprep.subr.mxu0 0.0
    %1520 = vmatpush2.xpose.msra.mxu0 0.0
    %1521 = vmatprep.subr.mxu0 0.0
    %1522 = vmatpush2.xpose.msra.mxu0 0.0
    %1523 = vmatprep.subr.mxu0 0.0
    %1524 = vmatpush2.xpose.msra.mxu0 0.0
    %1525 = vmatprep.subr.mxu0 0.0
    %1526 = vmatpush2.xpose.msra.mxu0 0.0
    %1527 = vmatprep.subr.mxu0 0.0
    %1528 = vmatpush2.xpose.msra.mxu0 0.0
    %1529 = vmatprep.subr.mxu0 0.0
    %1530 = vmatpush2.xpose.msra.mxu0 0.0
    %1531 = vmatprep.subr.mxu0 0.0
    %1532 = vmatpush2.xpose.msra.mxu0 0.0
    %1533 = vmatprep.subr.mxu0 0.0
    %1534 = vmatpush2.xpose.msra.mxu0 0.0
    %1535 = vmatprep.subr.mxu0 0.0
    %1536 = vmatpush2.xpose.msra.mxu0 0.0
    %1537 = vmatprep.subr.mxu0 0.0
    %1538 = vmatpush2.xpose.msra.mxu0 0.0
    %1539 = vmatprep.subr.mxu0 0.0
    %1540 = vmatpush2.xpose.msra.mxu0 0.0
    %1541 = vmatprep.subr.mxu0 0.0
    %1542 = vmatpush2.xpose.msra.mxu0 0.0
    %1543 = vmatprep.subr.mxu0 0.0
    %1544 = vmatpush2.xpose.msra.mxu0 0.0
    %1545 = vmatprep.subr.mxu0 0.0
    %1546 = vmatpush2.xpose.msra.mxu0 0.0
    %1547 = vmatprep.mubr.f32.mxu0 0.0
    %1548 = vmatmul.mubr.f32.gmra.mxu0 %v1475
    %v1549 = vpop.f32.mrf.mxu0
    %v1550 = vadd.f32 0.0, %v1549
    %v1551 = vpop.f32.mrf.mxu0
    %1552 = vmatprep.mubr.f32.mxu0 0.0
    %1553 = vmatmul.mubr.f32.gmra.mxu0 %v1477
    %v1554 = vpop.f32.mrf.mxu0
    %v1555 = vadd.f32 0.0, %v1554
    %v1556 = vpop.f32.mrf.mxu0
    %1557 = vdwg.mxu0
    %v1558 = vsel %vm925, %v1550, -inf
    %1559 = vmax.xlane.f32.xlu0 %v1558
    %v1560 = vpop.xlane.xlu0 %1559
    %v1561 = vsel %vm929, %v1555, -inf
    %1562 = vmax.xlane.f32.xlu0 %v1561
    %v1563 = vpop.xlane.xlu0 %1562
    %v1564 = vsub.f32 %v1550, %v1560
    %v1565 = vsub.f32 %v1555, %v1563
    %v1566 = vmul.f32 %v1564, 1.442695
    %v1567 = vpow.pop %v1566
    %v1568 = vmul.f32 %v1565, 1.442695
    %v1569 = vpow.pop %v1568
    %v1570 = vsel %vm925, %v1567, 0.0
    %1571 = vadd.xlane.f32.xlu0 %v1570
    %v1572 = vpop.xlane.xlu0 %1571
    %v1573 = vsel %vm929, %v1569, 0.0
    %1574 = vadd.xlane.f32.xlu0 %v1573
    %v1575 = vpop.xlane.xlu0 %1574
    %v1576 = vrcp.pop %v1572
    %v1577 = vrcp.pop %v1575
    %v1578 = vmul.f32 %v1567, %v1576
    %v1579 = vmul.f32 %v1569, %v1577
    %1580 = vrot.lane.b32.xlu0 %v817, 40
    %v1581 = vpop.permute.xlu0 %1580
    %1582 = vrot.lane.b32.xlu0 %v822, 40
    %v1583 = vpop.permute.xlu0 %1582
    %v1586 = vsel %vm925, %v1578, 0
    %v1589 = vsel %vm925, %v1579, 0
    %v1591 = vsel %vm960, %v1583, 0
    %1593 = vmatprep.subr.mxu0 0.0
    %1594 = vmatpush1.msra.mxu0 0.0
    %1595 = vmatprep.subr.mxu0 0.0
    %1596 = vmatpush1.msra.mxu0 0.0
    %1597 = vmatprep.subr.mxu0 0.0
    %1598 = vmatpush1.msra.mxu0 0.0
    %1599 = vmatprep.subr.mxu0 0.0
    %1600 = vmatpush1.msra.mxu0 0.0
    %1601 = vmatprep.subr.mxu0 0.0
    %1602 = vmatpush1.msra.mxu0 0.0
    %1603 = vmatprep.subr.mxu0 0.0
    %1604 = vmatpush1.msra.mxu0 0.0
    %1605 = vmatprep.subr.mxu0 0.0
    %1606 = vmatpush1.msra.mxu0 0.0
    %1607 = vmatprep.subr.mxu0 0.0
    %1608 = vmatpush1.msra.mxu0 0.0
    %1609 = vmatprep.subr.mxu0 0.0
    %1610 = vmatpush1.msra.mxu0 0.0
    %1611 = vmatprep.subr.mxu0 0.0
    %1612 = vmatpush1.msra.mxu0 0.0
    %1613 = vmatprep.subr.mxu0 0.0
    %1614 = vmatpush1.msra.mxu0 0.0
    %1615 = vmatprep.subr.mxu0 0.0
    %1616 = vmatpush1.msra.mxu0 0.0
    %1617 = vmatprep.subr.mxu0 0.0
    %1618 = vmatpush1.msra.mxu0 0.0
    %1619 = vmatprep.subr.mxu0 0.0
    %1620 = vmatpush1.msra.mxu0 0.0
    %1621 = vmatprep.subr.mxu0 0.0
    %1622 = vmatpush1.msra.mxu0 %v1591
    %1623 = vmatprep.subr.mxu0 0.0
    %1624 = vmatpush1.msra.mxu0 %v1581
    %1625 = vmatprep.subr.mxu0 0.0
    %1626 = vmatpush2.msra.mxu0 0.0
    %1627 = vmatprep.subr.mxu0 0.0
    %1628 = vmatpush2.msra.mxu0 0.0
    %1629 = vmatprep.subr.mxu0 0.0
    %1630 = vmatpush2.msra.mxu0 0.0
    %1631 = vmatprep.subr.mxu0 0.0
    %1632 = vmatpush2.msra.mxu0 0.0
    %1633 = vmatprep.subr.mxu0 0.0
    %1634 = vmatpush2.msra.mxu0 0.0
    %1635 = vmatprep.subr.mxu0 0.0
    %1636 = vmatpush2.msra.mxu0 0.0
    %1637 = vmatprep.subr.mxu0 0.0
    %1638 = vmatpush2.msra.mxu0 0.0
    %1639 = vmatprep.subr.mxu0 0.0
    %1640 = vmatpush2.msra.mxu0 0.0
    %1641 = vmatprep.subr.mxu0 0.0
    %1642 = vmatpush2.msra.mxu0 0.0
    %1643 = vmatprep.subr.mxu0 0.0
    %1644 = vmatpush2.msra.mxu0 0.0
    %1645 = vmatprep.subr.mxu0 0.0
    %1646 = vmatpush2.msra.mxu0 0.0
    %1647 = vmatprep.subr.mxu0 0.0
    %1648 = vmatpush2.msra.mxu0 0.0
    %1649 = vmatprep.subr.mxu0 0.0
    %1650 = vmatpush2.msra.mxu0 0.0
    %1651 = vmatprep.subr.mxu0 0.0
    %1652 = vmatpush2.msra.mxu0 0.0
    %1653 = vmatprep.subr.mxu0 0.0
    %1654 = vmatpush2.msra.mxu0 0.0
    %1655 = vmatprep.subr.mxu0 0.0
    %1656 = vmatpush2.msra.mxu0 0.0
    %1657 = vmatprep.mubr.f32.mxu0 0.0
    %1658 = vmatmul.mubr.f32.gmra.mxu0 %v1586
    %v1659 = vpop.f32.mrf.mxu0
    %v1660 = vadd.f32 0.0, %v1659
    %v1661 = vpop.f32.mrf.mxu0
    %1662 = vmatprep.mubr.f32.mxu0 0.0
    %1663 = vmatmul.mubr.f32.gmra.mxu0 %v1589
    %v1664 = vpop.f32.mrf.mxu0
    %v1665 = vadd.f32 0.0, %v1664
    %v1666 = vpop.f32.mrf.mxu0
    %1667 = vdwg.mxu0
    %1670 = vrot.lane.b32.xlu0 %v1660, 24
    %v1671 = vpop.permute.xlu0 %1670
    %1672 = vrot.lane.b32.xlu0 %v1665, 24
    %v1673 = vpop.permute.xlu0 %1672
    %vm1676 = vcmask 261312
    %1677 = vst.msk [vmem:[#allocation3] sm:$0xff] %vm1676, %v1671
    %vm1678 = vcmask 258240
    %1679 = vst.msk [vmem:[#allocation3 + $0x8] sm:$0x1f] %vm1678, %v1673
    %1680 = vst.msk [vmem:[%s12] sm:$0xff] %vm925, %v947
    %1681 = vst.msk [vmem:[%s12 + $0x8] sm:$0x1f] %vm929, %v948
    %1682 = vst.msk [vmem:[%s12 + $0x10] sm:$0xff] %vm925, %v1152
    %1683 = vst.msk [vmem:[%s12 + $0x18] sm:$0x1f] %vm929, %v1153
    %1684 = vst.msk [vmem:[%s12 + $0x20] sm:$0xff] %vm925, %v1365
    %1685 = vst.msk [vmem:[%s12 + $0x28] sm:$0x1f] %vm929, %v1366
    %1686 = vst.msk [vmem:[%s12 + $0x30] sm:$0xff] %vm925, %v1578
    %1687 = vst.msk [vmem:[%s12 + $0x38] sm:$0x1f] %vm929, %v1579
    %vm1690 = vcmask 1042432
    %v1691 = vrot.slane %v822, 5
    %v1692 = vrot.slane %v827, 5
    %v1693 = vsel %vm1690, %v1691, %v1692
    %v1694 = vrot.slane %v832, 5
    %v1695 = vsel %vm1690, %v1692, %v1694
    %1696 = vrot.lane.b32.xlu0 %v1693, 120
    %v1697 = vpop.permute.xlu0 %1696
    %1698 = vrot.lane.b32.xlu0 %v1695, 120
    %v1699 = vpop.permute.xlu0 %1698
    %v1700 = vsel %vm841, %v1693, 0
    %v1702 = vsel %vm841, %v1695, 0
    %v1704 = vsel %vm841, %v1697, 0
    %v1706 = vsel %vm841, %v1699, 0
    %1708 = vmatprep.subr.mxu0 0.0
    %1709 = vmatpush1.xpose.msra.mxu0 0.0
    %1710 = vmatprep.subr.mxu0 0.0
    %1711 = vmatpush1.xpose.msra.mxu0 0.0
    %1712 = vmatprep.subr.mxu0 0.0
    %1713 = vmatpush1.xpose.msra.mxu0 0.0
    %1714 = vmatprep.subr.mxu0 0.0
    %1715 = vmatpush1.xpose.msra.mxu0 0.0
    %1716 = vmatprep.subr.mxu0 0.0
    %1717 = vmatpush1.xpose.msra.mxu0 0.0
    %1718 = vmatprep.subr.mxu0 0.0
    %1719 = vmatpush1.xpose.msra.mxu0 0.0
    %1720 = vmatprep.subr.mxu0 0.0
    %1721 = vmatpush1.xpose.msra.mxu0 0.0
    %1722 = vmatprep.subr.mxu0 0.0
    %1723 = vmatpush1.xpose.msra.mxu0 0.0
    %1724 = vmatprep.subr.mxu0 0.0
    %1725 = vmatpush1.xpose.msra.mxu0 0.0
    %1726 = vmatprep.subr.mxu0 0.0
    %1727 = vmatpush1.xpose.msra.mxu0 0.0
    %1728 = vmatprep.subr.mxu0 0.0
    %1729 = vmatpush1.xpose.msra.mxu0 0.0
    %1730 = vmatprep.subr.mxu0 0.0
    %1731 = vmatpush1.xpose.msra.mxu0 0.0
    %1732 = vmatprep.subr.mxu0 0.0
    %1733 = vmatpush1.xpose.msra.mxu0 0.0
    %1734 = vmatprep.subr.mxu0 0.0
    %1735 = vmatpush1.xpose.msra.mxu0 0.0
    %1736 = vmatprep.subr.mxu0 0.0
    %1737 = vmatpush1.xpose.msra.mxu0 %v1706
    %1738 = vmatprep.subr.mxu0 0.0
    %1739 = vmatpush1.xpose.msra.mxu0 %v1704
    %1740 = vmatprep.subr.mxu0 0.0
    %1741 = vmatpush2.xpose.msra.mxu0 0.0
    %1742 = vmatprep.subr.mxu0 0.0
    %1743 = vmatpush2.xpose.msra.mxu0 0.0
    %1744 = vmatprep.subr.mxu0 0.0
    %1745 = vmatpush2.xpose.msra.mxu0 0.0
    %1746 = vmatprep.subr.mxu0 0.0
    %1747 = vmatpush2.xpose.msra.mxu0 0.0
    %1748 = vmatprep.subr.mxu0 0.0
    %1749 = vmatpush2.xpose.msra.mxu0 0.0
    %1750 = vmatprep.subr.mxu0 0.0
    %1751 = vmatpush2.xpose.msra.mxu0 0.0
    %1752 = vmatprep.subr.mxu0 0.0
    %1753 = vmatpush2.xpose.msra.mxu0 0.0
    %1754 = vmatprep.subr.mxu0 0.0
    %1755 = vmatpush2.xpose.msra.mxu0 0.0
    %1756 = vmatprep.subr.mxu0 0.0
    %1757 = vmatpush2.xpose.msra.mxu0 0.0
    %1758 = vmatprep.subr.mxu0 0.0
    %1759 = vmatpush2.xpose.msra.mxu0 0.0
    %1760 = vmatprep.subr.mxu0 0.0
    %1761 = vmatpush2.xpose.msra.mxu0 0.0
    %1762 = vmatprep.subr.mxu0 0.0
    %1763 = vmatpush2.xpose.msra.mxu0 0.0
    %1764 = vmatprep.subr.mxu0 0.0
    %1765 = vmatpush2.xpose.msra.mxu0 0.0
    %1766 = vmatprep.subr.mxu0 0.0
    %1767 = vmatpush2.xpose.msra.mxu0 0.0
    %1768 = vmatprep.subr.mxu0 0.0
    %1769 = vmatpush2.xpose.msra.mxu0 0.0
    %1770 = vmatprep.subr.mxu0 0.0
    %1771 = vmatpush2.xpose.msra.mxu0 0.0
    %1772 = vmatprep.mubr.f32.mxu0 0.0
    %1773 = vmatmul.mubr.f32.gmra.mxu0 %v1700
    %v1774 = vpop.f32.mrf.mxu0
    %v1775 = vadd.f32 0.0, %v1774
    %v1776 = vpop.f32.mrf.mxu0
    %1777 = vmatprep.mubr.f32.mxu0 0.0
    %1778 = vmatmul.mubr.f32.gmra.mxu0 %v1702
    %v1779 = vpop.f32.mrf.mxu0
    %v1780 = vadd.f32 0.0, %v1779
    %v1781 = vpop.f32.mrf.mxu0
    %1782 = vdwg.mxu0
    %v1783 = vsel %vm925, %v1775, -inf
    %1784 = vmax.xlane.f32.xlu0 %v1783
    %v1785 = vpop.xlane.xlu0 %1784
    %v1786 = vsel %vm929, %v1780, -inf
    %1787 = vmax.xlane.f32.xlu0 %v1786
    %v1788 = vpop.xlane.xlu0 %1787
    %v1789 = vsub.f32 %v1775, %v1785
    %v1790 = vsub.f32 %v1780, %v1788
    %v1791 = vmul.f32 %v1789, 1.442695
    %v1792 = vpow.pop %v1791
    %v1793 = vmul.f32 %v1790, 1.442695
    %v1794 = vpow.pop %v1793
    %v1795 = vsel %vm925, %v1792, 0.0
    %1796 = vadd.xlane.f32.xlu0 %v1795
    %v1797 = vpop.xlane.xlu0 %1796
    %v1798 = vsel %vm929, %v1794, 0.0
    %1799 = vadd.xlane.f32.xlu0 %v1798
    %v1800 = vpop.xlane.xlu0 %1799
    %v1801 = vrcp.pop %v1797
    %v1802 = vrcp.pop %v1800
    %v1803 = vmul.f32 %v1792, %v1801
    %v1804 = vmul.f32 %v1794, %v1802
    %1805 = vrot.lane.b32.xlu0 %v1693, 112
    %v1806 = vpop.permute.xlu0 %1805
    %1807 = vrot.lane.b32.xlu0 %v1695, 112
    %v1808 = vpop.permute.xlu0 %1807
    %v1811 = vsel %vm925, %v1803, 0
    %v1814 = vsel %vm925, %v1804, 0
    %v1816 = vsel %vm960, %v1808, 0
    %1818 = vmatprep.subr.mxu0 0.0
    %1819 = vmatpush1.msra.mxu0 0.0
    %1820 = vmatprep.subr.mxu0 0.0
    %1821 = vmatpush1.msra.mxu0 0.0
    %1822 = vmatprep.subr.mxu0 0.0
    %1823 = vmatpush1.msra.mxu0 0.0
    %1824 = vmatprep.subr.mxu0 0.0
    %1825 = vmatpush1.msra.mxu0 0.0
    %1826 = vmatprep.subr.mxu0 0.0
    %1827 = vmatpush1.msra.mxu0 0.0
    %1828 = vmatprep.subr.mxu0 0.0
    %1829 = vmatpush1.msra.mxu0 0.0
    %1830 = vmatprep.subr.mxu0 0.0
    %1831 = vmatpush1.msra.mxu0 0.0
    %1832 = vmatprep.subr.mxu0 0.0
    %1833 = vmatpush1.msra.mxu0 0.0
    %1834 = vmatprep.subr.mxu0 0.0
    %1835 = vmatpush1.msra.mxu0 0.0
    %1836 = vmatprep.subr.mxu0 0.0
    %1837 = vmatpush1.msra.mxu0 0.0
    %1838 = vmatprep.subr.mxu0 0.0
    %1839 = vmatpush1.msra.mxu0 0.0
    %1840 = vmatprep.subr.mxu0 0.0
    %1841 = vmatpush1.msra.mxu0 0.0
    %1842 = vmatprep.subr.mxu0 0.0
    %1843 = vmatpush1.msra.mxu0 0.0
    %1844 = vmatprep.subr.mxu0 0.0
    %1845 = vmatpush1.msra.mxu0 0.0
    %1846 = vmatprep.subr.mxu0 0.0
    %1847 = vmatpush1.msra.mxu0 %v1816
    %1848 = vmatprep.subr.mxu0 0.0
    %1849 = vmatpush1.msra.mxu0 %v1806
    %1850 = vmatprep.subr.mxu0 0.0
    %1851 = vmatpush2.msra.mxu0 0.0
    %1852 = vmatprep.subr.mxu0 0.0
    %1853 = vmatpush2.msra.mxu0 0.0
    %1854 = vmatprep.subr.mxu0 0.0
    %1855 = vmatpush2.msra.mxu0 0.0
    %1856 = vmatprep.subr.mxu0 0.0
    %1857 = vmatpush2.msra.mxu0 0.0
    %1858 = vmatprep.subr.mxu0 0.0
    %1859 = vmatpush2.msra.mxu0 0.0
    %1860 = vmatprep.subr.mxu0 0.0
    %1861 = vmatpush2.msra.mxu0 0.0
    %1862 = vmatprep.subr.mxu0 0.0
    %1863 = vmatpush2.msra.mxu0 0.0
    %1864 = vmatprep.subr.mxu0 0.0
    %1865 = vmatpush2.msra.mxu0 0.0
    %1866 = vmatprep.subr.mxu0 0.0
    %1867 = vmatpush2.msra.mxu0 0.0
    %1868 = vmatprep.subr.mxu0 0.0
    %1869 = vmatpush2.msra.mxu0 0.0
    %1870 = vmatprep.subr.mxu0 0.0
    %1871 = vmatpush2.msra.mxu0 0.0
    %1872 = vmatprep.subr.mxu0 0.0
    %1873 = vmatpush2.msra.mxu0 0.0
    %1874 = vmatprep.subr.mxu0 0.0
    %1875 = vmatpush2.msra.mxu0 0.0
    %1876 = vmatprep.subr.mxu0 0.0
    %1877 = vmatpush2.msra.mxu0 0.0
    %1878 = vmatprep.subr.mxu0 0.0
    %1879 = vmatpush2.msra.mxu0 0.0
    %1880 = vmatprep.subr.mxu0 0.0
    %1881 = vmatpush2.msra.mxu0 0.0
    %1882 = vmatprep.mubr.f32.mxu0 0.0
    %1883 = vmatmul.mubr.f32.gmra.mxu0 %v1811
    %v1884 = vpop.f32.mrf.mxu0
    %v1885 = vadd.f32 0.0, %v1884
    %v1886 = vpop.f32.mrf.mxu0
    %1887 = vmatprep.mubr.f32.mxu0 0.0
    %1888 = vmatmul.mubr.f32.gmra.mxu0 %v1814
    %v1889 = vpop.f32.mrf.mxu0
    %v1890 = vadd.f32 0.0, %v1889
    %v1891 = vpop.f32.mrf.mxu0
    %1892 = vdwg.mxu0
    %1893 = vst.msk [vmem:[#allocation3 + $0xd] sm:$0xff] %vm841, %v1885
    %1894 = vst.msk [vmem:[#allocation3 + $0x15] sm:$0x1f] %vm1039, %v1890
    %1895 = vrot.lane.b32.xlu0 %v1693, 104
    %v1896 = vpop.permute.xlu0 %1895
    %1897 = vrot.lane.b32.xlu0 %v1695, 104
    %v1898 = vpop.permute.xlu0 %1897
    %1899 = vrot.lane.b32.xlu0 %v1693, 96
    %v1900 = vpop.permute.xlu0 %1899
    %1901 = vrot.lane.b32.xlu0 %v1695, 96
    %v1902 = vpop.permute.xlu0 %1901
    %v1903 = vsel %vm841, %v1896, 0
    %v1905 = vsel %vm841, %v1898, 0
    %v1907 = vsel %vm841, %v1900, 0
    %v1909 = vsel %vm841, %v1902, 0
    %1911 = vmatprep.subr.mxu0 0.0
    %1912 = vmatpush1.xpose.msra.mxu0 0.0
    %1913 = vmatprep.subr.mxu0 0.0
    %1914 = vmatpush1.xpose.msra.mxu0 0.0
    %1915 = vmatprep.subr.mxu0 0.0
    %1916 = vmatpush1.xpose.msra.mxu0 0.0
    %1917 = vmatprep.subr.mxu0 0.0
    %1918 = vmatpush1.xpose.msra.mxu0 0.0
    %1919 = vmatprep.subr.mxu0 0.0
    %1920 = vmatpush1.xpose.msra.mxu0 0.0
    %1921 = vmatprep.subr.mxu0 0.0
    %1922 = vmatpush1.xpose.msra.mxu0 0.0
    %1923 = vmatprep.subr.mxu0 0.0
    %1924 = vmatpush1.xpose.msra.mxu0 0.0
    %1925 = vmatprep.subr.mxu0 0.0
    %1926 = vmatpush1.xpose.msra.mxu0 0.0
    %1927 = vmatprep.subr.mxu0 0.0
    %1928 = vmatpush1.xpose.msra.mxu0 0.0
    %1929 = vmatprep.subr.mxu0 0.0
    %1930 = vmatpush1.xpose.msra.mxu0 0.0
    %1931 = vmatprep.subr.mxu0 0.0
    %1932 = vmatpush1.xpose.msra.mxu0 0.0
    %1933 = vmatprep.subr.mxu0 0.0
    %1934 = vmatpush1.xpose.msra.mxu0 0.0
    %1935 = vmatprep.subr.mxu0 0.0
    %1936 = vmatpush1.xpose.msra.mxu0 0.0
    %1937 = vmatprep.subr.mxu0 0.0
    %1938 = vmatpush1.xpose.msra.mxu0 0.0
    %1939 = vmatprep.subr.mxu0 0.0
    %1940 = vmatpush1.xpose.msra.mxu0 %v1909
    %1941 = vmatprep.subr.mxu0 0.0
    %1942 = vmatpush1.xpose.msra.mxu0 %v1907
    %1943 = vmatprep.subr.mxu0 0.0
    %1944 = vmatpush2.xpose.msra.mxu0 0.0
    %1945 = vmatprep.subr.mxu0 0.0
    %1946 = vmatpush2.xpose.msra.mxu0 0.0
    %1947 = vmatprep.subr.mxu0 0.0
    %1948 = vmatpush2.xpose.msra.mxu0 0.0
    %1949 = vmatprep.subr.mxu0 0.0
    %1950 = vmatpush2.xpose.msra.mxu0 0.0
    %1951 = vmatprep.subr.mxu0 0.0
    %1952 = vmatpush2.xpose.msra.mxu0 0.0
    %1953 = vmatprep.subr.mxu0 0.0
    %1954 = vmatpush2.xpose.msra.mxu0 0.0
    %1955 = vmatprep.subr.mxu0 0.0
    %1956 = vmatpush2.xpose.msra.mxu0 0.0
    %1957 = vmatprep.subr.mxu0 0.0
    %1958 = vmatpush2.xpose.msra.mxu0 0.0
    %1959 = vmatprep.subr.mxu0 0.0
    %1960 = vmatpush2.xpose.msra.mxu0 0.0
    %1961 = vmatprep.subr.mxu0 0.0
    %1962 = vmatpush2.xpose.msra.mxu0 0.0
    %1963 = vmatprep.subr.mxu0 0.0
    %1964 = vmatpush2.xpose.msra.mxu0 0.0
    %1965 = vmatprep.subr.mxu0 0.0
    %1966 = vmatpush2.xpose.msra.mxu0 0.0
    %1967 = vmatprep.subr.mxu0 0.0
    %1968 = vmatpush2.xpose.msra.mxu0 0.0
    %1969 = vmatprep.subr.mxu0 0.0
    %1970 = vmatpush2.xpose.msra.mxu0 0.0
    %1971 = vmatprep.subr.mxu0 0.0
    %1972 = vmatpush2.xpose.msra.mxu0 0.0
    %1973 = vmatprep.subr.mxu0 0.0
    %1974 = vmatpush2.xpose.msra.mxu0 0.0
    %1975 = vmatprep.mubr.f32.mxu0 0.0
    %1976 = vmatmul.mubr.f32.gmra.mxu0 %v1903
    %v1977 = vpop.f32.mrf.mxu0
    %v1978 = vadd.f32 0.0, %v1977
    %v1979 = vpop.f32.mrf.mxu0
    %1980 = vmatprep.mubr.f32.mxu0 0.0
    %1981 = vmatmul.mubr.f32.gmra.mxu0 %v1905
    %v1982 = vpop.f32.mrf.mxu0
    %v1983 = vadd.f32 0.0, %v1982
    %v1984 = vpop.f32.mrf.mxu0
    %1985 = vdwg.mxu0
    %v1986 = vsel %vm925, %v1978, -inf
    %1987 = vmax.xlane.f32.xlu0 %v1986
    %v1988 = vpop.xlane.xlu0 %1987
    %v1989 = vsel %vm929, %v1983, -inf
    %1990 = vmax.xlane.f32.xlu0 %v1989
    %v1991 = vpop.xlane.xlu0 %1990
    %v1992 = vsub.f32 %v1978, %v1988
    %v1993 = vsub.f32 %v1983, %v1991
    %v1994 = vmul.f32 %v1992, 1.442695
    %v1995 = vpow.pop %v1994
    %v1996 = vmul.f32 %v1993, 1.442695
    %v1997 = vpow.pop %v1996
    %v1998 = vsel %vm925, %v1995, 0.0
    %1999 = vadd.xlane.f32.xlu0 %v1998
    %v2000 = vpop.xlane.xlu0 %1999
    %v2001 = vsel %vm929, %v1997, 0.0
    %2002 = vadd.xlane.f32.xlu0 %v2001
    %v2003 = vpop.xlane.xlu0 %2002
    %v2004 = vrcp.pop %v2000
    %v2005 = vrcp.pop %v2003
    %v2006 = vmul.f32 %v1995, %v2004
    %v2007 = vmul.f32 %v1997, %v2005
    %2008 = vrot.lane.b32.xlu0 %v1693, 88
    %v2009 = vpop.permute.xlu0 %2008
    %2010 = vrot.lane.b32.xlu0 %v1695, 88
    %v2011 = vpop.permute.xlu0 %2010
    %v2014 = vsel %vm925, %v2006, 0
    %v2017 = vsel %vm925, %v2007, 0
    %v2019 = vsel %vm960, %v2011, 0
    %2021 = vmatprep.subr.mxu0 0.0
    %2022 = vmatpush1.msra.mxu0 0.0
    %2023 = vmatprep.subr.mxu0 0.0
    %2024 = vmatpush1.msra.mxu0 0.0
    %2025 = vmatprep.subr.mxu0 0.0
    %2026 = vmatpush1.msra.mxu0 0.0
    %2027 = vmatprep.subr.mxu0 0.0
    %2028 = vmatpush1.msra.mxu0 0.0
    %2029 = vmatprep.subr.mxu0 0.0
    %2030 = vmatpush1.msra.mxu0 0.0
    %2031 = vmatprep.subr.mxu0 0.0
    %2032 = vmatpush1.msra.mxu0 0.0
    %2033 = vmatprep.subr.mxu0 0.0
    %2034 = vmatpush1.msra.mxu0 0.0
    %2035 = vmatprep.subr.mxu0 0.0
    %2036 = vmatpush1.msra.mxu0 0.0
    %2037 = vmatprep.subr.mxu0 0.0
    %2038 = vmatpush1.msra.mxu0 0.0
    %2039 = vmatprep.subr.mxu0 0.0
    %2040 = vmatpush1.msra.mxu0 0.0
    %2041 = vmatprep.subr.mxu0 0.0
    %2042 = vmatpush1.msra.mxu0 0.0
    %2043 = vmatprep.subr.mxu0 0.0
    %2044 = vmatpush1.msra.mxu0 0.0
    %2045 = vmatprep.subr.mxu0 0.0
    %2046 = vmatpush1.msra.mxu0 0.0
    %2047 = vmatprep.subr.mxu0 0.0
    %2048 = vmatpush1.msra.mxu0 0.0
    %2049 = vmatprep.subr.mxu0 0.0
    %2050 = vmatpush1.msra.mxu0 %v2019
    %2051 = vmatprep.subr.mxu0 0.0
    %2052 = vmatpush1.msra.mxu0 %v2009
    %2053 = vmatprep.subr.mxu0 0.0
    %2054 = vmatpush2.msra.mxu0 0.0
    %2055 = vmatprep.subr.mxu0 0.0
    %2056 = vmatpush2.msra.mxu0 0.0
    %2057 = vmatprep.subr.mxu0 0.0
    %2058 = vmatpush2.msra.mxu0 0.0
    %2059 = vmatprep.subr.mxu0 0.0
    %2060 = vmatpush2.msra.mxu0 0.0
    %2061 = vmatprep.subr.mxu0 0.0
    %2062 = vmatpush2.msra.mxu0 0.0
    %2063 = vmatprep.subr.mxu0 0.0
    %2064 = vmatpush2.msra.mxu0 0.0
    %2065 = vmatprep.subr.mxu0 0.0
    %2066 = vmatpush2.msra.mxu0 0.0
    %2067 = vmatprep.subr.mxu0 0.0
    %2068 = vmatpush2.msra.mxu0 0.0
    %2069 = vmatprep.subr.mxu0 0.0
    %2070 = vmatpush2.msra.mxu0 0.0
    %2071 = vmatprep.subr.mxu0 0.0
    %2072 = vmatpush2.msra.mxu0 0.0
    %2073 = vmatprep.subr.mxu0 0.0
    %2074 = vmatpush2.msra.mxu0 0.0
    %2075 = vmatprep.subr.mxu0 0.0
    %2076 = vmatpush2.msra.mxu0 0.0
    %2077 = vmatprep.subr.mxu0 0.0
    %2078 = vmatpush2.msra.mxu0 0.0
    %2079 = vmatprep.subr.mxu0 0.0
    %2080 = vmatpush2.msra.mxu0 0.0
    %2081 = vmatprep.subr.mxu0 0.0
    %2082 = vmatpush2.msra.mxu0 0.0
    %2083 = vmatprep.subr.mxu0 0.0
    %2084 = vmatpush2.msra.mxu0 0.0
    %2085 = vmatprep.mubr.f32.mxu0 0.0
    %2086 = vmatmul.mubr.f32.gmra.mxu0 %v2014
    %v2087 = vpop.f32.mrf.mxu0
    %v2088 = vadd.f32 0.0, %v2087
    %v2089 = vpop.f32.mrf.mxu0
    %2090 = vmatprep.mubr.f32.mxu0 0.0
    %2091 = vmatmul.mubr.f32.gmra.mxu0 %v2017
    %v2092 = vpop.f32.mrf.mxu0
    %v2093 = vadd.f32 0.0, %v2092
    %v2094 = vpop.f32.mrf.mxu0
    %2095 = vdwg.mxu0
    %2098 = vrot.lane.b32.xlu0 %v2088, 8
    %v2099 = vpop.permute.xlu0 %2098
    %2100 = vrot.lane.b32.xlu0 %v2093, 8
    %v2101 = vpop.permute.xlu0 %2100
    %2104 = vst.msk [vmem:[#allocation3 + $0xd] sm:$0xff] %vm1250, %v2099
    %2105 = vst.msk [vmem:[#allocation3 + $0x15] sm:$0x1f] %vm1252, %v2101
    %2106 = vrot.lane.b32.xlu0 %v1693, 80
    %v2107 = vpop.permute.xlu0 %2106
    %2108 = vrot.lane.b32.xlu0 %v1695, 80
    %v2109 = vpop.permute.xlu0 %2108
    %2110 = vrot.lane.b32.xlu0 %v1693, 72
    %v2111 = vpop.permute.xlu0 %2110
    %2112 = vrot.lane.b32.xlu0 %v1695, 72
    %v2113 = vpop.permute.xlu0 %2112
    %v2114 = vsel %vm841, %v2107, 0
    %v2116 = vsel %vm841, %v2109, 0
    %v2118 = vsel %vm841, %v2111, 0
    %v2120 = vsel %vm841, %v2113, 0
    %2122 = vmatprep.subr.mxu0 0.0
    %2123 = vmatpush1.xpose.msra.mxu0 0.0
    %2124 = vmatprep.subr.mxu0 0.0
    %2125 = vmatpush1.xpose.msra.mxu0 0.0
    %2126 = vmatprep.subr.mxu0 0.0
    %2127 = vmatpush1.xpose.msra.mxu0 0.0
    %2128 = vmatprep.subr.mxu0 0.0
    %2129 = vmatpush1.xpose.msra.mxu0 0.0
    %2130 = vmatprep.subr.mxu0 0.0
    %2131 = vmatpush1.xpose.msra.mxu0 0.0
    %2132 = vmatprep.subr.mxu0 0.0
    %2133 = vmatpush1.xpose.msra.mxu0 0.0
    %2134 = vmatprep.subr.mxu0 0.0
    %2135 = vmatpush1.xpose.msra.mxu0 0.0
    %2136 = vmatprep.subr.mxu0 0.0
    %2137 = vmatpush1.xpose.msra.mxu0 0.0
    %2138 = vmatprep.subr.mxu0 0.0
    %2139 = vmatpush1.xpose.msra.mxu0 0.0
    %2140 = vmatprep.subr.mxu0 0.0
    %2141 = vmatpush1.xpose.msra.mxu0 0.0
    %2142 = vmatprep.subr.mxu0 0.0
    %2143 = vmatpush1.xpose.msra.mxu0 0.0
    %2144 = vmatprep.subr.mxu0 0.0
    %2145 = vmatpush1.xpose.msra.mxu0 0.0
    %2146 = vmatprep.subr.mxu0 0.0
    %2147 = vmatpush1.xpose.msra.mxu0 0.0
    %2148 = vmatprep.subr.mxu0 0.0
    %2149 = vmatpush1.xpose.msra.mxu0 0.0
    %2150 = vmatprep.subr.mxu0 0.0
    %2151 = vmatpush1.xpose.msra.mxu0 %v2120
    %2152 = vmatprep.subr.mxu0 0.0
    %2153 = vmatpush1.xpose.msra.mxu0 %v2118
    %2154 = vmatprep.subr.mxu0 0.0
    %2155 = vmatpush2.xpose.msra.mxu0 0.0
    %2156 = vmatprep.subr.mxu0 0.0
    %2157 = vmatpush2.xpose.msra.mxu0 0.0
    %2158 = vmatprep.subr.mxu0 0.0
    %2159 = vmatpush2.xpose.msra.mxu0 0.0
    %2160 = vmatprep.subr.mxu0 0.0
    %2161 = vmatpush2.xpose.msra.mxu0 0.0
    %2162 = vmatprep.subr.mxu0 0.0
    %2163 = vmatpush2.xpose.msra.mxu0 0.0
    %2164 = vmatprep.subr.mxu0 0.0
    %2165 = vmatpush2.xpose.msra.mxu0 0.0
    %2166 = vmatprep.subr.mxu0 0.0
    %2167 = vmatpush2.xpose.msra.mxu0 0.0
    %2168 = vmatprep.subr.mxu0 0.0
    %2169 = vmatpush2.xpose.msra.mxu0 0.0
    %2170 = vmatprep.subr.mxu0 0.0
    %2171 = vmatpush2.xpose.msra.mxu0 0.0
    %2172 = vmatprep.subr.mxu0 0.0
    %2173 = vmatpush2.xpose.msra.mxu0 0.0
    %2174 = vmatprep.subr.mxu0 0.0
    %2175 = vmatpush2.xpose.msra.mxu0 0.0
    %2176 = vmatprep.subr.mxu0 0.0
    %2177 = vmatpush2.xpose.msra.mxu0 0.0
    %2178 = vmatprep.subr.mxu0 0.0
    %2179 = vmatpush2.xpose.msra.mxu0 0.0
    %2180 = vmatprep.subr.mxu0 0.0
    %2181 = vmatpush2.xpose.msra.mxu0 0.0
    %2182 = vmatprep.subr.mxu0 0.0
    %2183 = vmatpush2.xpose.msra.mxu0 0.0
    %2184 = vmatprep.subr.mxu0 0.0
    %2185 = vmatpush2.xpose.msra.mxu0 0.0
    %2186 = vmatprep.mubr.f32.mxu0 0.0
    %2187 = vmatmul.mubr.f32.gmra.mxu0 %v2114
    %v2188 = vpop.f32.mrf.mxu0
    %v2189 = vadd.f32 0.0, %v2188
    %v2190 = vpop.f32.mrf.mxu0
    %2191 = vmatprep.mubr.f32.mxu0 0.0
    %2192 = vmatmul.mubr.f32.gmra.mxu0 %v2116
    %v2193 = vpop.f32.mrf.mxu0
    %v2194 = vadd.f32 0.0, %v2193
    %v2195 = vpop.f32.mrf.mxu0
    %2196 = vdwg.mxu0
    %v2197 = vsel %vm925, %v2189, -inf
    %2198 = vmax.xlane.f32.xlu0 %v2197
    %v2199 = vpop.xlane.xlu0 %2198
    %v2200 = vsel %vm929, %v2194, -inf
    %2201 = vmax.xlane.f32.xlu0 %v2200
    %v2202 = vpop.xlane.xlu0 %2201
    %v2203 = vsub.f32 %v2189, %v2199
    %v2204 = vsub.f32 %v2194, %v2202
    %v2205 = vmul.f32 %v2203, 1.442695
    %v2206 = vpow.pop %v2205
    %v2207 = vmul.f32 %v2204, 1.442695
    %v2208 = vpow.pop %v2207
    %v2209 = vsel %vm925, %v2206, 0.0
    %2210 = vadd.xlane.f32.xlu0 %v2209
    %v2211 = vpop.xlane.xlu0 %2210
    %v2212 = vsel %vm929, %v2208, 0.0
    %2213 = vadd.xlane.f32.xlu0 %v2212
    %v2214 = vpop.xlane.xlu0 %2213
    %v2215 = vrcp.pop %v2211
    %v2216 = vrcp.pop %v2214
    %v2217 = vmul.f32 %v2206, %v2215
    %v2218 = vmul.f32 %v2208, %v2216
    %2219 = vrot.lane.b32.xlu0 %v1693, 64
    %v2220 = vpop.permute.xlu0 %2219
    %2221 = vrot.lane.b32.xlu0 %v1695, 64
    %v2222 = vpop.permute.xlu0 %2221
    %v2225 = vsel %vm925, %v2217, 0
    %v2228 = vsel %vm925, %v2218, 0
    %v2230 = vsel %vm960, %v2222, 0
    %2232 = vmatprep.subr.mxu0 0.0
    %2233 = vmatpush1.msra.mxu0 0.0
    %2234 = vmatprep.subr.mxu0 0.0
    %2235 = vmatpush1.msra.mxu0 0.0
    %2236 = vmatprep.subr.mxu0 0.0
    %2237 = vmatpush1.msra.mxu0 0.0
    %2238 = vmatprep.subr.mxu0 0.0
    %2239 = vmatpush1.msra.mxu0 0.0
    %2240 = vmatprep.subr.mxu0 0.0
    %2241 = vmatpush1.msra.mxu0 0.0
    %2242 = vmatprep.subr.mxu0 0.0
    %2243 = vmatpush1.msra.mxu0 0.0
    %2244 = vmatprep.subr.mxu0 0.0
    %2245 = vmatpush1.msra.mxu0 0.0
    %2246 = vmatprep.subr.mxu0 0.0
    %2247 = vmatpush1.msra.mxu0 0.0
    %2248 = vmatprep.subr.mxu0 0.0
    %2249 = vmatpush1.msra.mxu0 0.0
    %2250 = vmatprep.subr.mxu0 0.0
    %2251 = vmatpush1.msra.mxu0 0.0
    %2252 = vmatprep.subr.mxu0 0.0
    %2253 = vmatpush1.msra.mxu0 0.0
    %2254 = vmatprep.subr.mxu0 0.0
    %2255 = vmatpush1.msra.mxu0 0.0
    %2256 = vmatprep.subr.mxu0 0.0
    %2257 = vmatpush1.msra.mxu0 0.0
    %2258 = vmatprep.subr.mxu0 0.0
    %2259 = vmatpush1.msra.mxu0 0.0
    %2260 = vmatprep.subr.mxu0 0.0
    %2261 = vmatpush1.msra.mxu0 %v2230
    %2262 = vmatprep.subr.mxu0 0.0
    %2263 = vmatpush1.msra.mxu0 %v2220
    %2264 = vmatprep.subr.mxu0 0.0
    %2265 = vmatpush2.msra.mxu0 0.0
    %2266 = vmatprep.subr.mxu0 0.0
    %2267 = vmatpush2.msra.mxu0 0.0
    %2268 = vmatprep.subr.mxu0 0.0
    %2269 = vmatpush2.msra.mxu0 0.0
    %2270 = vmatprep.subr.mxu0 0.0
    %2271 = vmatpush2.msra.mxu0 0.0
    %2272 = vmatprep.subr.mxu0 0.0
    %2273 = vmatpush2.msra.mxu0 0.0
    %2274 = vmatprep.subr.mxu0 0.0
    %2275 = vmatpush2.msra.mxu0 0.0
    %2276 = vmatprep.subr.mxu0 0.0
    %2277 = vmatpush2.msra.mxu0 0.0
    %2278 = vmatprep.subr.mxu0 0.0
    %2279 = vmatpush2.msra.mxu0 0.0
    %2280 = vmatprep.subr.mxu0 0.0
    %2281 = vmatpush2.msra.mxu0 0.0
    %2282 = vmatprep.subr.mxu0 0.0
    %2283 = vmatpush2.msra.mxu0 0.0
    %2284 = vmatprep.subr.mxu0 0.0
    %2285 = vmatpush2.msra.mxu0 0.0
    %2286 = vmatprep.subr.mxu0 0.0
    %2287 = vmatpush2.msra.mxu0 0.0
    %2288 = vmatprep.subr.mxu0 0.0
    %2289 = vmatpush2.msra.mxu0 0.0
    %2290 = vmatprep.subr.mxu0 0.0
    %2291 = vmatpush2.msra.mxu0 0.0
    %2292 = vmatprep.subr.mxu0 0.0
    %2293 = vmatpush2.msra.mxu0 0.0
    %2294 = vmatprep.subr.mxu0 0.0
    %2295 = vmatpush2.msra.mxu0 0.0
    %2296 = vmatprep.mubr.f32.mxu0 0.0
    %2297 = vmatmul.mubr.f32.gmra.mxu0 %v2225
    %v2298 = vpop.f32.mrf.mxu0
    %v2299 = vadd.f32 0.0, %v2298
    %v2300 = vpop.f32.mrf.mxu0
    %2301 = vmatprep.mubr.f32.mxu0 0.0
    %2302 = vmatmul.mubr.f32.gmra.mxu0 %v2228
    %v2303 = vpop.f32.mrf.mxu0
    %v2304 = vadd.f32 0.0, %v2303
    %v2305 = vpop.f32.mrf.mxu0
    %2306 = vdwg.mxu0
    %2309 = vrot.lane.b32.xlu0 %v2299, 16
    %v2310 = vpop.permute.xlu0 %2309
    %2311 = vrot.lane.b32.xlu0 %v2304, 16
    %v2312 = vpop.permute.xlu0 %2311
    %2315 = vst.msk [vmem:[#allocation3 + $0xd] sm:$0xff] %vm1463, %v2310
    %2316 = vst.msk [vmem:[#allocation3 + $0x15] sm:$0x1f] %vm1465, %v2312
    %2317 = vrot.lane.b32.xlu0 %v1693, 56
    %v2318 = vpop.permute.xlu0 %2317
    %2319 = vrot.lane.b32.xlu0 %v1695, 56
    %v2320 = vpop.permute.xlu0 %2319
    %2321 = vrot.lane.b32.xlu0 %v1693, 48
    %v2322 = vpop.permute.xlu0 %2321
    %2323 = vrot.lane.b32.xlu0 %v1695, 48
    %v2324 = vpop.permute.xlu0 %2323
    %v2325 = vsel %vm841, %v2318, 0
    %v2327 = vsel %vm841, %v2320, 0
    %v2329 = vsel %vm841, %v2322, 0
    %v2331 = vsel %vm841, %v2324, 0
    %2333 = vmatprep.subr.mxu0 0.0
    %2334 = vmatpush1.xpose.msra.mxu0 0.0
    %2335 = vmatprep.subr.mxu0 0.0
    %2336 = vmatpush1.xpose.msra.mxu0 0.0
    %2337 = vmatprep.subr.mxu0 0.0
    %2338 = vmatpush1.xpose.msra.mxu0 0.0
    %2339 = vmatprep.subr.mxu0 0.0
    %2340 = vmatpush1.xpose.msra.mxu0 0.0
    %2341 = vmatprep.subr.mxu0 0.0
    %2342 = vmatpush1.xpose.msra.mxu0 0.0
    %2343 = vmatprep.subr.mxu0 0.0
    %2344 = vmatpush1.xpose.msra.mxu0 0.0
    %2345 = vmatprep.subr.mxu0 0.0
    %2346 = vmatpush1.xpose.msra.mxu0 0.0
    %2347 = vmatprep.subr.mxu0 0.0
    %2348 = vmatpush1.xpose.msra.mxu0 0.0
    %2349 = vmatprep.subr.mxu0 0.0
    %2350 = vmatpush1.xpose.msra.mxu0 0.0
    %2351 = vmatprep.subr.mxu0 0.0
    %2352 = vmatpush1.xpose.msra.mxu0 0.0
    %2353 = vmatprep.subr.mxu0 0.0
    %2354 = vmatpush1.xpose.msra.mxu0 0.0
    %2355 = vmatprep.subr.mxu0 0.0
    %2356 = vmatpush1.xpose.msra.mxu0 0.0
    %2357 = vmatprep.subr.mxu0 0.0
    %2358 = vmatpush1.xpose.msra.mxu0 0.0
    %2359 = vmatprep.subr.mxu0 0.0
    %2360 = vmatpush1.xpose.msra.mxu0 0.0
    %2361 = vmatprep.subr.mxu0 0.0
    %2362 = vmatpush1.xpose.msra.mxu0 %v2331
    %2363 = vmatprep.subr.mxu0 0.0
    %2364 = vmatpush1.xpose.msra.mxu0 %v2329
    %2365 = vmatprep.subr.mxu0 0.0
    %2366 = vmatpush2.xpose.msra.mxu0 0.0
    %2367 = vmatprep.subr.mxu0 0.0
    %2368 = vmatpush2.xpose.msra.mxu0 0.0
    %2369 = vmatprep.subr.mxu0 0.0
    %2370 = vmatpush2.xpose.msra.mxu0 0.0
    %2371 = vmatprep.subr.mxu0 0.0
    %2372 = vmatpush2.xpose.msra.mxu0 0.0
    %2373 = vmatprep.subr.mxu0 0.0
    %2374 = vmatpush2.xpose.msra.mxu0 0.0
    %2375 = vmatprep.subr.mxu0 0.0
    %2376 = vmatpush2.xpose.msra.mxu0 0.0
    %2377 = vmatprep.subr.mxu0 0.0
    %2378 = vmatpush2.xpose.msra.mxu0 0.0
    %2379 = vmatprep.subr.mxu0 0.0
    %2380 = vmatpush2.xpose.msra.mxu0 0.0
    %2381 = vmatprep.subr.mxu0 0.0
    %2382 = vmatpush2.xpose.msra.mxu0 0.0
    %2383 = vmatprep.subr.mxu0 0.0
    %2384 = vmatpush2.xpose.msra.mxu0 0.0
    %2385 = vmatprep.subr.mxu0 0.0
    %2386 = vmatpush2.xpose.msra.mxu0 0.0
    %2387 = vmatprep.subr.mxu0 0.0
    %2388 = vmatpush2.xpose.msra.mxu0 0.0
    %2389 = vmatprep.subr.mxu0 0.0
    %2390 = vmatpush2.xpose.msra.mxu0 0.0
    %2391 = vmatprep.subr.mxu0 0.0
    %2392 = vmatpush2.xpose.msra.mxu0 0.0
    %2393 = vmatprep.subr.mxu0 0.0
    %2394 = vmatpush2.xpose.msra.mxu0 0.0
    %2395 = vmatprep.subr.mxu0 0.0
    %2396 = vmatpush2.xpose.msra.mxu0 0.0
    %2397 = vmatprep.mubr.f32.mxu0 0.0
    %2398 = vmatmul.mubr.f32.gmra.mxu0 %v2325
    %v2399 = vpop.f32.mrf.mxu0
    %v2400 = vadd.f32 0.0, %v2399
    %v2401 = vpop.f32.mrf.mxu0
    %2402 = vmatprep.mubr.f32.mxu0 0.0
    %2403 = vmatmul.mubr.f32.gmra.mxu0 %v2327
    %v2404 = vpop.f32.mrf.mxu0
    %v2405 = vadd.f32 0.0, %v2404
    %v2406 = vpop.f32.mrf.mxu0
    %2407 = vdwg.mxu0
    %v2408 = vsel %vm925, %v2400, -inf
    %2409 = vmax.xlane.f32.xlu0 %v2408
    %v2410 = vpop.xlane.xlu0 %2409
    %v2411 = vsel %vm929, %v2405, -inf
    %2412 = vmax.xlane.f32.xlu0 %v2411
    %v2413 = vpop.xlane.xlu0 %2412
    %v2414 = vsub.f32 %v2400, %v2410
    %v2415 = vsub.f32 %v2405, %v2413
    %v2416 = vmul.f32 %v2414, 1.442695
    %v2417 = vpow.pop %v2416
    %v2418 = vmul.f32 %v2415, 1.442695
    %v2419 = vpow.pop %v2418
    %v2420 = vsel %vm925, %v2417, 0.0
    %2421 = vadd.xlane.f32.xlu0 %v2420
    %v2422 = vpop.xlane.xlu0 %2421
    %v2423 = vsel %vm929, %v2419, 0.0
    %2424 = vadd.xlane.f32.xlu0 %v2423
    %v2425 = vpop.xlane.xlu0 %2424
    %v2426 = vrcp.pop %v2422
    %v2427 = vrcp.pop %v2425
    %v2428 = vmul.f32 %v2417, %v2426
    %v2429 = vmul.f32 %v2419, %v2427
    %2430 = vrot.lane.b32.xlu0 %v1693, 40
    %v2431 = vpop.permute.xlu0 %2430
    %2432 = vrot.lane.b32.xlu0 %v1695, 40
    %v2433 = vpop.permute.xlu0 %2432
    %v2436 = vsel %vm925, %v2428, 0
    %v2439 = vsel %vm925, %v2429, 0
    %v2441 = vsel %vm960, %v2433, 0
    %2443 = vmatprep.subr.mxu0 0.0
    %2444 = vmatpush1.msra.mxu0 0.0
    %2445 = vmatprep.subr.mxu0 0.0
    %2446 = vmatpush1.msra.mxu0 0.0
    %2447 = vmatprep.subr.mxu0 0.0
    %2448 = vmatpush1.msra.mxu0 0.0
    %2449 = vmatprep.subr.mxu0 0.0
    %2450 = vmatpush1.msra.mxu0 0.0
    %2451 = vmatprep.subr.mxu0 0.0
    %2452 = vmatpush1.msra.mxu0 0.0
    %2453 = vmatprep.subr.mxu0 0.0
    %2454 = vmatpush1.msra.mxu0 0.0
    %2455 = vmatprep.subr.mxu0 0.0
    %2456 = vmatpush1.msra.mxu0 0.0
    %2457 = vmatprep.subr.mxu0 0.0
    %2458 = vmatpush1.msra.mxu0 0.0
    %2459 = vmatprep.subr.mxu0 0.0
    %2460 = vmatpush1.msra.mxu0 0.0
    %2461 = vmatprep.subr.mxu0 0.0
    %2462 = vmatpush1.msra.mxu0 0.0
    %2463 = vmatprep.subr.mxu0 0.0
    %2464 = vmatpush1.msra.mxu0 0.0
    %2465 = vmatprep.subr.mxu0 0.0
    %2466 = vmatpush1.msra.mxu0 0.0
    %2467 = vmatprep.subr.mxu0 0.0
    %2468 = vmatpush1.msra.mxu0 0.0
    %2469 = vmatprep.subr.mxu0 0.0
    %2470 = vmatpush1.msra.mxu0 0.0
    %2471 = vmatprep.subr.mxu0 0.0
    %2472 = vmatpush1.msra.mxu0 %v2441
    %2473 = vmatprep.subr.mxu0 0.0
    %2474 = vmatpush1.msra.mxu0 %v2431
    %2475 = vmatprep.subr.mxu0 0.0
    %2476 = vmatpush2.msra.mxu0 0.0
    %2477 = vmatprep.subr.mxu0 0.0
    %2478 = vmatpush2.msra.mxu0 0.0
    %2479 = vmatprep.subr.mxu0 0.0
    %2480 = vmatpush2.msra.mxu0 0.0
    %2481 = vmatprep.subr.mxu0 0.0
    %2482 = vmatpush2.msra.mxu0 0.0
    %2483 = vmatprep.subr.mxu0 0.0
    %2484 = vmatpush2.msra.mxu0 0.0
    %2485 = vmatprep.subr.mxu0 0.0
    %2486 = vmatpush2.msra.mxu0 0.0
    %2487 = vmatprep.subr.mxu0 0.0
    %2488 = vmatpush2.msra.mxu0 0.0
    %2489 = vmatprep.subr.mxu0 0.0
    %2490 = vmatpush2.msra.mxu0 0.0
    %2491 = vmatprep.subr.mxu0 0.0
    %2492 = vmatpush2.msra.mxu0 0.0
    %2493 = vmatprep.subr.mxu0 0.0
    %2494 = vmatpush2.msra.mxu0 0.0
    %2495 = vmatprep.subr.mxu0 0.0
    %2496 = vmatpush2.msra.mxu0 0.0
    %2497 = vmatprep.subr.mxu0 0.0
    %2498 = vmatpush2.msra.mxu0 0.0
    %2499 = vmatprep.subr.mxu0 0.0
    %2500 = vmatpush2.msra.mxu0 0.0
    %2501 = vmatprep.subr.mxu0 0.0
    %2502 = vmatpush2.msra.mxu0 0.0
    %2503 = vmatprep.subr.mxu0 0.0
    %2504 = vmatpush2.msra.mxu0 0.0
    %2505 = vmatprep.subr.mxu0 0.0
    %2506 = vmatpush2.msra.mxu0 0.0
    %2507 = vmatprep.mubr.f32.mxu0 0.0
    %2508 = vmatmul.mubr.f32.gmra.mxu0 %v2436
    %v2509 = vpop.f32.mrf.mxu0
    %v2510 = vadd.f32 0.0, %v2509
    %v2511 = vpop.f32.mrf.mxu0
    %2512 = vmatprep.mubr.f32.mxu0 0.0
    %2513 = vmatmul.mubr.f32.gmra.mxu0 %v2439
    %v2514 = vpop.f32.mrf.mxu0
    %v2515 = vadd.f32 0.0, %v2514
    %v2516 = vpop.f32.mrf.mxu0
    %2517 = vdwg.mxu0
    %2520 = vrot.lane.b32.xlu0 %v2510, 24
    %v2521 = vpop.permute.xlu0 %2520
    %2522 = vrot.lane.b32.xlu0 %v2515, 24
    %v2523 = vpop.permute.xlu0 %2522
    %2526 = vst.msk [vmem:[#allocation3 + $0xd] sm:$0xff] %vm1676, %v2521
    %2527 = vst.msk [vmem:[#allocation3 + $0x15] sm:$0x1f] %vm1678, %v2523
    %s2528 = scalar_lea.vmem %s12, 64
    %2529 = vst.msk [vmem:[%s2528] sm:$0xff] %vm925, %v1803
    %2530 = vst.msk [vmem:[%s2528 + $0x8] sm:$0x1f] %vm929, %v1804
    %2531 = vst.msk [vmem:[%s2528 + $0x10] sm:$0xff] %vm925, %v2006
    %2532 = vst.msk [vmem:[%s2528 + $0x18] sm:$0x1f] %vm929, %v2007
    %2533 = vst.msk [vmem:[%s2528 + $0x20] sm:$0xff] %vm925, %v2217
    %2534 = vst.msk [vmem:[%s2528 + $0x28] sm:$0x1f] %vm929, %v2218
    %2535 = vst.msk [vmem:[%s2528 + $0x30] sm:$0xff] %vm925, %v2428
    %2536 = vst.msk [vmem:[%s2528 + $0x38] sm:$0x1f] %vm929, %v2429
    %v2537 = vld [vmem:[#allocation3] sm:$0xff]
    %v2538 = vld [vmem:[#allocation3 + $0x8] sm:$0xff]
    %v2539 = vld [vmem:[#allocation3 + $0x10] sm:$0xff]
    %v2540 = vld [vmem:[#allocation3 + $0x18] sm:$0x3]
    %v2541 = vld [vmem:[#allocation14] sm:$0xff]
    %v2542 = vld [vmem:[#allocation14 + $0x8] sm:$0xff]
    %v2543 = vld [vmem:[#allocation14 + $0x10] sm:$0xff]
    %v2544 = vld [vmem:[#allocation14 + $0x18] sm:$0xff]
    %v2545 = vld [vmem:[%s10] sm:$0x1]
    %v2547 = vlaneseq
    %v2548 = vshrl.u32 %v2547, 7
    %v2549 = vsub.s32 0, %v2548
    %v2550 = vrot.slane %v2545, %v2549
    %v2553 = vsel %vm127, %v2537, 0
    %v2556 = vsel %vm127, %v2538, 0
    %v2559 = vsel %vm127, %v2539, 0
    %v2562 = vsel %vm127, %v2540, 0
    %2564 = vmatprep.subr.mxu0 0.0
    %2565 = vmatpush1.msra.mxu0 0.0
    %2566 = vmatprep.subr.mxu0 0.0
    %2567 = vmatpush1.msra.mxu0 0.0
    %2568 = vmatprep.subr.mxu0 0.0
    %2569 = vmatpush1.msra.mxu0 0.0
    %2570 = vmatprep.subr.mxu0 0.0
    %2571 = vmatpush1.msra.mxu0 0.0
    %2572 = vmatprep.subr.mxu0 0.0
    %2573 = vmatpush1.msra.mxu0 0.0
    %2574 = vmatprep.subr.mxu0 0.0
    %2575 = vmatpush1.msra.mxu0 0.0
    %2576 = vmatprep.subr.mxu0 0.0
    %2577 = vmatpush1.msra.mxu0 0.0
    %2578 = vmatprep.subr.mxu0 0.0
    %2579 = vmatpush1.msra.mxu0 0.0
    %2580 = vmatprep.subr.mxu0 0.0
    %2581 = vmatpush1.msra.mxu0 0.0
    %2582 = vmatprep.subr.mxu0 0.0
    %2583 = vmatpush1.msra.mxu0 0.0
    %2584 = vmatprep.subr.mxu0 0.0
    %2585 = vmatpush1.msra.mxu0 0.0
    %2586 = vmatprep.subr.mxu0 0.0
    %2587 = vmatpush1.msra.mxu0 0.0
    %2588 = vmatprep.subr.mxu0 0.0
    %2589 = vmatpush1.msra.mxu0 %v2544
    %2590 = vmatprep.subr.mxu0 0.0
    %2591 = vmatpush1.msra.mxu0 %v2543
    %2592 = vmatprep.subr.mxu0 0.0
    %2593 = vmatpush1.msra.mxu0 %v2542
    %2594 = vmatprep.subr.mxu0 0.0
    %2595 = vmatpush1.msra.mxu0 %v2541
    %2596 = vmatprep.subr.mxu0 0.0
    %2597 = vmatpush2.msra.mxu0 0.0
    %2598 = vmatprep.subr.mxu0 0.0
    %2599 = vmatpush2.msra.mxu0 0.0
    %2600 = vmatprep.subr.mxu0 0.0
    %2601 = vmatpush2.msra.mxu0 0.0
    %2602 = vmatprep.subr.mxu0 0.0
    %2603 = vmatpush2.msra.mxu0 0.0
    %2604 = vmatprep.subr.mxu0 0.0
    %2605 = vmatpush2.msra.mxu0 0.0
    %2606 = vmatprep.subr.mxu0 0.0
    %2607 = vmatpush2.msra.mxu0 0.0
    %2608 = vmatprep.subr.mxu0 0.0
    %2609 = vmatpush2.msra.mxu0 0.0
    %2610 = vmatprep.subr.mxu0 0.0
    %2611 = vmatpush2.msra.mxu0 0.0
    %2612 = vmatprep.subr.mxu0 0.0
    %2613 = vmatpush2.msra.mxu0 0.0
    %2614 = vmatprep.subr.mxu0 0.0
    %2615 = vmatpush2.msra.mxu0 0.0
    %2616 = vmatprep.subr.mxu0 0.0
    %2617 = vmatpush2.msra.mxu0 0.0
    %2618 = vmatprep.subr.mxu0 0.0
    %2619 = vmatpush2.msra.mxu0 0.0
    %2620 = vmatprep.subr.mxu0 0.0
    %2621 = vmatpush2.msra.mxu0 0.0
    %2622 = vmatprep.subr.mxu0 0.0
    %2623 = vmatpush2.msra.mxu0 0.0
    %2624 = vmatprep.subr.mxu0 0.0
    %2625 = vmatpush2.msra.mxu0 0.0
    %2626 = vmatprep.subr.mxu0 0.0
    %2627 = vmatpush2.msra.mxu0 0.0
    %2628 = vmatprep.mubr.f32.mxu0 0.0
    %2629 = vmatmul.mubr.f32.gmra.mxu0 %v2553
    %v2630 = vpop.f32.mrf.mxu0
    %v2631 = vadd.f32 %v2550, %v2630
    %v2632 = vpop.f32.mrf.mxu0
    %2633 = vmatprep.mubr.f32.mxu0 0.0
    %2634 = vmatmul.mubr.f32.gmra.mxu0 %v2556
    %v2635 = vpop.f32.mrf.mxu0
    %v2636 = vadd.f32 %v2550, %v2635
    %v2637 = vpop.f32.mrf.mxu0
    %2638 = vmatprep.mubr.f32.mxu0 0.0
    %2639 = vmatmul.mubr.f32.gmra.mxu0 %v2559
    %v2640 = vpop.f32.mrf.mxu0
    %v2641 = vadd.f32 %v2550, %v2640
    %v2642 = vpop.f32.mrf.mxu0
    %2643 = vmatprep.mubr.f32.mxu0 0.0
    %2644 = vmatmul.mubr.f32.gmra.mxu0 %v2562
    %v2645 = vpop.f32.mrf.mxu0
    %v2646 = vadd.f32 %v2550, %v2645
    %v2647 = vpop.f32.mrf.mxu0
    %2648 = vdwg.mxu0
    %v2650 = vrot.slane %v2636, 1
    %v2652 = vsel %vm427, %v2650, 0.0
    %v2653 = vrot.slane %v2652, 4
    %v2654 = vadd.f32 %v2652, %v2653
    %v2655 = vrot.slane %v2654, 2
    %v2656 = vadd.f32 %v2654, %v2655
    %v2657 = vrot.slane %v2656, 1
    %v2658 = vadd.f32 %v2656, %v2657
    %v2659 = vrcp.pop 4.0
    %v2660 = vmul.f32 %v2658, %v2659
    %v2661 = vadd.f32 %v2631, %v2660
    %vm2663 = vcmask 1046528
    %v2664 = vrot.slane %v2631, 1
    %v2665 = vsel %vm2663, %v2664, %v2650
    %v2667 = vsel %vm127, %v2665, 0.0
    %v2668 = vrot.slane %v2667, 4
    %v2669 = vadd.f32 %v2667, %v2668
    %v2670 = vrot.slane %v2669, 2
    %v2671 = vadd.f32 %v2669, %v2670
    %v2672 = vrot.slane %v2671, 1
    %v2673 = vadd.f32 %v2671, %v2672
    %v2674 = vrcp.pop 8.0
    %v2675 = vmul.f32 %v2673, %v2674
    %v2676 = vadd.f32 %v2661, %v2675
    %2677 = vst.msk [vmem:[%s11] sm:$0x1] %vm129, %v2676
    %vm2678 = vcmask 261121
    %2679 = vst.msk [vmem:[%s11] sm:$0xfe] %vm2678, %v2631
    %2680 = vst.msk [vmem:[%s11 + $0x8] sm:$0x1] %vm129, %v2636
    %vm2683 = vcmask 1041408
    %v2684 = vrot.slane %v2641, 6
    %v2685 = vrot.slane %v2646, 6
    %v2686 = vsel %vm2683, %v2684, %v2685
    %v2688 = vsel %vm427, %v2686, 0.0
    %v2689 = vrot.slane %v2688, 4
    %v2690 = vadd.f32 %v2688, %v2689
    %v2691 = vrot.slane %v2690, 2
    %v2692 = vadd.f32 %v2690, %v2691
    %v2693 = vrot.slane %v2692, 1
    %v2694 = vadd.f32 %v2692, %v2693
    %v2695 = vmul.f32 %v2694, %v2659
    %v2696 = vadd.f32 %v2636, %v2695
    %v2697 = vrot.slane %v2636, 6
    %v2698 = vsel %vm2683, %v2697, %v2684
    %v2700 = vsel %vm127, %v2698, 0.0
    %v2701 = vrot.slane %v2700, 4
    %v2702 = vadd.f32 %v2700, %v2701
    %v2703 = vrot.slane %v2702, 2
    %v2704 = vadd.f32 %v2702, %v2703
    %v2705 = vrot.slane %v2704, 1
    %v2706 = vadd.f32 %v2704, %v2705
    %v2707 = vmul.f32 %v2706, %v2674
    %v2708 = vadd.f32 %v2696, %v2707
    %s2709 = scalar_lea.vmem %s11, 16
    %vm2710 = vcmask 259077
    %2711 = vst.msk [vmem:[%s2709 - $0x5] sm:$0x20] %vm2710, %v2708
    %vm2712 = vcmask 261126
    %2713 = vst.msk [vmem:[%s2709 - $0x5] sm:$0xc0] %vm2712, %v2636
    %vm2714 = vcmask 259072
    %2715 = vst.msk [vmem:[%s2709 + $0x3] sm:$0x3f] %vm2714, %v2641
    // Predicated region
    $region74: #{tpu_custom_call.1} parent=1 // pred_check
      _
    $region75: #{tpu_custom_call.1} parent=1 // pred_check_branch
      %2717 = sbr.rel (0) target = $region77
    $region76: #{tpu_custom_call.1} parent=1 // pred_region
      _
    $region77: #{tpu_custom_call.1} parent=1 // pred_fallthru
      _
    // Predicated region
    $region78: #{tpu_custom_call.1} parent=1 // pred_check
      _
    $region79: #{tpu_custom_call.1} parent=1 // pred_check_branch
      %2719 = sbr.rel (0) target = $region81
    $region80: #{tpu_custom_call.1} parent=1 // pred_region
      _
    $region81: #{tpu_custom_call.1} parent=1 // pred_fallthru
      _
    // Predicated region
    $region82: #{tpu_custom_call.1} parent=1 // pred_check
      _
    $region83: #{tpu_custom_call.1} parent=1 // pred_check_branch
      %2721 = sbr.rel (0) target = $region85
    $region84: #{tpu_custom_call.1} parent=1 // pred_region
      _
    $region85: #{tpu_custom_call.1} parent=1 // pred_fallthru
      _
    // Predicated region
    $region86: #{tpu_custom_call.1} parent=1 // pred_check
      _
    $region87: #{tpu_custom_call.1} parent=1 // pred_check_branch
      %2723 = sbr.rel (0) target = $region89
    $region88: #{tpu_custom_call.1} parent=1 // pred_region
      _
    $region89: #{tpu_custom_call.1} parent=1 // pred_fallthru
      _
    %2724 = vsyncpa [#allocation5], 1
    %2725 = vsyncpa [#allocation7], 1
    %2726 = vsyncpa [#allocation10], 1
    %2727 = vsyncpa [#allocation13], 1

</llo_original>
